<compile_context>
chip_gen: v7x
topology: tpu7x:2x2x1
jax: 0.10.0
libtpu: 0.0.40
codegen_flags: <defaults>
</compile_context>

<pallas_src>
import functools

import jax
import jax.numpy as jnp
from jax import lax
from jax.experimental import pallas as pl
from jax.experimental.pallas import tpu as pltpu


def _pick_tile_n(n, width, itemsize, budget_bytes=2 * 1024 * 1024):
    """Largest multiple-of-8 divisor of n whose (tile_n, width) block fits the budget."""
    if n % 8 != 0:
        # The sublane dim of a block must be a multiple of 8 or equal the full dim.
        return n
    t = min(n, max(8, budget_bytes // max(1, width * itemsize)))
    t -= t % 8
    t = max(t, 8)
    while n % t != 0:
        t -= 8
    return t


def _stats_whiten_kernel(x_ref, w_ref, b_ref, xtx_ref, xsum_ref, *,
                         gps, dg, n, eps, num_iters):
    """Pass 1: accumulate sum(x), X^T X over N tiles; finalize W and bias per group."""
    t = pl.program_id(1)
    nt = pl.num_programs(1)

    @pl.when(t == 0)
    def _init():
        xtx_ref[...] = jnp.zeros_like(xtx_ref)
        xsum_ref[...] = jnp.zeros_like(xsum_ref)

    xb = x_ref[...]                                        # (tile_n, width), native dtype
    xsum_ref[...] += jnp.sum(xb.astype(jnp.float32), axis=0, keepdims=True)
    for j in range(gps):                                   # static unroll over groups
        xg = xb[:, j * dg:(j + 1) * dg] if gps > 1 else xb
        # Transpose-free Gram update: contract over rows on the MXU, f32 accumulate.
        xtx_ref[j] += lax.dot_general(
            xg, xg, dimension_numbers=(((0,), (0,)), ((), ())),
            preferred_element_type=jnp.float32)

    @pl.when(t == nt - 1)
    def _finalize():
        eye = jnp.eye(dg, dtype=jnp.float32)
        mean = xsum_ref[...] * (1.0 / n)                   # (1, width), f32
        for j in range(gps):                               # static unroll: NS chains interleave
            mj = mean[:, j * dg:(j + 1) * dg] if gps > 1 else mean      # (1, dg)
            mmT = lax.dot_general(                         # outer product m m^T, (dg, dg)
                mj, mj, dimension_numbers=(((0,), (0,)), ((), ())),
                preferred_element_type=jnp.float32)
            # One-pass covariance: (X^T X - N m m^T) / (N - 1)   (f32 accumulation).
            cov = (xtx_ref[j] - n * mmT) * (1.0 / (n - 1))
            sigma = (1.0 - eps) * cov + eps * eye
            # ZCA whitening matrix sigma^{-1/2} via Newton-Schulz (all f32).
            norm = jnp.sum(sigma * eye)                    # trace(sigma)
            y = sigma * (1.0 / norm)
            z = eye
            for _ in range(num_iters):
                tmat = 0.5 * (3.0 * eye - jnp.dot(z, y, preferred_element_type=jnp.float32))
                y = jnp.dot(y, tmat, preferred_element_type=jnp.float32)
                z = jnp.dot(tmat, z, preferred_element_type=jnp.float32)
            wmat = z * lax.rsqrt(norm)                     # ~ sigma^{-1/2}
            # Fold centering into a bias:  (x - m) @ W  ==  x @ W + (-m @ W).
            bias = -jnp.dot(mj, wmat, preferred_element_type=jnp.float32)   # (1, dg)
            w_ref[j] = wmat.astype(w_ref.dtype)
            b_ref[j] = bias


def _apply_whiten_kernel(x_ref, w_ref, b_ref, o_ref, *, gps, dg):
    """Pass 2: out = x @ W + bias per group, one lane-dense store per block."""
    xb = x_ref[...]                                        # (tile_n, width), native dtype
    parts = []
    for j in range(gps):
        xg = xb[:, j * dg:(j + 1) * dg] if gps > 1 else xb
        og = jnp.dot(xg, w_ref[j], preferred_element_type=jnp.float32) + b_ref[j]
        parts.append(og)
    out = parts[0] if gps == 1 else jnp.concatenate(parts, axis=-1)
    o_ref[...] = out.astype(o_ref.dtype)


def whitening2d_forward(x, *, group=1, eps=0.0, num_iters=9, tile_n=None):
    """Forward of Whitening2d (axis=1, training) on a (N, D) input."""
    n, w_dim = x.shape
    assert w_dim % group == 0, "The dim for whitening should be divisible by group !"
    assert n > 1, "Whitening needs at least 2 samples (covariance divides by N-1)."
    dg = w_dim // group

    lane_dense = (dg % 128 == 0)
    if lane_dense:
        # Path A: one group per grid step, column slabs of the original (N, D)
        # array indexed directly (no host reshape/transpose), lane-dense stores.
        gps, width, n_gsteps = 1, dg, group
    else:
        # Path B: small / non-128-multiple Dg -> a grid step covers the full
        # (tile_n, D) width; groups are split with static lane slices in-kernel.
        gps, width, n_gsteps = group, w_dim, 1

    itemsize = jnp.dtype(x.dtype).itemsize
    if tile_n is None:
        tile_n = _pick_tile_n(n, width, itemsize)
    else:
        assert n % tile_n == 0 and (tile_n % 8 == 0 or tile_n == n), "bad tile_n"
    n_tiles = n // tile_n

    # Explicit VMEM budget (streamed design keeps residency small); clamp so the
    # request stays within v7x's 64 MiB physical VMEM.
    est = (4 * tile_n * width * itemsize          # in + out blocks, double-buffered
           + 2 * group * dg * dg * itemsize       # W blocks, double-buffered
           + group * dg * dg * 4                  # X^T X scratch
           + 16 * dg * dg * 4                     # Newton-Schulz temporaries
           + (8 << 20))                           # headroom
    vmem_limit = int(min(64 << 20, max(32 << 20, est)))

    x_spec = pl.BlockSpec((tile_n, width), lambda g, t: (t, g))
    w_spec = pl.BlockSpec((gps, dg, dg), lambda g, t: (g, 0, 0))
    b_spec = pl.BlockSpec((gps, 1, dg), lambda g, t: (g, 0, 0))

    # Pass 1: statistics + Newton-Schulz -> whitening matrices and biases.
    w_mat, bias = pl.pallas_call(
        functools.partial(_stats_whiten_kernel, gps=gps, dg=dg, n=n,
                          eps=float(eps), num_iters=num_iters),
        out_shape=(jax.ShapeDtypeStruct((group, dg, dg), x.dtype),
                   jax.ShapeDtypeStruct((group, 1, dg), jnp.float32)),
        grid=(n_gsteps, n_tiles),
        in_specs=[x_spec],
        out_specs=(w_spec, b_spec),
        scratch_shapes=[pltpu.VMEM((gps, dg, dg), jnp.float32),
                        pltpu.VMEM((1, width), jnp.float32)],
        compiler_params=pltpu.CompilerParams(
            dimension_semantics=("parallel", "arbitrary"),
            vmem_limit_bytes=vmem_limit),
    )(x)

    # Pass 2: apply whitening.  Both axes parallel -> v7x megacore splits the
    # dominant (N, Dg) @ (Dg, Dg) matmul across its two TensorCores.
    out = pl.pallas_call(
        functools.partial(_apply_whiten_kernel, gps=gps, dg=dg),
        out_shape=jax.ShapeDtypeStruct((n, w_dim), x.dtype),
        grid=(n_gsteps, n_tiles),
        in_specs=[x_spec, w_spec, b_spec],
        out_specs=x_spec,
        compiler_params=pltpu.CompilerParams(
            dimension_semantics=("parallel", "parallel"),
            vmem_limit_bytes=vmem_limit),
    )(x, w_mat, bias)
    # NOTE: output is cast back to x.dtype (as before); bf16 inputs lose the f32
    # intermediate precision intentionally to keep the module's dtype contract.
    return out


def _reference_whitening(x, *, group, eps, num_iters):
    """Pure-JAX reference with the same ZCA / Newton-Schulz algorithm."""
    with jax.default_matmul_precision("highest"):
        n, d = x.shape
        dg = d // group
        xg = x.astype(jnp.float32).reshape(n, group, dg).transpose(1, 0, 2)
        m = xg.mean(axis=1, keepdims=True)
        xn = xg - m
        cov = jnp.einsum("gnd,gne->gde", xn, xn) / (n - 1)
        eye = jnp.eye(dg, dtype=jnp.float32)
        sigma = (1.0 - eps) * cov + eps * eye
        tr = jnp.trace(sigma, axis1=1, axis2=2)[:, None, None]
        y = sigma / tr
        z = jnp.broadcast_to(eye, sigma.shape)
        for _ in range(num_iters):
            t = 0.5 * (3.0 * eye - jnp.matmul(z, y))
            y = jnp.matmul(y, t)
            z = jnp.matmul(t, z)
        w = z / jnp.sqrt(tr)
        out = jnp.matmul(xn, w)                        # (group, n, dg)
        return out.transpose(1, 0, 2).reshape(n, d).astype(x.dtype)


if __name__ == "__main__":
    key = jax.random.PRNGKey(0)
    k1, k2, k3, k4 = jax.random.split(key, 4)

    # Config 1: grouped, small Dg (< 128) path.  (N, D) = (64, 32), group=2 -> Dg=16.
    n1, d1, g1 = 64, 32, 2
    z1 = jax.random.normal(k1, (n1, d1), dtype=jnp.float32)
    mix1 = jnp.eye(d1) + (0.3 / jnp.sqrt(d1)) * jax.random.normal(k2, (d1, d1), jnp.float32)
    x1 = z1 @ mix1 + 0.5
    y1 = jax.block_until_ready(whitening2d_forward(x1, group=g1, eps=0.0, tile_n=32))
    assert y1.shape == (n1, d1) and y1.dtype == x1.dtype
    assert bool(jnp.all(jnp.isfinite(y1)))
    r1 = _reference_whitening(x1, group=g1, eps=0.0, num_iters=9)
    assert float(jnp.max(jnp.abs(y1 - r1))) < 5e-2

    # Config 2: lane-dense (Dg % 128 == 0) path, multi-tile streaming over N.
    n2, d2, g2 = 256, 128, 1
    z2 = jax.random.normal(k3, (n2, d2), dtype=jnp.float32)
    mix2 = jnp.eye(d2) + (0.3 / jnp.sqrt(d2)) * jax.random.normal(k4, (d2, d2), jnp.float32)
    x2 = z2 @ mix2 + 0.25
    y2 = jax.block_until_ready(whitening2d_forward(x2, group=g2, eps=0.0, tile_n=64))
    assert y2.shape == (n2, d2) and y2.dtype == x2.dtype
    assert bool(jnp.all(jnp.isfinite(y2)))
    r2 = _reference_whitening(x2, group=g2, eps=0.0, num_iters=9)
    assert float(jnp.max(jnp.abs(y2 - r2))) < 5e-2

    print("KERNEL_OK")
</pallas_src>

<mosaic_0001>
module attributes {stable_mosaic.version = 11 : i64} {
  func.func @_stats_whiten_kernel(%arg0: i32, %arg1: i32, %arg2: memref<32x32xf32, #tpu.memory_space<vmem>>, %arg3: memref<2x16x16xf32, #tpu.memory_space<vmem>>, %arg4: memref<2x1x16xf32, #tpu.memory_space<vmem>>, %arg5: memref<2x16x16xf32, #tpu.memory_space<vmem>>, %arg6: memref<1x32xf32, #tpu.memory_space<vmem>>) attributes {dimension_semantics = [#tpu.dimension_semantics<parallel>, #tpu.dimension_semantics<arbitrary>], iteration_bounds = array<i64: 1, 2>, scalar_prefetch = 0 : i64, scratch_operands = 2 : i64, tpu.core_type = #tpu.core_type<tc>, window_params = [{transform_indices = @transform_0, window_bounds = array<i64: 32, 32>}, {transform_indices = @transform_1, window_bounds = array<i64: 2, 16, 16>}, {transform_indices = @transform_2, window_bounds = array<i64: 2, 1, 16>}]} {
    %c0_i32 = arith.constant 0 : i32
    %0 = arith.cmpi eq, %arg1, %c0_i32 : i32
    %1 = arith.extui %0 : i1 to i32
    %c0_i32_0 = arith.constant 0 : i32
    %2 = arith.cmpi ne, %1, %c0_i32_0 : i32
    scf.if %2 {
      %cst_20 = arith.constant 0.000000e+00 : f32
      %28 = vector.broadcast %cst_20 : f32 to vector<2x16x16xf32>
      %c0_21 = arith.constant 0 : index
      %c0_22 = arith.constant 0 : index
      %c0_23 = arith.constant 0 : index
      %29 = vector.load %arg5[%c0_21, %c0_22, %c0_23] : memref<2x16x16xf32, #tpu.memory_space<vmem>>, vector<2x16x16xf32>
      tpu.vector_store %arg5[%c0_21, %c0_22, %c0_23], %28 {strides = array<i32>} : memref<2x16x16xf32, #tpu.memory_space<vmem>>, vector<2x16x16xf32>,
      %cst_24 = arith.constant 0.000000e+00 : f32
      %30 = vector.broadcast %cst_24 : f32 to vector<1x32xf32>
      %c0_25 = arith.constant 0 : index
      %c0_26 = arith.constant 0 : index
      %31 = vector.load %arg6[%c0_25, %c0_26] : memref<1x32xf32, #tpu.memory_space<vmem>>, vector<1x32xf32>
      tpu.vector_store %arg6[%c0_25, %c0_26], %30 {strides = array<i32>} : memref<1x32xf32, #tpu.memory_space<vmem>>, vector<1x32xf32>,
    } else {
    }
    %c0 = arith.constant 0 : index
    %c0_1 = arith.constant 0 : index
    %3 = vector.load %arg2[%c0, %c0_1] : memref<32x32xf32, #tpu.memory_space<vmem>>, vector<32x32xf32>
    %c0_2 = arith.constant 0 : index
    %c0_3 = arith.constant 0 : index
    %4 = vector.load %arg6[%c0_2, %c0_3] : memref<1x32xf32, #tpu.memory_space<vmem>>, vector<1x32xf32>
    %cst = arith.constant dense<0.000000e+00> : vector<32xf32>
    %5 = vector.multi_reduction <add>, %3, %cst [0] : vector<32x32xf32> to vector<32xf32>
    %6 = vector.shape_cast %5 : vector<32xf32> to vector<1x32xf32>
    %7 = arith.addf %4, %6 : vector<1x32xf32>
    %c0_4 = arith.constant 0 : index
    %c0_5 = arith.constant 0 : index
    %8 = vector.load %arg6[%c0_4, %c0_5] : memref<1x32xf32, #tpu.memory_space<vmem>>, vector<1x32xf32>
    tpu.vector_store %arg6[%c0_4, %c0_5], %7 {strides = array<i32>} : memref<1x32xf32, #tpu.memory_space<vmem>>, vector<1x32xf32>,
    %9 = vector.extract_strided_slice %3 {offsets = [0, 0], sizes = [32, 16], strides = [1, 1]} : vector<32x32xf32> to vector<32x16xf32>
    %c0_6 = arith.constant 0 : index
    %c0_7 = arith.constant 0 : index
    %c0_8 = arith.constant 0 : index
    %10 = vector.load %arg5[%c0_6, %c0_7, %c0_8] : memref<2x16x16xf32, #tpu.memory_space<vmem>>, vector<1x16x16xf32>
    %11 = vector.shape_cast %10 : vector<1x16x16xf32> to vector<16x16xf32>
    %cst_9 = arith.constant dense<0.000000e+00> : vector<16x16xf32>
    %12 = tpu.matmul %9, %9, %cst_9 {dimension_numbers = #tpu.dot_dimension_numbers<[0], [0], [1], [1], [0, 1, 1, 1], [], []>} : vector<32x16xf32>, vector<32x16xf32>, vector<16x16xf32> -> vector<16x16xf32>
    %13 = arith.addf %11, %12 : vector<16x16xf32>
    %c0_10 = arith.constant 0 : index
    %c0_11 = arith.constant 0 : index
    %c0_12 = arith.constant 0 : index
    %14 = vector.load %arg5[%c0_10, %c0_11, %c0_12] : memref<2x16x16xf32, #tpu.memory_space<vmem>>, vector<1x16x16xf32>
    %15 = vector.shape_cast %14 : vector<1x16x16xf32> to vector<16x16xf32>
    %16 = vector.shape_cast %13 : vector<16x16xf32> to vector<1x16x16xf32>
    tpu.vector_store %arg5[%c0_10, %c0_11, %c0_12], %16 {strides = array<i32>} : memref<2x16x16xf32, #tpu.memory_space<vmem>>, vector<1x16x16xf32>,
    %17 = vector.extract_strided_slice %3 {offsets = [0, 16], sizes = [32, 16], strides = [1, 1]} : vector<32x32xf32> to vector<32x16xf32>
    %c1 = arith.constant 1 : index
    %c0_13 = arith.constant 0 : index
    %c0_14 = arith.constant 0 : index
    %18 = vector.load %arg5[%c1, %c0_13, %c0_14] : memref<2x16x16xf32, #tpu.memory_space<vmem>>, vector<1x16x16xf32>
    %19 = vector.shape_cast %18 : vector<1x16x16xf32> to vector<16x16xf32>
    %cst_15 = arith.constant dense<0.000000e+00> : vector<16x16xf32>
    %20 = tpu.matmul %17, %17, %cst_15 {dimension_numbers = #tpu.dot_dimension_numbers<[0], [0], [1], [1], [0, 1, 1, 1], [], []>} : vector<32x16xf32>, vector<32x16xf32>, vector<16x16xf32> -> vector<16x16xf32>
    %21 = arith.addf %19, %20 : vector<16x16xf32>
    %c1_16 = arith.constant 1 : index
    %c0_17 = arith.constant 0 : index
    %c0_18 = arith.constant 0 : index
    %22 = vector.load %arg5[%c1_16, %c0_17, %c0_18] : memref<2x16x16xf32, #tpu.memory_space<vmem>>, vector<1x16x16xf32>
    %23 = vector.shape_cast %22 : vector<1x16x16xf32> to vector<16x16xf32>
    %24 = vector.shape_cast %21 : vector<16x16xf32> to vector<1x16x16xf32>
    tpu.vector_store %arg5[%c1_16, %c0_17, %c0_18], %24 {strides = array<i32>} : memref<2x16x16xf32, #tpu.memory_space<vmem>>, vector<1x16x16xf32>,
    %c1_i32 = arith.constant 1 : i32
    %25 = arith.cmpi eq, %arg1, %c1_i32 : i32
    %26 = arith.extui %25 : i1 to i32
    %c0_i32_19 = arith.constant 0 : i32
    %27 = arith.cmpi ne, %26, %c0_i32_19 : i32
    scf.if %27 {
      %28 = tpu.iota {dimensions = array<i32: 0>} : vector<16x16xi32>
      %29 = tpu.iota {dimensions = array<i32: 1>} : vector<16x16xi32>
      %c0_i32_20 = arith.constant 0 : i32
      %30 = vector.broadcast %c0_i32_20 : i32 to vector<16x16xi32>
      %31 = arith.addi %28, %30 : vector<16x16xi32>
      %32 = arith.cmpi eq, %31, %29 : vector<16x16xi32>
      %33 = arith.extui %32 : vector<16x16xi1> to vector<16x16xi32>
      %34 = arith.sitofp %33 : vector<16x16xi32> to vector<16x16xf32>
      %c0_21 = arith.constant 0 : index
      %c0_22 = arith.constant 0 : index
      %35 = vector.load %arg6[%c0_21, %c0_22] : memref<1x32xf32, #tpu.memory_space<vmem>>, vector<1x32xf32>
      %cst_23 = arith.constant 1.562500e-02 : f32
      %36 = vector.broadcast %cst_23 : f32 to vector<1x32xf32>
      %37 = arith.mulf %35, %36 : vector<1x32xf32>
      %38 = vector.extract_strided_slice %37 {offsets = [0, 0], sizes = [1, 16], strides = [1, 1]} : vector<1x32xf32> to vector<1x16xf32>
      %cst_24 = arith.constant dense<0.000000e+00> : vector<16x16xf32>
      %39 = tpu.matmul %38, %38, %cst_24 {dimension_numbers = #tpu.dot_dimension_numbers<[0], [0], [1], [1], [0, 1, 1, 1], [], []>} : vector<1x16xf32>, vector<1x16xf32>, vector<16x16xf32> -> vector<16x16xf32>
      %c0_25 = arith.constant 0 : index
      %c0_26 = arith.constant 0 : index
      %c0_27 = arith.constant 0 : index
      %40 = vector.load %arg5[%c0_25, %c0_26, %c0_27] : memref<2x16x16xf32, #tpu.memory_space<vmem>>, vector<1x16x16xf32>
      %41 = vector.shape_cast %40 : vector<1x16x16xf32> to vector<16x16xf32>
      %cst_28 = arith.constant 6.400000e+01 : f32
      %42 = vector.broadcast %cst_28 : f32 to vector<16x16xf32>
      %43 = arith.mulf %42, %39 : vector<16x16xf32>
      %44 = arith.subf %41, %43 : vector<16x16xf32>
      %cst_29 = arith.constant 0.0158730168 : f32
      %45 = vector.broadcast %cst_29 : f32 to vector<16x16xf32>
      %46 = arith.mulf %44, %45 : vector<16x16xf32>
      %cst_30 = arith.constant 1.000000e+00 : f32
      %47 = vector.broadcast %cst_30 : f32 to vector<16x16xf32>
      %48 = arith.mulf %47, %46 : vector<16x16xf32>
      %cst_31 = arith.constant 0.000000e+00 : f32
      %49 = vector.broadcast %cst_31 : f32 to vector<16x16xf32>
      %50 = arith.mulf %49, %34 : vector<16x16xf32>
      %51 = arith.addf %48, %50 : vector<16x16xf32>
      %52 = arith.mulf %51, %34 : vector<16x16xf32>
      %53 = vector.shape_cast %52 : vector<16x16xf32> to vector<1x16x16xf32>
      %cst_32 = arith.constant dense<0.000000e+00> : vector<1xf32>
      %54 = vector.multi_reduction <add>, %53, %cst_32 [1, 2] : vector<1x16x16xf32> to vector<1xf32>
      %55 = vector.shape_cast %54 : vector<1xf32> to vector<1x1x1xf32>
      %56 = vector.extract %55[0, 0, 0] : f32 from vector<1x1x1xf32>
      %cst_33 = arith.constant 1.000000e+00 : f32
      %57 = arith.divf %cst_33, %56 : f32
      %58 = vector.broadcast %57 : f32 to vector<16x16xf32>
      %59 = arith.mulf %51, %58 : vector<16x16xf32>
      %cst_34 = arith.constant 3.000000e+00 : f32
      %60 = vector.broadcast %cst_34 : f32 to vector<16x16xf32>
      %61 = arith.mulf %60, %34 : vector<16x16xf32>
      %cst_35 = arith.constant dense<0.000000e+00> : vector<16x16xf32>
      %62 = tpu.matmul %34, %59, %cst_35 {dimension_numbers = #tpu.dot_dimension_numbers<[1], [0], [0], [1], [0, 0, 1, 1], [], []>} : vector<16x16xf32>, vector<16x16xf32>, vector<16x16xf32> -> vector<16x16xf32>
      %63 = arith.subf %61, %62 : vector<16x16xf32>
      %cst_36 = arith.constant 5.000000e-01 : f32
      %64 = vector.broadcast %cst_36 : f32 to vector<16x16xf32>
      %65 = arith.mulf %64, %63 : vector<16x16xf32>
      %cst_37 = arith.constant dense<0.000000e+00> : vector<16x16xf32>
      %66 = tpu.matmul %59, %65, %cst_37 {dimension_numbers = #tpu.dot_dimension_numbers<[1], [0], [0], [1], [0, 0, 1, 1], [], []>} : vector<16x16xf32>, vector<16x16xf32>, vector<16x16xf32> -> vector<16x16xf32>
      %cst_38 = arith.constant dense<0.000000e+00> : vector<16x16xf32>
      %67 = tpu.matmul %65, %34, %cst_38 {dimension_numbers = #tpu.dot_dimension_numbers<[1], [0], [0], [1], [0, 0, 1, 1], [], []>} : vector<16x16xf32>, vector<16x16xf32>, vector<16x16xf32> -> vector<16x16xf32>
      %cst_39 = arith.constant 3.000000e+00 : f32
      %68 = vector.broadcast %cst_39 : f32 to vector<16x16xf32>
      %69 = arith.mulf %68, %34 : vector<16x16xf32>
      %cst_40 = arith.constant dense<0.000000e+00> : vector<16x16xf32>
      %70 = tpu.matmul %67, %66, %cst_40 {dimension_numbers = #tpu.dot_dimension_numbers<[1], [0], [0], [1], [0, 0, 1, 1], [], []>} : vector<16x16xf32>, vector<16x16xf32>, vector<16x16xf32> -> vector<16x16xf32>
      %71 = arith.subf %69, %70 : vector<16x16xf32>
      %cst_41 = arith.constant 5.000000e-01 : f32
      %72 = vector.broadcast %cst_41 : f32 to vector<16x16xf32>
      %73 = arith.mulf %72, %71 : vector<16x16xf32>
      %cst_42 = arith.constant dense<0.000000e+00> : vector<16x16xf32>
      %74 = tpu.matmul %66, %73, %cst_42 {dimension_numbers = #tpu.dot_dimension_numbers<[1], [0], [0], [1], [0, 0, 1, 1], [], []>} : vector<16x16xf32>, vector<16x16xf32>, vector<16x16xf32> -> vector<16x16xf32>
      %cst_43 = arith.constant dense<0.000000e+00> : vector<16x16xf32>
      %75 = tpu.matmul %73, %67, %cst_43 {dimension_numbers = #tpu.dot_dimension_numbers<[1], [0], [0], [1], [0, 0, 1, 1], [], []>} : vector<16x16xf32>, vector<16x16xf32>, vector<16x16xf32> -> vector<16x16xf32>
      %cst_44 = arith.constant 3.000000e+00 : f32
      %76 = vector.broadcast %cst_44 : f32 to vector<16x16xf32>
      %77 = arith.mulf %76, %34 : vector<16x16xf32>
      %cst_45 = arith.constant dense<0.000000e+00> : vector<16x16xf32>
      %78 = tpu.matmul %75, %74, %cst_45 {dimension_numbers = #tpu.dot_dimension_numbers<[1], [0], [0], [1], [0, 0, 1, 1], [], []>} : vector<16x16xf32>, vector<16x16xf32>, vector<16x16xf32> -> vector<16x16xf32>
      %79 = arith.subf %77, %78 : vector<16x16xf32>
      %cst_46 = arith.constant 5.000000e-01 : f32
      %80 = vector.broadcast %cst_46 : f32 to vector<16x16xf32>
      %81 = arith.mulf %80, %79 : vector<16x16xf32>
      %cst_47 = arith.constant dense<0.000000e+00> : vector<16x16xf32>
      %82 = tpu.matmul %74, %81, %cst_47 {dimension_numbers = #tpu.dot_dimension_numbers<[1], [0], [0], [1], [0, 0, 1, 1], [], []>} : vector<16x16xf32>, vector<16x16xf32>, vector<16x16xf32> -> vector<16x16xf32>
      %cst_48 = arith.constant dense<0.000000e+00> : vector<16x16xf32>
      %83 = tpu.matmul %81, %75, %cst_48 {dimension_numbers = #tpu.dot_dimension_numbers<[1], [0], [0], [1], [0, 0, 1, 1], [], []>} : vector<16x16xf32>, vector<16x16xf32>, vector<16x16xf32> -> vector<16x16xf32>
      %cst_49 = arith.constant 3.000000e+00 : f32
      %84 = vector.broadcast %cst_49 : f32 to vector<16x16xf32>
      %85 = arith.mulf %84, %34 : vector<16x16xf32>
      %cst_50 = arith.constant dense<0.000000e+00> : vector<16x16xf32>
      %86 = tpu.matmul %83, %82, %cst_50 {dimension_numbers = #tpu.dot_dimension_numbers<[1], [0], [0], [1], [0, 0, 1, 1], [], []>} : vector<16x16xf32>, vector<16x16xf32>, vector<16x16xf32> -> vector<16x16xf32>
      %87 = arith.subf %85, %86 : vector<16x16xf32>
      %cst_51 = arith.constant 5.000000e-01 : f32
      %88 = vector.broadcast %cst_51 : f32 to vector<16x16xf32>
      %89 = arith.mulf %88, %87 : vector<16x16xf32>
      %cst_52 = arith.constant dense<0.000000e+00> : vector<16x16xf32>
      %90 = tpu.matmul %82, %89, %cst_52 {dimension_numbers = #tpu.dot_dimension_numbers<[1], [0], [0], [1], [0, 0, 1, 1], [], []>} : vector<16x16xf32>, vector<16x16xf32>, vector<16x16xf32> -> vector<16x16xf32>
      %cst_53 = arith.constant dense<0.000000e+00> : vector<16x16xf32>
      %91 = tpu.matmul %89, %83, %cst_53 {dimension_numbers = #tpu.dot_dimension_numbers<[1], [0], [0], [1], [0, 0, 1, 1], [], []>} : vector<16x16xf32>, vector<16x16xf32>, vector<16x16xf32> -> vector<16x16xf32>
      %cst_54 = arith.constant 3.000000e+00 : f32
      %92 = vector.broadcast %cst_54 : f32 to vector<16x16xf32>
      %93 = arith.mulf %92, %34 : vector<16x16xf32>
      %cst_55 = arith.constant dense<0.000000e+00> : vector<16x16xf32>
      %94 = tpu.matmul %91, %90, %cst_55 {dimension_numbers = #tpu.dot_dimension_numbers<[1], [0], [0], [1], [0, 0, 1, 1], [], []>} : vector<16x16xf32>, vector<16x16xf32>, vector<16x16xf32> -> vector<16x16xf32>
      %95 = arith.subf %93, %94 : vector<16x16xf32>
      %cst_56 = arith.constant 5.000000e-01 : f32
      %96 = vector.broadcast %cst_56 : f32 to vector<16x16xf32>
      %97 = arith.mulf %96, %95 : vector<16x16xf32>
      %cst_57 = arith.constant dense<0.000000e+00> : vector<16x16xf32>
      %98 = tpu.matmul %90, %97, %cst_57 {dimension_numbers = #tpu.dot_dimension_numbers<[1], [0], [0], [1], [0, 0, 1, 1], [], []>} : vector<16x16xf32>, vector<16x16xf32>, vector<16x16xf32> -> vector<16x16xf32>
      %cst_58 = arith.constant dense<0.000000e+00> : vector<16x16xf32>
      %99 = tpu.matmul %97, %91, %cst_58 {dimension_numbers = #tpu.dot_dimension_numbers<[1], [0], [0], [1], [0, 0, 1, 1], [], []>} : vector<16x16xf32>, vector<16x16xf32>, vector<16x16xf32> -> vector<16x16xf32>
      %cst_59 = arith.constant 3.000000e+00 : f32
      %100 = vector.broadcast %cst_59 : f32 to vector<16x16xf32>
      %101 = arith.mulf %100, %34 : vector<16x16xf32>
      %cst_60 = arith.constant dense<0.000000e+00> : vector<16x16xf32>
      %102 = tpu.matmul %99, %98, %cst_60 {dimension_numbers = #tpu.dot_dimension_numbers<[1], [0], [0], [1], [0, 0, 1, 1], [], []>} : vector<16x16xf32>, vector<16x16xf32>, vector<16x16xf32> -> vector<16x16xf32>
      %103 = arith.subf %101, %102 : vector<16x16xf32>
      %cst_61 = arith.constant 5.000000e-01 : f32
      %104 = vector.broadcast %cst_61 : f32 to vector<16x16xf32>
      %105 = arith.mulf %104, %103 : vector<16x16xf32>
      %cst_62 = arith.constant dense<0.000000e+00> : vector<16x16xf32>
      %106 = tpu.matmul %98, %105, %cst_62 {dimension_numbers = #tpu.dot_dimension_numbers<[1], [0], [0], [1], [0, 0, 1, 1], [], []>} : vector<16x16xf32>, vector<16x16xf32>, vector<16x16xf32> -> vector<16x16xf32>
      %cst_63 = arith.constant dense<0.000000e+00> : vector<16x16xf32>
      %107 = tpu.matmul %105, %99, %cst_63 {dimension_numbers = #tpu.dot_dimension_numbers<[1], [0], [0], [1], [0, 0, 1, 1], [], []>} : vector<16x16xf32>, vector<16x16xf32>, vector<16x16xf32> -> vector<16x16xf32>
      %cst_64 = arith.constant 3.000000e+00 : f32
      %108 = vector.broadcast %cst_64 : f32 to vector<16x16xf32>
      %109 = arith.mulf %108, %34 : vector<16x16xf32>
      %cst_65 = arith.constant dense<0.000000e+00> : vector<16x16xf32>
      %110 = tpu.matmul %107, %106, %cst_65 {dimension_numbers = #tpu.dot_dimension_numbers<[1], [0], [0], [1], [0, 0, 1, 1], [], []>} : vector<16x16xf32>, vector<16x16xf32>, vector<16x16xf32> -> vector<16x16xf32>
      %111 = arith.subf %109, %110 : vector<16x16xf32>
      %cst_66 = arith.constant 5.000000e-01 : f32
      %112 = vector.broadcast %cst_66 : f32 to vector<16x16xf32>
      %113 = arith.mulf %112, %111 : vector<16x16xf32>
      %cst_67 = arith.constant dense<0.000000e+00> : vector<16x16xf32>
      %114 = tpu.matmul %106, %113, %cst_67 {dimension_numbers = #tpu.dot_dimension_numbers<[1], [0], [0], [1], [0, 0, 1, 1], [], []>} : vector<16x16xf32>, vector<16x16xf32>, vector<16x16xf32> -> vector<16x16xf32>
      %cst_68 = arith.constant dense<0.000000e+00> : vector<16x16xf32>
      %115 = tpu.matmul %113, %107, %cst_68 {dimension_numbers = #tpu.dot_dimension_numbers<[1], [0], [0], [1], [0, 0, 1, 1], [], []>} : vector<16x16xf32>, vector<16x16xf32>, vector<16x16xf32> -> vector<16x16xf32>
      %cst_69 = arith.constant 3.000000e+00 : f32
      %116 = vector.broadcast %cst_69 : f32 to vector<16x16xf32>
      %117 = arith.mulf %116, %34 : vector<16x16xf32>
      %cst_70 = arith.constant dense<0.000000e+00> : vector<16x16xf32>
      %118 = tpu.matmul %115, %114, %cst_70 {dimension_numbers = #tpu.dot_dimension_numbers<[1], [0], [0], [1], [0, 0, 1, 1], [], []>} : vector<16x16xf32>, vector<16x16xf32>, vector<16x16xf32> -> vector<16x16xf32>
      %119 = arith.subf %117, %118 : vector<16x16xf32>
      %cst_71 = arith.constant 5.000000e-01 : f32
      %120 = vector.broadcast %cst_71 : f32 to vector<16x16xf32>
      %121 = arith.mulf %120, %119 : vector<16x16xf32>
      %cst_72 = arith.constant dense<0.000000e+00> : vector<16x16xf32>
      %122 = tpu.matmul %114, %121, %cst_72 {dimension_numbers = #tpu.dot_dimension_numbers<[1], [0], [0], [1], [0, 0, 1, 1], [], []>} : vector<16x16xf32>, vector<16x16xf32>, vector<16x16xf32> -> vector<16x16xf32>
      %cst_73 = arith.constant dense<0.000000e+00> : vector<16x16xf32>
      %123 = tpu.matmul %121, %115, %cst_73 {dimension_numbers = #tpu.dot_dimension_numbers<[1], [0], [0], [1], [0, 0, 1, 1], [], []>} : vector<16x16xf32>, vector<16x16xf32>, vector<16x16xf32> -> vector<16x16xf32>
      %cst_74 = arith.constant 3.000000e+00 : f32
      %124 = vector.broadcast %cst_74 : f32 to vector<16x16xf32>
      %125 = arith.mulf %124, %34 : vector<16x16xf32>
      %cst_75 = arith.constant dense<0.000000e+00> : vector<16x16xf32>
      %126 = tpu.matmul %123, %122, %cst_75 {dimension_numbers = #tpu.dot_dimension_numbers<[1], [0], [0], [1], [0, 0, 1, 1], [], []>} : vector<16x16xf32>, vector<16x16xf32>, vector<16x16xf32> -> vector<16x16xf32>
      %127 = arith.subf %125, %126 : vector<16x16xf32>
      %cst_76 = arith.constant 5.000000e-01 : f32
      %128 = vector.broadcast %cst_76 : f32 to vector<16x16xf32>
      %129 = arith.mulf %128, %127 : vector<16x16xf32>
      %cst_77 = arith.constant dense<0.000000e+00> : vector<16x16xf32>
      %130 = tpu.matmul %129, %123, %cst_77 {dimension_numbers = #tpu.dot_dimension_numbers<[1], [0], [0], [1], [0, 0, 1, 1], [], []>} : vector<16x16xf32>, vector<16x16xf32>, vector<16x16xf32> -> vector<16x16xf32>
      %131 = math.rsqrt %56 : f32
      %132 = vector.broadcast %131 : f32 to vector<16x16xf32>
      %133 = arith.mulf %130, %132 : vector<16x16xf32>
      %cst_78 = arith.constant dense<0.000000e+00> : vector<1x16xf32>
      %134 = tpu.matmul %38, %133, %cst_78 {dimension_numbers = #tpu.dot_dimension_numbers<[1], [0], [0], [1], [0, 0, 1, 1], [], []>} : vector<1x16xf32>, vector<16x16xf32>, vector<1x16xf32> -> vector<1x16xf32>
      %cst_79 = arith.constant 0.000000e+00 : f32
      %135 = vector.broadcast %cst_79 : f32 to vector<1x16xf32>
      %136 = arith.subf %135, %134 : vector<1x16xf32>
      %c0_80 = arith.constant 0 : index
      %c0_81 = arith.constant 0 : index
      %c0_82 = arith.constant 0 : index
      %137 = vector.load %arg3[%c0_80, %c0_81, %c0_82] : memref<2x16x16xf32, #tpu.memory_space<vmem>>, vector<1x16x16xf32>
      %138 = vector.shape_cast %137 : vector<1x16x16xf32> to vector<16x16xf32>
      %139 = vector.shape_cast %133 : vector<16x16xf32> to vector<1x16x16xf32>
      tpu.vector_store %arg3[%c0_80, %c0_81, %c0_82], %139 {strides = array<i32>} : memref<2x16x16xf32, #tpu.memory_space<vmem>>, vector<1x16x16xf32>,
      %c0_83 = arith.constant 0 : index
      %c0_84 = arith.constant 0 : index
      %c0_85 = arith.constant 0 : index
      %140 = vector.load %arg4[%c0_83, %c0_84, %c0_85] : memref<2x1x16xf32, #tpu.memory_space<vmem>>, vector<1x1x16xf32>
      %141 = vector.shape_cast %140 : vector<1x1x16xf32> to vector<1x16xf32>
      %142 = vector.shape_cast %136 : vector<1x16xf32> to vector<1x1x16xf32>
      tpu.vector_store %arg4[%c0_83, %c0_84, %c0_85], %142 {strides = array<i32>} : memref<2x1x16xf32, #tpu.memory_space<vmem>>, vector<1x1x16xf32>,
      %143 = vector.extract_strided_slice %37 {offsets = [0, 16], sizes = [1, 16], strides = [1, 1]} : vector<1x32xf32> to vector<1x16xf32>
      %cst_86 = arith.constant dense<0.000000e+00> : vector<16x16xf32>
      %144 = tpu.matmul %143, %143, %cst_86 {dimension_numbers = #tpu.dot_dimension_numbers<[0], [0], [1], [1], [0, 1, 1, 1], [], []>} : vector<1x16xf32>, vector<1x16xf32>, vector<16x16xf32> -> vector<16x16xf32>
      %c1_87 = arith.constant 1 : index
      %c0_88 = arith.constant 0 : index
      %c0_89 = arith.constant 0 : index
      %145 = vector.load %arg5[%c1_87, %c0_88, %c0_89] : memref<2x16x16xf32, #tpu.memory_space<vmem>>, vector<1x16x16xf32>
      %146 = vector.shape_cast %145 : vector<1x16x16xf32> to vector<16x16xf32>
      %cst_90 = arith.constant 6.400000e+01 : f32
      %147 = vector.broadcast %cst_90 : f32 to vector<16x16xf32>
      %148 = arith.mulf %147, %144 : vector<16x16xf32>
      %149 = arith.subf %146, %148 : vector<16x16xf32>
      %cst_91 = arith.constant 0.0158730168 : f32
      %150 = vector.broadcast %cst_91 : f32 to vector<16x16xf32>
      %151 = arith.mulf %149, %150 : vector<16x16xf32>
      %cst_92 = arith.constant 1.000000e+00 : f32
      %152 = vector.broadcast %cst_92 : f32 to vector<16x16xf32>
      %153 = arith.mulf %152, %151 : vector<16x16xf32>
      %cst_93 = arith.constant 0.000000e+00 : f32
      %154 = vector.broadcast %cst_93 : f32 to vector<16x16xf32>
      %155 = arith.mulf %154, %34 : vector<16x16xf32>
      %156 = arith.addf %153, %155 : vector<16x16xf32>
      %157 = arith.mulf %156, %34 : vector<16x16xf32>
      %158 = vector.shape_cast %157 : vector<16x16xf32> to vector<1x16x16xf32>
      %cst_94 = arith.constant dense<0.000000e+00> : vector<1xf32>
      %159 = vector.multi_reduction <add>, %158, %cst_94 [1, 2] : vector<1x16x16xf32> to vector<1xf32>
      %160 = vector.shape_cast %159 : vector<1xf32> to vector<1x1x1xf32>
      %161 = vector.extract %160[0, 0, 0] : f32 from vector<1x1x1xf32>
      %cst_95 = arith.constant 1.000000e+00 : f32
      %162 = arith.divf %cst_95, %161 : f32
      %163 = vector.broadcast %162 : f32 to vector<16x16xf32>
      %164 = arith.mulf %156, %163 : vector<16x16xf32>
      %cst_96 = arith.constant 3.000000e+00 : f32
      %165 = vector.broadcast %cst_96 : f32 to vector<16x16xf32>
      %166 = arith.mulf %165, %34 : vector<16x16xf32>
      %cst_97 = arith.constant dense<0.000000e+00> : vector<16x16xf32>
      %167 = tpu.matmul %34, %164, %cst_97 {dimension_numbers = #tpu.dot_dimension_numbers<[1], [0], [0], [1], [0, 0, 1, 1], [], []>} : vector<16x16xf32>, vector<16x16xf32>, vector<16x16xf32> -> vector<16x16xf32>
      %168 = arith.subf %166, %167 : vector<16x16xf32>
      %cst_98 = arith.constant 5.000000e-01 : f32
      %169 = vector.broadcast %cst_98 : f32 to vector<16x16xf32>
      %170 = arith.mulf %169, %168 : vector<16x16xf32>
      %cst_99 = arith.constant dense<0.000000e+00> : vector<16x16xf32>
      %171 = tpu.matmul %164, %170, %cst_99 {dimension_numbers = #tpu.dot_dimension_numbers<[1], [0], [0], [1], [0, 0, 1, 1], [], []>} : vector<16x16xf32>, vector<16x16xf32>, vector<16x16xf32> -> vector<16x16xf32>
      %cst_100 = arith.constant dense<0.000000e+00> : vector<16x16xf32>
      %172 = tpu.matmul %170, %34, %cst_100 {dimension_numbers = #tpu.dot_dimension_numbers<[1], [0], [0], [1], [0, 0, 1, 1], [], []>} : vector<16x16xf32>, vector<16x16xf32>, vector<16x16xf32> -> vector<16x16xf32>
      %cst_101 = arith.constant 3.000000e+00 : f32
      %173 = vector.broadcast %cst_101 : f32 to vector<16x16xf32>
      %174 = arith.mulf %173, %34 : vector<16x16xf32>
      %cst_102 = arith.constant dense<0.000000e+00> : vector<16x16xf32>
      %175 = tpu.matmul %172, %171, %cst_102 {dimension_numbers = #tpu.dot_dimension_numbers<[1], [0], [0], [1], [0, 0, 1, 1], [], []>} : vector<16x16xf32>, vector<16x16xf32>, vector<16x16xf32> -> vector<16x16xf32>
      %176 = arith.subf %174, %175 : vector<16x16xf32>
      %cst_103 = arith.constant 5.000000e-01 : f32
      %177 = vector.broadcast %cst_103 : f32 to vector<16x16xf32>
      %178 = arith.mulf %177, %176 : vector<16x16xf32>
      %cst_104 = arith.constant dense<0.000000e+00> : vector<16x16xf32>
      %179 = tpu.matmul %171, %178, %cst_104 {dimension_numbers = #tpu.dot_dimension_numbers<[1], [0], [0], [1], [0, 0, 1, 1], [], []>} : vector<16x16xf32>, vector<16x16xf32>, vector<16x16xf32> -> vector<16x16xf32>
      %cst_105 = arith.constant dense<0.000000e+00> : vector<16x16xf32>
      %180 = tpu.matmul %178, %172, %cst_105 {dimension_numbers = #tpu.dot_dimension_numbers<[1], [0], [0], [1], [0, 0, 1, 1], [], []>} : vector<16x16xf32>, vector<16x16xf32>, vector<16x16xf32> -> vector<16x16xf32>
      %cst_106 = arith.constant 3.000000e+00 : f32
      %181 = vector.broadcast %cst_106 : f32 to vector<16x16xf32>
      %182 = arith.mulf %181, %34 : vector<16x16xf32>
      %cst_107 = arith.constant dense<0.000000e+00> : vector<16x16xf32>
      %183 = tpu.matmul %180, %179, %cst_107 {dimension_numbers = #tpu.dot_dimension_numbers<[1], [0], [0], [1], [0, 0, 1, 1], [], []>} : vector<16x16xf32>, vector<16x16xf32>, vector<16x16xf32> -> vector<16x16xf32>
      %184 = arith.subf %182, %183 : vector<16x16xf32>
      %cst_108 = arith.constant 5.000000e-01 : f32
      %185 = vector.broadcast %cst_108 : f32 to vector<16x16xf32>
      %186 = arith.mulf %185, %184 : vector<16x16xf32>
      %cst_109 = arith.constant dense<0.000000e+00> : vector<16x16xf32>
      %187 = tpu.matmul %179, %186, %cst_109 {dimension_numbers = #tpu.dot_dimension_numbers<[1], [0], [0], [1], [0, 0, 1, 1], [], []>} : vector<16x16xf32>, vector<16x16xf32>, vector<16x16xf32> -> vector<16x16xf32>
      %cst_110 = arith.constant dense<0.000000e+00> : vector<16x16xf32>
      %188 = tpu.matmul %186, %180, %cst_110 {dimension_numbers = #tpu.dot_dimension_numbers<[1], [0], [0], [1], [0, 0, 1, 1], [], []>} : vector<16x16xf32>, vector<16x16xf32>, vector<16x16xf32> -> vector<16x16xf32>
      %cst_111 = arith.constant 3.000000e+00 : f32
      %189 = vector.broadcast %cst_111 : f32 to vector<16x16xf32>
      %190 = arith.mulf %189, %34 : vector<16x16xf32>
      %cst_112 = arith.constant dense<0.000000e+00> : vector<16x16xf32>
      %191 = tpu.matmul %188, %187, %cst_112 {dimension_numbers = #tpu.dot_dimension_numbers<[1], [0], [0], [1], [0, 0, 1, 1], [], []>} : vector<16x16xf32>, vector<16x16xf32>, vector<16x16xf32> -> vector<16x16xf32>
      %192 = arith.subf %190, %191 : vector<16x16xf32>
      %cst_113 = arith.constant 5.000000e-01 : f32
      %193 = vector.broadcast %cst_113 : f32 to vector<16x16xf32>
      %194 = arith.mulf %193, %192 : vector<16x16xf32>
      %cst_114 = arith.constant dense<0.000000e+00> : vector<16x16xf32>
      %195 = tpu.matmul %187, %194, %cst_114 {dimension_numbers = #tpu.dot_dimension_numbers<[1], [0], [0], [1], [0, 0, 1, 1], [], []>} : vector<16x16xf32>, vector<16x16xf32>, vector<16x16xf32> -> vector<16x16xf32>
      %cst_115 = arith.constant dense<0.000000e+00> : vector<16x16xf32>
      %196 = tpu.matmul %194, %188, %cst_115 {dimension_numbers = #tpu.dot_dimension_numbers<[1], [0], [0], [1], [0, 0, 1, 1], [], []>} : vector<16x16xf32>, vector<16x16xf32>, vector<16x16xf32> -> vector<16x16xf32>
      %cst_116 = arith.constant 3.000000e+00 : f32
      %197 = vector.broadcast %cst_116 : f32 to vector<16x16xf32>
      %198 = arith.mulf %197, %34 : vector<16x16xf32>
      %cst_117 = arith.constant dense<0.000000e+00> : vector<16x16xf32>
      %199 = tpu.matmul %196, %195, %cst_117 {dimension_numbers = #tpu.dot_dimension_numbers<[1], [0], [0], [1], [0, 0, 1, 1], [], []>} : vector<16x16xf32>, vector<16x16xf32>, vector<16x16xf32> -> vector<16x16xf32>
      %200 = arith.subf %198, %199 : vector<16x16xf32>
      %cst_118 = arith.constant 5.000000e-01 : f32
      %201 = vector.broadcast %cst_118 : f32 to vector<16x16xf32>
      %202 = arith.mulf %201, %200 : vector<16x16xf32>
      %cst_119 = arith.constant dense<0.000000e+00> : vector<16x16xf32>
      %203 = tpu.matmul %195, %202, %cst_119 {dimension_numbers = #tpu.dot_dimension_numbers<[1], [0], [0], [1], [0, 0, 1, 1], [], []>} : vector<16x16xf32>, vector<16x16xf32>, vector<16x16xf32> -> vector<16x16xf32>
      %cst_120 = arith.constant dense<0.000000e+00> : vector<16x16xf32>
      %204 = tpu.matmul %202, %196, %cst_120 {dimension_numbers = #tpu.dot_dimension_numbers<[1], [0], [0], [1], [0, 0, 1, 1], [], []>} : vector<16x16xf32>, vector<16x16xf32>, vector<16x16xf32> -> vector<16x16xf32>
      %cst_121 = arith.constant 3.000000e+00 : f32
      %205 = vector.broadcast %cst_121 : f32 to vector<16x16xf32>
      %206 = arith.mulf %205, %34 : vector<16x16xf32>
      %cst_122 = arith.constant dense<0.000000e+00> : vector<16x16xf32>
      %207 = tpu.matmul %204, %203, %cst_122 {dimension_numbers = #tpu.dot_dimension_numbers<[1], [0], [0], [1], [0, 0, 1, 1], [], []>} : vector<16x16xf32>, vector<16x16xf32>, vector<16x16xf32> -> vector<16x16xf32>
      %208 = arith.subf %206, %207 : vector<16x16xf32>
      %cst_123 = arith.constant 5.000000e-01 : f32
      %209 = vector.broadcast %cst_123 : f32 to vector<16x16xf32>
      %210 = arith.mulf %209, %208 : vector<16x16xf32>
      %cst_124 = arith.constant dense<0.000000e+00> : vector<16x16xf32>
      %211 = tpu.matmul %203, %210, %cst_124 {dimension_numbers = #tpu.dot_dimension_numbers<[1], [0], [0], [1], [0, 0, 1, 1], [], []>} : vector<16x16xf32>, vector<16x16xf32>, vector<16x16xf32> -> vector<16x16xf32>
      %cst_125 = arith.constant dense<0.000000e+00> : vector<16x16xf32>
      %212 = tpu.matmul %210, %204, %cst_125 {dimension_numbers = #tpu.dot_dimension_numbers<[1], [0], [0], [1], [0, 0, 1, 1], [], []>} : vector<16x16xf32>, vector<16x16xf32>, vector<16x16xf32> -> vector<16x16xf32>
      %cst_126 = arith.constant 3.000000e+00 : f32
      %213 = vector.broadcast %cst_126 : f32 to vector<16x16xf32>
      %214 = arith.mulf %213, %34 : vector<16x16xf32>
      %cst_127 = arith.constant dense<0.000000e+00> : vector<16x16xf32>
      %215 = tpu.matmul %212, %211, %cst_127 {dimension_numbers = #tpu.dot_dimension_numbers<[1], [0], [0], [1], [0, 0, 1, 1], [], []>} : vector<16x16xf32>, vector<16x16xf32>, vector<16x16xf32> -> vector<16x16xf32>
      %216 = arith.subf %214, %215 : vector<16x16xf32>
      %cst_128 = arith.constant 5.000000e-01 : f32
      %217 = vector.broadcast %cst_128 : f32 to vector<16x16xf32>
      %218 = arith.mulf %217, %216 : vector<16x16xf32>
      %cst_129 = arith.constant dense<0.000000e+00> : vector<16x16xf32>
      %219 = tpu.matmul %211, %218, %cst_129 {dimension_numbers = #tpu.dot_dimension_numbers<[1], [0], [0], [1], [0, 0, 1, 1], [], []>} : vector<16x16xf32>, vector<16x16xf32>, vector<16x16xf32> -> vector<16x16xf32>
      %cst_130 = arith.constant dense<0.000000e+00> : vector<16x16xf32>
      %220 = tpu.matmul %218, %212, %cst_130 {dimension_numbers = #tpu.dot_dimension_numbers<[1], [0], [0], [1], [0, 0, 1, 1], [], []>} : vector<16x16xf32>, vector<16x16xf32>, vector<16x16xf32> -> vector<16x16xf32>
      %cst_131 = arith.constant 3.000000e+00 : f32
      %221 = vector.broadcast %cst_131 : f32 to vector<16x16xf32>
      %222 = arith.mulf %221, %34 : vector<16x16xf32>
      %cst_132 = arith.constant dense<0.000000e+00> : vector<16x16xf32>
      %223 = tpu.matmul %220, %219, %cst_132 {dimension_numbers = #tpu.dot_dimension_numbers<[1], [0], [0], [1], [0, 0, 1, 1], [], []>} : vector<16x16xf32>, vector<16x16xf32>, vector<16x16xf32> -> vector<16x16xf32>
      %224 = arith.subf %222, %223 : vector<16x16xf32>
      %cst_133 = arith.constant 5.000000e-01 : f32
      %225 = vector.broadcast %cst_133 : f32 to vector<16x16xf32>
      %226 = arith.mulf %225, %224 : vector<16x16xf32>
      %cst_134 = arith.constant dense<0.000000e+00> : vector<16x16xf32>
      %227 = tpu.matmul %219, %226, %cst_134 {dimension_numbers = #tpu.dot_dimension_numbers<[1], [0], [0], [1], [0, 0, 1, 1], [], []>} : vector<16x16xf32>, vector<16x16xf32>, vector<16x16xf32> -> vector<16x16xf32>
      %cst_135 = arith.constant dense<0.000000e+00> : vector<16x16xf32>
      %228 = tpu.matmul %226, %220, %cst_135 {dimension_numbers = #tpu.dot_dimension_numbers<[1], [0], [0], [1], [0, 0, 1, 1], [], []>} : vector<16x16xf32>, vector<16x16xf32>, vector<16x16xf32> -> vector<16x16xf32>
      %cst_136 = arith.constant 3.000000e+00 : f32
      %229 = vector.broadcast %cst_136 : f32 to vector<16x16xf32>
      %230 = arith.mulf %229, %34 : vector<16x16xf32>
      %cst_137 = arith.constant dense<0.000000e+00> : vector<16x16xf32>
      %231 = tpu.matmul %228, %227, %cst_137 {dimension_numbers = #tpu.dot_dimension_numbers<[1], [0], [0], [1], [0, 0, 1, 1], [], []>} : vector<16x16xf32>, vector<16x16xf32>, vector<16x16xf32> -> vector<16x16xf32>
      %232 = arith.subf %230, %231 : vector<16x16xf32>
      %cst_138 = arith.constant 5.000000e-01 : f32
      %233 = vector.broadcast %cst_138 : f32 to vector<16x16xf32>
      %234 = arith.mulf %233, %232 : vector<16x16xf32>
      %cst_139 = arith.constant dense<0.000000e+00> : vector<16x16xf32>
      %235 = tpu.matmul %234, %228, %cst_139 {dimension_numbers = #tpu.dot_dimension_numbers<[1], [0], [0], [1], [0, 0, 1, 1], [], []>} : vector<16x16xf32>, vector<16x16xf32>, vector<16x16xf32> -> vector<16x16xf32>
      %236 = math.rsqrt %161 : f32
      %237 = vector.broadcast %236 : f32 to vector<16x16xf32>
      %238 = arith.mulf %235, %237 : vector<16x16xf32>
      %cst_140 = arith.constant dense<0.000000e+00> : vector<1x16xf32>
      %239 = tpu.matmul %143, %238, %cst_140 {dimension_numbers = #tpu.dot_dimension_numbers<[1], [0], [0], [1], [0, 0, 1, 1], [], []>} : vector<1x16xf32>, vector<16x16xf32>, vector<1x16xf32> -> vector<1x16xf32>
      %cst_141 = arith.constant 0.000000e+00 : f32
      %240 = vector.broadcast %cst_141 : f32 to vector<1x16xf32>
      %241 = arith.subf %240, %239 : vector<1x16xf32>
      %c1_142 = arith.constant 1 : index
      %c0_143 = arith.constant 0 : index
      %c0_144 = arith.constant 0 : index
      %242 = vector.load %arg3[%c1_142, %c0_143, %c0_144] : memref<2x16x16xf32, #tpu.memory_space<vmem>>, vector<1x16x16xf32>
      %243 = vector.shape_cast %242 : vector<1x16x16xf32> to vector<16x16xf32>
      %244 = vector.shape_cast %238 : vector<16x16xf32> to vector<1x16x16xf32>
      tpu.vector_store %arg3[%c1_142, %c0_143, %c0_144], %244 {strides = array<i32>} : memref<2x16x16xf32, #tpu.memory_space<vmem>>, vector<1x16x16xf32>,
      %c1_145 = arith.constant 1 : index
      %c0_146 = arith.constant 0 : index
      %c0_147 = arith.constant 0 : index
      %245 = vector.load %arg4[%c1_145, %c0_146, %c0_147] : memref<2x1x16xf32, #tpu.memory_space<vmem>>, vector<1x1x16xf32>
      %246 = vector.shape_cast %245 : vector<1x1x16xf32> to vector<1x16xf32>
      %247 = vector.shape_cast %241 : vector<1x16xf32> to vector<1x1x16xf32>
      tpu.vector_store %arg4[%c1_145, %c0_146, %c0_147], %247 {strides = array<i32>} : memref<2x1x16xf32, #tpu.memory_space<vmem>>, vector<1x1x16xf32>,
    } else {
    }
    return
  }
  func.func @transform_0(%arg0: i32, %arg1: i32) -> (i32, i32) {
    %c0_i32 = arith.constant 0 : i32
    return %arg1, %arg0 : i32, i32
  }
  func.func @transform_1(%arg0: i32, %arg1: i32) -> (i32, i32, i32) {
    %c0_i32 = arith.constant 0 : i32
    %c0_i32_0 = arith.constant 0 : i32
    %c0_i32_1 = arith.constant 0 : i32
    return %arg0, %c0_i32, %c0_i32_0 : i32, i32, i32
  }
  func.func @transform_2(%arg0: i32, %arg1: i32) -> (i32, i32, i32) {
    %c0_i32 = arith.constant 0 : i32
    %c0_i32_0 = arith.constant 0 : i32
    %c0_i32_1 = arith.constant 0 : i32
    return %arg0, %c0_i32, %c0_i32_0 : i32, i32, i32
  }
}

</mosaic_0001>

<llo_original>
// kernel: tpu_custom_call.1
$region0: #{tpu_custom_call.1}
  #allocation0 [shape = 'u32[]', space=smem, size = 0x4, offset = 0x4, fixed_abs, tag = 'smem constant byte address 0x4 - core index']
  #allocation1 [shape = 'u32[144,128]{1,0:T(1,128)}', space=vmem, size = 0x12000, scoped, tag = 'internal scratch']
  #allocation2 [shape = 'f32[2,16,16]{2,1,0:T(8,128)}', space=vmem, size = 0x4000, scoped, tag = 'scratch operand']
  #allocation3 [shape = 'f32[1,32]{1,0:T(1,128)}', space=vmem, size = 0x200, scoped, tag = 'scratch operand']
  %s0 = inlined_call_operand.vmem [shape: f32[64,32], index: 0, kind: input, shape index: {}]
  %s1 = inlined_call_operand.hbm [shape: f32[2,16,16], index: 1, kind: output, shape index: {0}]
  %s2 = inlined_call_operand.hbm [shape: f32[2,1,16], index: 2, kind: output, shape index: {1}]
  %3 = xla_tuple %s1, %s2
  %s4 = sld [smem:[#allocation0]]
  $region53: #{tpu_custom_call.1} parent=0
    _
  %s6 = ssub.s32 1, %s4
  %s7 = scalar_select 0, %s6, %s4
  $region1: #{tpu_custom_call.1} parent=0
    #allocation4 [shape = 'u8[16384]{0}', space=vmem, size = 0x4000, scoped, tag = 'output window, operand 0, single buffered']
    #allocation5 [shape = 's32[2]{0}', space=sflag, size = 0x8, scoped, tag = 'scoped memory for tpu_custom_call.1']
    #allocation6 [shape = 'u8[1024]{0}', space=vmem, size = 0x400, scoped, tag = 'output window, operand 1, single buffered']
    #allocation7 [shape = 's32[1]{0}', space=sflag, size = 0x4, scoped, tag = 'scoped memory for tpu_custom_call.1']
    %8 = vsyncpa [#allocation5], 0
    %9 = vsyncpa [#allocation7], 0
    loop: start=0, step=1, limit=4
    $region2: #{tpu_custom_call.1} parent=1 // loop_pre_header
      _
    $region3: #{tpu_custom_call.1} parent=1 // loop_header
      %s11 = sphi 0, %s15
      %p12 = scmp.ge.s32.totalorder %s11, 4
      %s18 = sphi 0, %s30
      %s19 = sphi 0, %s26
      %s20 = sphi 0, %s18
      %s21 = sphi 0, %s19
      %s22 = sphi 0, %s20
      %s23 = sphi 0, %s21
      %s35 = sphi 0, %s37
      %s38 = sphi 0, %s35
      %s39 = sphi 0, %s38
      %s55 = sphi 0, %s39
      %s61 = sphi 0, %s63
      %s64 = sphi 0, %s61
      %s65 = sphi 0, %s64
      %s81 = sphi 0, %s65
      %s87 = sphi 0, %s89
      %s90 = sphi 0, %s87
      %s91 = sphi 0, %s90
      %s107 = sphi 0, %s91
    $region4: #{tpu_custom_call.1} parent=1 // loop_header_branch
      %14 = sbr.rel (%p12) target = $region8
    $region5: #{tpu_custom_call.1} parent=1 // loop_body
      %s16 = ssub.s32 %s11, 1
      %s17 = ssub.s32 %s11, 2
      %s24 = sadd.s32 1, %s19
      %p25 = scmp.ge.s32.totalorder %s24, 2
      %s26 = scalar_select %p25, 0, %s24
      %s27 = sadd.s32 1, %s18
      %s28 = scalar_select %p25, %s27, %s18
      %p29 = scmp.ge.s32.totalorder %s28, 1
      %s30 = scalar_select %p29, 0, %s28
      %s31 = ssub.s32 %s19, %s26
      %s32 = ssub.s32 %s18, %s30
      %s33 = sor.u32 %s31, %s32
      %p34 = scmp.eq.s32.totalorder %s33, 0
      %s36 = sadd.s32 %s35, 1
      %s37 = scalar_select %p34, %s35, %s36
      %p40 = pneg %p34
      %p41 = scmp.eq.s32.totalorder %s11, 1
      %p42 = por %p40, %p41
      %p43 = scmp.ne.s32.totalorder %s35, %s38
      %p44 = scmp.eq.s32.totalorder %s11, 0
      %p45 = por %p43, %p44
      %p46 = scmp.ne.s32.totalorder %s35, %s38
      %p47 = scmp.eq.s32.totalorder %s16, 1
      %p48 = por %p46, %p47
      %p49 = scmp.ne.s32.totalorder %s38, %s39
      %p50 = scmp.eq.s32.totalorder %s16, 0
      %p51 = por %p49, %p50
      %p52 = scmp.ne.s32.totalorder %s38, %s39
      %p53 = scmp.eq.s32.totalorder %s17, 1
      %p54 = por %p52, %p53
      %p56 = scmp.ne.s32.totalorder %s39, %s55
      %p57 = scmp.eq.s32.totalorder %s17, 0
      %p58 = por %p56, %p57
      %s59 = ssub.s32 %s18, %s30
      %p60 = scmp.eq.s32.totalorder %s59, 0
      %s62 = sadd.s32 %s61, 1
      %s63 = scalar_select %p60, %s61, %s62
      %p66 = pneg %p60
      %p67 = scmp.eq.s32.totalorder %s11, 1
      %p68 = por %p66, %p67
      %p69 = scmp.ne.s32.totalorder %s61, %s64
      %p70 = scmp.eq.s32.totalorder %s11, 0
      %p71 = por %p69, %p70
      %p72 = scmp.ne.s32.totalorder %s61, %s64
      %p73 = scmp.eq.s32.totalorder %s16, 1
      %p74 = por %p72, %p73
      %p75 = scmp.ne.s32.totalorder %s64, %s65
      %p76 = scmp.eq.s32.totalorder %s16, 0
      %p77 = por %p75, %p76
      %p78 = scmp.ne.s32.totalorder %s64, %s65
      %p79 = scmp.eq.s32.totalorder %s17, 1
      %p80 = por %p78, %p79
      %p82 = scmp.ne.s32.totalorder %s65, %s81
      %p83 = scmp.eq.s32.totalorder %s17, 0
      %p84 = por %p82, %p83
      %s85 = ssub.s32 %s18, %s30
      %p86 = scmp.eq.s32.totalorder %s85, 0
      %s88 = sadd.s32 %s87, 1
      %s89 = scalar_select %p86, %s87, %s88
      %p92 = pneg %p86
      %p93 = scmp.eq.s32.totalorder %s11, 1
      %p94 = por %p92, %p93
      %p95 = scmp.ne.s32.totalorder %s87, %s90
      %p96 = scmp.eq.s32.totalorder %s11, 0
      %p97 = por %p95, %p96
      %p98 = scmp.ne.s32.totalorder %s87, %s90
      %p99 = scmp.eq.s32.totalorder %s16, 1
      %p100 = por %p98, %p99
      %p101 = scmp.ne.s32.totalorder %s90, %s91
      %p102 = scmp.eq.s32.totalorder %s16, 0
      %p103 = por %p101, %p102
      %p104 = scmp.ne.s32.totalorder %s90, %s91
      %p105 = scmp.eq.s32.totalorder %s17, 1
      %p106 = por %p104, %p105
      %p108 = scmp.ne.s32.totalorder %s91, %s107
      %p109 = scmp.eq.s32.totalorder %s17, 0
      %p110 = por %p108, %p109
      %p111 = scmp.le.s32.totalorder 1, %s11
      %p112 = scmp.lt.s32.totalorder %s11, 3
      %p113 = pnand %p111, %p112
      %p114 = pneg %p113
      // Predicated region
      $region9: #{tpu_custom_call.1} parent=5 // pred_check
        _
      $region10: #{tpu_custom_call.1} parent=5 // pred_check_branch
        %116 = sbr.rel (%p113) target = $region12
      $region11: #{tpu_custom_call.1} parent=5 // pred_region
        %s117 = ssub.s32 %s11, 1
      $region12: #{tpu_custom_call.1} parent=5 // pred_fallthru
        _
      %p118 = scmp.lt.s32.totalorder %s11, 2
      // Predicated region
      $region13: #{tpu_custom_call.1} parent=5 // pred_check
        %p119 = pneg %p118
      $region14: #{tpu_custom_call.1} parent=5 // pred_check_branch
        %121 = sbr.rel (%p119) target = $region16
      $region15: #{tpu_custom_call.1} parent=5 // pred_region
        // Predicated region
        $region17: #{tpu_custom_call.1} parent=15 // pred_check
          %p122 = pneg %p45
        $region18: #{tpu_custom_call.1} parent=15 // pred_check_branch
          %124 = sbr.rel (%p122) target = $region20
        $region19: #{tpu_custom_call.1} parent=15 // pred_region
          %s125 = smul.u32 4, %s19
          %p126 = scmp.lt.s32.totalorder %s125, 7
          %s127 = scalar_select %p126, %s125, 7
          %p128 = scmp.lt.s32.totalorder %s18, 0
          %s129 = scalar_select %p128, %s18, 0
          %s130 = sadd.s32 %s129, %s127
          %s131 = smul.addr %s130, 8
          %s132 = scalar_lea.vmem %s0, %s131
          %s133 = smul.u32 4, %s19
        $region20: #{tpu_custom_call.1} parent=15 // pred_fallthru
          _
      $region16: #{tpu_custom_call.1} parent=5 // pred_fallthru
        _
      %p134 = scmp.le.s32.totalorder 1, %s11
      %p135 = scmp.lt.s32.totalorder %s11, 3
      %p136 = pnand %p134, %p135
      %p137 = pneg %p136
      // Predicated region
      $region21: #{tpu_custom_call.1} parent=5 // pred_check
        _
      $region22: #{tpu_custom_call.1} parent=5 // pred_check_branch
        %139 = sbr.rel (%p136) target = $region24
      $region23: #{tpu_custom_call.1} parent=5 // pred_region
        %s140 = ssub.s32 %s11, 1
        %s141 = smul.u32 4, %s21
        %p142 = scmp.lt.s32.totalorder %s141, 7
        %s143 = scalar_select %p142, %s141, 7
        %p144 = scmp.lt.s32.totalorder %s20, 0
        %s145 = scalar_select %p144, %s20, 0
        %s146 = sadd.s32 %s145, %s143
        %s147 = smul.addr %s146, 8
        %s148 = scalar_lea.vmem %s0, %s147
        %p149 = pneg %p51
        %p150 = pneg %p48
        %p151 = pneg %p77
        %p152 = pneg %p74
        %p153 = pneg %p103
        %p154 = pneg %p100
        %s155 = smul.u32 4, %s21
        %p156 = scmp.lt.s32.totalorder %s155, 7
        %s157 = scalar_select %p156, %s155, 7
        %p158 = scmp.lt.s32.totalorder %s20, 0
        %s159 = scalar_select %p158, %s20, 0
        %s160 = sadd.s32 %s159, %s157
        %s161 = smul.addr %s160, 8
        %s162 = scalar_lea.vmem %s0, %s161
        %s163 = smul.u32 4, %s21
        %s164 = smul.u32 2, %s20
        %s165 = smul.u32 2, %s20
        %p166 = scmp.eq.s32.totalorder %s21, 0
        // Predicated region
        $region25: #{tpu_custom_call.1} parent=23 // pred_check
          %p167 = pneg %p166
        $region26: #{tpu_custom_call.1} parent=23 // pred_check_branch
          %169 = sbr.rel (%p167) target = $region28
        $region27: #{tpu_custom_call.1} parent=23 // pred_region
          %vm170 = vcmask 130048
          %171 = vst.msk [vmem:[#allocation2] sm:$0xff] %vm170, 0.0
          %172 = vst.msk [vmem:[#allocation2 + $0x8] sm:$0xff] %vm170, 0.0
          %173 = vst.msk [vmem:[#allocation2 + $0x10] sm:$0xff] %vm170, 0.0
          %174 = vst.msk [vmem:[#allocation2 + $0x18] sm:$0xff] %vm170, 0.0
          %vm175 = vcmask 253952
          %176 = vst.msk [vmem:[#allocation3] sm:$0x1] %vm175, 0.0
        $region28: #{tpu_custom_call.1} parent=23 // pred_fallthru
          _
        %v177 = vld [vmem:[%s162] sm:$0xff]
        %v178 = vld [vmem:[%s162 + $0x8] sm:$0xff]
        %v179 = vld [vmem:[%s162 + $0x10] sm:$0xff]
        %v180 = vld [vmem:[%s162 + $0x18] sm:$0xff]
        %v181 = vld [vmem:[#allocation3] sm:$0x1]
        %vm182 = vcmask 261120
        %v183 = vsel %vm182, %v177, 0.0
        %v184 = vsel %vm182, %v178, 0.0
        %v185 = vadd.f32 %v183, %v184
        %v186 = vsel %vm182, %v179, 0.0
        %v187 = vadd.f32 %v185, %v186
        %v188 = vsel %vm182, %v180, 0.0
        %v189 = vadd.f32 %v187, %v188
        %v190 = vrot.slane %v189, 4
        %v191 = vadd.f32 %v189, %v190
        %v192 = vrot.slane %v191, 2
        %v193 = vadd.f32 %v191, %v192
        %v194 = vrot.slane %v193, 1
        %v195 = vadd.f32 %v193, %v194
        %v196 = vadd.f32 %v181, %v195
        %vm197 = vcmask 253952
        %198 = vst.msk [vmem:[#allocation3] sm:$0x1] %vm197, %v196
        %v199 = vld [vmem:[#allocation2] sm:$0xff]
        %v200 = vld [vmem:[#allocation2 + $0x8] sm:$0xff]
        %201 = vxpose.xlu0.b32.start [1/16] %v177, 128
        %202 = vxpose.xlu0.b32.cont [2/16] %v178, 128
        %203 = vxpose.xlu0.b32.cont [3/16] %v179, 128
        %204 = vxpose.xlu0.b32.cont [4/16] %v180, 128
        %205 = vxpose.xlu0.b32.cont [5/16] 0.0, 128
        %206 = vxpose.xlu0.b32.cont [6/16] 0.0, 128
        %207 = vxpose.xlu0.b32.cont [7/16] 0.0, 128
        %208 = vxpose.xlu0.b32.cont [8/16] 0.0, 128
        %209 = vxpose.xlu0.b32.cont [9/16] 0.0, 128
        %210 = vxpose.xlu0.b32.cont [10/16] 0.0, 128
        %211 = vxpose.xlu0.b32.cont [11/16] 0.0, 128
        %212 = vxpose.xlu0.b32.cont [12/16] 0.0, 128
        %213 = vxpose.xlu0.b32.cont [13/16] 0.0, 128
        %214 = vxpose.xlu0.b32.cont [14/16] 0.0, 128
        %215 = vxpose.xlu0.b32.cont [15/16] 0.0, 128
        %216 = vxpose.xlu0.b32.end [16/16] 0.0, 128
        %v217 = vpop.trf.xlu0
        %v218 = vpop.trf.xlu0
        %v219 = vpop.trf.xlu0
        %v220 = vpop.trf.xlu0
        %v221 = vpop.trf.xlu0
        %v222 = vpop.trf.xlu0
        %v223 = vpop.trf.xlu0
        %v224 = vpop.trf.xlu0
        %v225 = vpop.trf.xlu0
        %v226 = vpop.trf.xlu0
        %v227 = vpop.trf.xlu0
        %v228 = vpop.trf.xlu0
        %v229 = vpop.trf.xlu0
        %v230 = vpop.trf.xlu0
        %v231 = vpop.trf.xlu0
        %v232 = vpop.trf.xlu0
        %v234 = vsel %vm182, %v217, 0
        %v237 = vsel %vm182, %v218, 0
        %239 = vmatprep.subr.mxu0 0.0
        %240 = vmatpush1.msra.mxu0 %v177
        %241 = vmatprep.subr.mxu0 0.0
        %242 = vmatpush1.msra.mxu0 %v178
        %243 = vmatprep.subr.mxu0 0.0
        %244 = vmatpush1.msra.mxu0 %v179
        %245 = vmatprep.subr.mxu0 0.0
        %246 = vmatpush1.msra.mxu0 %v180
        %247 = vmatprep.subr.mxu0 0.0
        %248 = vmatpush1.msra.mxu0 0.0
        %249 = vmatprep.subr.mxu0 0.0
        %250 = vmatpush1.msra.mxu0 0.0
        %251 = vmatprep.subr.mxu0 0.0
        %252 = vmatpush1.msra.mxu0 0.0
        %253 = vmatprep.subr.mxu0 0.0
        %254 = vmatpush1.msra.mxu0 0.0
        %255 = vmatprep.subr.mxu0 0.0
        %256 = vmatpush1.msra.mxu0 0.0
        %257 = vmatprep.subr.mxu0 0.0
        %258 = vmatpush1.msra.mxu0 0.0
        %259 = vmatprep.subr.mxu0 0.0
        %260 = vmatpush1.msra.mxu0 0.0
        %261 = vmatprep.subr.mxu0 0.0
        %262 = vmatpush1.msra.mxu0 0.0
        %263 = vmatprep.subr.mxu0 0.0
        %264 = vmatpush1.msra.mxu0 0.0
        %265 = vmatprep.subr.mxu0 0.0
        %266 = vmatpush1.msra.mxu0 0.0
        %267 = vmatprep.subr.mxu0 0.0
        %268 = vmatpush1.msra.mxu0 0.0
        %269 = vmatprep.subr.mxu0 0.0
        %270 = vmatpush1.msra.mxu0 0.0
        %271 = vmatprep.subr.mxu0 0.0
        %272 = vmatpush1.msra.mxu0 0.0
        %273 = vmatprep.subr.mxu0 0.0
        %274 = vmatpush1.msra.mxu0 0.0
        %275 = vmatprep.subr.mxu0 0.0
        %276 = vmatpush1.msra.mxu0 0.0
        %277 = vmatprep.subr.mxu0 0.0
        %278 = vmatpush1.msra.mxu0 0.0
        %279 = vmatprep.subr.mxu0 0.0
        %280 = vmatpush1.msra.mxu0 0.0
        %281 = vmatprep.subr.mxu0 0.0
        %282 = vmatpush1.msra.mxu0 0.0
        %283 = vmatprep.subr.mxu0 0.0
        %284 = vmatpush1.msra.mxu0 0.0
        %285 = vmatprep.subr.mxu0 0.0
        %286 = vmatpush1.msra.mxu0 0.0
        %287 = vmatprep.subr.mxu0 0.0
        %288 = vmatpush1.msra.mxu0 0.0
        %289 = vmatprep.subr.mxu0 0.0
        %290 = vmatpush1.msra.mxu0 0.0
        %291 = vmatprep.subr.mxu0 0.0
        %292 = vmatpush1.msra.mxu0 0.0
        %293 = vmatprep.subr.mxu0 0.0
        %294 = vmatpush1.msra.mxu0 0.0
        %295 = vmatprep.subr.mxu0 0.0
        %296 = vmatpush1.msra.mxu0 0.0
        %297 = vmatprep.subr.mxu0 0.0
        %298 = vmatpush1.msra.mxu0 0.0
        %299 = vmatprep.subr.mxu0 0.0
        %300 = vmatpush1.msra.mxu0 0.0
        %301 = vmatprep.subr.mxu0 0.0
        %302 = vmatpush1.msra.mxu0 0.0
        %303 = vmatprep.mubr.f32.mxu0 0.0
        %304 = vmatmul.mubr.f32.gmra.mrb[0].mxu0 %v234
        %v305 = vpop.f32.mrb[0].mxu0
        %v306 = vadd.f32 0.0, %v305
        %v307 = vpop.f32.mrb[0].mxu0
        %308 = vmatprep.mubr.f32.mxu0 0.0
        %309 = vmatmul.mubr.f32.gmra.mrb[0].mxu0 %v237
        %v310 = vpop.f32.mrb[0].mxu0
        %v311 = vadd.f32 0.0, %v310
        %v312 = vpop.f32.mrb[0].mxu0
        %313 = vdwg.mxu0
        %v314 = vadd.f32 %v199, %v306
        %v315 = vadd.f32 %v200, %v311
        %vm316 = vcmask 130048
        %317 = vst.msk [vmem:[#allocation2] sm:$0xff] %vm316, %v314
        %318 = vst.msk [vmem:[#allocation2 + $0x8] sm:$0xff] %vm316, %v315
        %s319 = scalar_lea.vmem [#allocation2], 16
        %v320 = vld [vmem:[%s319] sm:$0xff]
        %v321 = vld [vmem:[%s319 + $0x8] sm:$0xff]
        %326 = vrot.lane.b32.xlu0 %v177, 112
        %v327 = vpop.permute.xlu0 %326
        %328 = vrot.lane.b32.xlu0 %v178, 112
        %v329 = vpop.permute.xlu0 %328
        %330 = vrot.lane.b32.xlu0 %v179, 112
        %v331 = vpop.permute.xlu0 %330
        %332 = vrot.lane.b32.xlu0 %v180, 112
        %v333 = vpop.permute.xlu0 %332
        %338 = vxpose.xlu0.b32.start [1/16] %v327, 128
        %339 = vxpose.xlu0.b32.cont [2/16] %v329, 128
        %340 = vxpose.xlu0.b32.cont [3/16] %v331, 128
        %341 = vxpose.xlu0.b32.cont [4/16] %v333, 128
        %342 = vxpose.xlu0.b32.cont [5/16] 0.0, 128
        %343 = vxpose.xlu0.b32.cont [6/16] 0.0, 128
        %344 = vxpose.xlu0.b32.cont [7/16] 0.0, 128
        %345 = vxpose.xlu0.b32.cont [8/16] 0.0, 128
        %346 = vxpose.xlu0.b32.cont [9/16] 0.0, 128
        %347 = vxpose.xlu0.b32.cont [10/16] 0.0, 128
        %348 = vxpose.xlu0.b32.cont [11/16] 0.0, 128
        %349 = vxpose.xlu0.b32.cont [12/16] 0.0, 128
        %350 = vxpose.xlu0.b32.cont [13/16] 0.0, 128
        %351 = vxpose.xlu0.b32.cont [14/16] 0.0, 128
        %352 = vxpose.xlu0.b32.cont [15/16] 0.0, 128
        %353 = vxpose.xlu0.b32.end [16/16] 0.0, 128
        %v354 = vpop.trf.xlu0
        %v355 = vpop.trf.xlu0
        %v356 = vpop.trf.xlu0
        %v357 = vpop.trf.xlu0
        %v358 = vpop.trf.xlu0
        %v359 = vpop.trf.xlu0
        %v360 = vpop.trf.xlu0
        %v361 = vpop.trf.xlu0
        %v362 = vpop.trf.xlu0
        %v363 = vpop.trf.xlu0
        %v364 = vpop.trf.xlu0
        %v365 = vpop.trf.xlu0
        %v366 = vpop.trf.xlu0
        %v367 = vpop.trf.xlu0
        %v368 = vpop.trf.xlu0
        %v369 = vpop.trf.xlu0
        %v371 = vsel %vm182, %v354, 0
        %v374 = vsel %vm182, %v355, 0
        %376 = vmatprep.subr.mxu0 0.0
        %377 = vmatpush1.msra.mxu0 %v327
        %378 = vmatprep.subr.mxu0 0.0
        %379 = vmatpush1.msra.mxu0 %v329
        %380 = vmatprep.subr.mxu0 0.0
        %381 = vmatpush1.msra.mxu0 %v331
        %382 = vmatprep.subr.mxu0 0.0
        %383 = vmatpush1.msra.mxu0 %v333
        %384 = vmatprep.subr.mxu0 0.0
        %385 = vmatpush1.msra.mxu0 0.0
        %386 = vmatprep.subr.mxu0 0.0
        %387 = vmatpush1.msra.mxu0 0.0
        %388 = vmatprep.subr.mxu0 0.0
        %389 = vmatpush1.msra.mxu0 0.0
        %390 = vmatprep.subr.mxu0 0.0
        %391 = vmatpush1.msra.mxu0 0.0
        %392 = vmatprep.subr.mxu0 0.0
        %393 = vmatpush1.msra.mxu0 0.0
        %394 = vmatprep.subr.mxu0 0.0
        %395 = vmatpush1.msra.mxu0 0.0
        %396 = vmatprep.subr.mxu0 0.0
        %397 = vmatpush1.msra.mxu0 0.0
        %398 = vmatprep.subr.mxu0 0.0
        %399 = vmatpush1.msra.mxu0 0.0
        %400 = vmatprep.subr.mxu0 0.0
        %401 = vmatpush1.msra.mxu0 0.0
        %402 = vmatprep.subr.mxu0 0.0
        %403 = vmatpush1.msra.mxu0 0.0
        %404 = vmatprep.subr.mxu0 0.0
        %405 = vmatpush1.msra.mxu0 0.0
        %406 = vmatprep.subr.mxu0 0.0
        %407 = vmatpush1.msra.mxu0 0.0
        %408 = vmatprep.subr.mxu0 0.0
        %409 = vmatpush1.msra.mxu0 0.0
        %410 = vmatprep.subr.mxu0 0.0
        %411 = vmatpush1.msra.mxu0 0.0
        %412 = vmatprep.subr.mxu0 0.0
        %413 = vmatpush1.msra.mxu0 0.0
        %414 = vmatprep.subr.mxu0 0.0
        %415 = vmatpush1.msra.mxu0 0.0
        %416 = vmatprep.subr.mxu0 0.0
        %417 = vmatpush1.msra.mxu0 0.0
        %418 = vmatprep.subr.mxu0 0.0
        %419 = vmatpush1.msra.mxu0 0.0
        %420 = vmatprep.subr.mxu0 0.0
        %421 = vmatpush1.msra.mxu0 0.0
        %422 = vmatprep.subr.mxu0 0.0
        %423 = vmatpush1.msra.mxu0 0.0
        %424 = vmatprep.subr.mxu0 0.0
        %425 = vmatpush1.msra.mxu0 0.0
        %426 = vmatprep.subr.mxu0 0.0
        %427 = vmatpush1.msra.mxu0 0.0
        %428 = vmatprep.subr.mxu0 0.0
        %429 = vmatpush1.msra.mxu0 0.0
        %430 = vmatprep.subr.mxu0 0.0
        %431 = vmatpush1.msra.mxu0 0.0
        %432 = vmatprep.subr.mxu0 0.0
        %433 = vmatpush1.msra.mxu0 0.0
        %434 = vmatprep.subr.mxu0 0.0
        %435 = vmatpush1.msra.mxu0 0.0
        %436 = vmatprep.subr.mxu0 0.0
        %437 = vmatpush1.msra.mxu0 0.0
        %438 = vmatprep.subr.mxu0 0.0
        %439 = vmatpush1.msra.mxu0 0.0
        %440 = vmatprep.mubr.f32.mxu0 0.0
        %441 = vmatmul.mubr.f32.gmra.mrb[0].mxu0 %v371
        %v442 = vpop.f32.mrb[0].mxu0
        %v443 = vadd.f32 0.0, %v442
        %v444 = vpop.f32.mrb[0].mxu0
        %445 = vmatprep.mubr.f32.mxu0 0.0
        %446 = vmatmul.mubr.f32.gmra.mrb[0].mxu0 %v374
        %v447 = vpop.f32.mrb[0].mxu0
        %v448 = vadd.f32 0.0, %v447
        %v449 = vpop.f32.mrb[0].mxu0
        %450 = vdwg.mxu0
        %v451 = vadd.f32 %v320, %v443
        %v452 = vadd.f32 %v321, %v448
        %453 = vst.msk [vmem:[%s319] sm:$0xff] %vm316, %v451
        %454 = vst.msk [vmem:[%s319 + $0x8] sm:$0xff] %vm316, %v452
        %p455 = scmp.eq.s32.totalorder %s21, 1
        // Predicated region
        $region29: #{tpu_custom_call.1} parent=23 // pred_check
          %p456 = pneg %p455
        $region30: #{tpu_custom_call.1} parent=23 // pred_check_branch
          %458 = sbr.rel (%p456) target = $region32
        $region31: #{tpu_custom_call.1} parent=23 // pred_region
          %v459 = vlaneseq
          %v460 = vshrl.u32 %v459, 7
          %v461 = vadd.s32 %v460, 8
          %v462 = vlaneseq
          %v463 = vand.u32 %v462, 127
          %vm464 = vcmp.eq.s32.totalorder %v460, %v463
          %vm465 = vcmp.eq.s32.totalorder %v461, %v463
          %v466 = vsel %vm464, 1, 0
          %v467 = vsel %vm465, 1, 0
          %v468 = vcvt.s32.f32 %v466
          %v469 = vcvt.s32.f32 %v467
          %v470 = vld [vmem:[#allocation3] sm:$0x1]
          %v471 = vmul.f32 %v470, 0.015625
          %472 = vxpose.xlu0.b32.start [1/16] %v471, 128
          %473 = vxpose.xlu0.b32.cont [2/16] 0.0, 128
          %474 = vxpose.xlu0.b32.cont [3/16] 0.0, 128
          %475 = vxpose.xlu0.b32.cont [4/16] 0.0, 128
          %476 = vxpose.xlu0.b32.cont [5/16] 0.0, 128
          %477 = vxpose.xlu0.b32.cont [6/16] 0.0, 128
          %478 = vxpose.xlu0.b32.cont [7/16] 0.0, 128
          %479 = vxpose.xlu0.b32.cont [8/16] 0.0, 128
          %480 = vxpose.xlu0.b32.cont [9/16] 0.0, 128
          %481 = vxpose.xlu0.b32.cont [10/16] 0.0, 128
          %482 = vxpose.xlu0.b32.cont [11/16] 0.0, 128
          %483 = vxpose.xlu0.b32.cont [12/16] 0.0, 128
          %484 = vxpose.xlu0.b32.cont [13/16] 0.0, 128
          %485 = vxpose.xlu0.b32.cont [14/16] 0.0, 128
          %486 = vxpose.xlu0.b32.cont [15/16] 0.0, 128
          %487 = vxpose.xlu0.b32.end [16/16] 0.0, 128
          %v488 = vpop.trf.xlu0
          %v489 = vpop.trf.xlu0
          %v490 = vpop.trf.xlu0
          %v491 = vpop.trf.xlu0
          %v492 = vpop.trf.xlu0
          %v493 = vpop.trf.xlu0
          %v494 = vpop.trf.xlu0
          %v495 = vpop.trf.xlu0
          %v496 = vpop.trf.xlu0
          %v497 = vpop.trf.xlu0
          %v498 = vpop.trf.xlu0
          %v499 = vpop.trf.xlu0
          %v500 = vpop.trf.xlu0
          %v501 = vpop.trf.xlu0
          %v502 = vpop.trf.xlu0
          %v503 = vpop.trf.xlu0
          %vm504 = vcmask 7168
          %v506 = vsel %vm504, %v488, 0
          %v509 = vsel %vm504, %v489, 0
          %vm511 = vcmask 1040384
          %v513 = vsel %vm511, %v471, 0
          %515 = vmatprep.subr.mxu0 0.0
          %516 = vmatpush1.msra.mxu0 %v513
          %517 = vmatprep.subr.mxu0 0.0
          %518 = vmatpush1.msra.mxu0 0.0
          %519 = vmatprep.subr.mxu0 0.0
          %520 = vmatpush1.msra.mxu0 0.0
          %521 = vmatprep.subr.mxu0 0.0
          %522 = vmatpush1.msra.mxu0 0.0
          %523 = vmatprep.subr.mxu0 0.0
          %524 = vmatpush1.msra.mxu0 0.0
          %525 = vmatprep.subr.mxu0 0.0
          %526 = vmatpush1.msra.mxu0 0.0
          %527 = vmatprep.subr.mxu0 0.0
          %528 = vmatpush1.msra.mxu0 0.0
          %529 = vmatprep.subr.mxu0 0.0
          %530 = vmatpush1.msra.mxu0 0.0
          %531 = vmatprep.subr.mxu0 0.0
          %532 = vmatpush1.msra.mxu0 0.0
          %533 = vmatprep.subr.mxu0 0.0
          %534 = vmatpush1.msra.mxu0 0.0
          %535 = vmatprep.subr.mxu0 0.0
          %536 = vmatpush1.msra.mxu0 0.0
          %537 = vmatprep.subr.mxu0 0.0
          %538 = vmatpush1.msra.mxu0 0.0
          %539 = vmatprep.subr.mxu0 0.0
          %540 = vmatpush1.msra.mxu0 0.0
          %541 = vmatprep.subr.mxu0 0.0
          %542 = vmatpush1.msra.mxu0 0.0
          %543 = vmatprep.subr.mxu0 0.0
          %544 = vmatpush1.msra.mxu0 0.0
          %545 = vmatprep.subr.mxu0 0.0
          %546 = vmatpush1.msra.mxu0 0.0
          %547 = vmatprep.subr.mxu0 0.0
          %548 = vmatpush1.msra.mxu0 0.0
          %549 = vmatprep.subr.mxu0 0.0
          %550 = vmatpush1.msra.mxu0 0.0
          %551 = vmatprep.subr.mxu0 0.0
          %552 = vmatpush1.msra.mxu0 0.0
          %553 = vmatprep.subr.mxu0 0.0
          %554 = vmatpush1.msra.mxu0 0.0
          %555 = vmatprep.subr.mxu0 0.0
          %556 = vmatpush1.msra.mxu0 0.0
          %557 = vmatprep.subr.mxu0 0.0
          %558 = vmatpush1.msra.mxu0 0.0
          %559 = vmatprep.subr.mxu0 0.0
          %560 = vmatpush1.msra.mxu0 0.0
          %561 = vmatprep.subr.mxu0 0.0
          %562 = vmatpush1.msra.mxu0 0.0
          %563 = vmatprep.subr.mxu0 0.0
          %564 = vmatpush1.msra.mxu0 0.0
          %565 = vmatprep.subr.mxu0 0.0
          %566 = vmatpush1.msra.mxu0 0.0
          %567 = vmatprep.subr.mxu0 0.0
          %568 = vmatpush1.msra.mxu0 0.0
          %569 = vmatprep.subr.mxu0 0.0
          %570 = vmatpush1.msra.mxu0 0.0
          %571 = vmatprep.subr.mxu0 0.0
          %572 = vmatpush1.msra.mxu0 0.0
          %573 = vmatprep.subr.mxu0 0.0
          %574 = vmatpush1.msra.mxu0 0.0
          %575 = vmatprep.subr.mxu0 0.0
          %576 = vmatpush1.msra.mxu0 0.0
          %577 = vmatprep.subr.mxu0 0.0
          %578 = vmatpush1.msra.mxu0 0.0
          %579 = vmatprep.mubr.f32.mxu0 0.0
          %580 = vmatmul.mubr.f32.gmra.mrb[0].mxu0 %v506
          %v581 = vpop.f32.mrb[0].mxu0
          %v582 = vadd.f32 0.0, %v581
          %v583 = vpop.f32.mrb[0].mxu0
          %584 = vmatprep.mubr.f32.mxu0 0.0
          %585 = vmatmul.mubr.f32.gmra.mrb[0].mxu0 %v509
          %v586 = vpop.f32.mrb[0].mxu0
          %v587 = vadd.f32 0.0, %v586
          %v588 = vpop.f32.mrb[0].mxu0
          %589 = vdwg.mxu0
          %v590 = vld [vmem:[#allocation2] sm:$0xff]
          %v591 = vld [vmem:[#allocation2 + $0x8] sm:$0xff]
          %v592 = vmul.f32 %v582, 64.0
          %v593 = vmul.f32 %v587, 64.0
          %v594 = vsub.f32 %v590, %v592
          %v595 = vsub.f32 %v591, %v593
          %v596 = vmul.f32 %v594, 0.015873017
          %v597 = vmul.f32 %v595, 0.015873017
          %v598 = vmul.f32 %v468, 0.0
          %v599 = vmul.f32 %v469, 0.0
          %v600 = vadd.f32 %v596, %v598
          %v601 = vadd.f32 %v597, %v599
          %v602 = vmul.f32 %v600, %v468
          %v603 = vmul.f32 %v601, %v469
          %v604 = vsel %vm316, %v602, 0.0
          %v605 = vsel %vm316, %v603, 0.0
          %v606 = vadd.f32 %v604, %v605
          %607 = vadd.xlane.f32.xlu0 %v606
          %v608 = vpop.xlane.xlu0 %607
          %v609 = vrot.slane %v608, 4
          %v610 = vadd.f32 %v608, %v609
          %v611 = vrot.slane %v610, 2
          %v612 = vadd.f32 %v610, %v611
          %v613 = vrot.slane %v612, 1
          %v614 = vadd.f32 %v612, %v613
          %s615 = vtos %v614
          %v616 = vstv %s615
          %v617 = vrcp.pop %v616
          %s618 = vtos %v617
          %v619 = vstv %s618
          %v620 = vmul.f32 %v600, %v619
          %v621 = vmul.f32 %v601, %v619
          %v622 = vmul.f32 %v468, 3.0
          %v623 = vmul.f32 %v469, 3.0
          %v625 = vsel %vm316, %v468, 0
          %v628 = vsel %vm316, %v469, 0
          %630 = vmatprep.subr.mxu0 0.0
          %631 = vmatpush1.msra.mxu0 %v620
          %632 = vmatprep.subr.mxu0 0.0
          %633 = vmatpush1.msra.mxu0 %v621
          %634 = vmatprep.subr.mxu0 0.0
          %635 = vmatpush1.msra.mxu0 0.0
          %636 = vmatprep.subr.mxu0 0.0
          %637 = vmatpush1.msra.mxu0 0.0
          %638 = vmatprep.subr.mxu0 0.0
          %639 = vmatpush1.msra.mxu0 0.0
          %640 = vmatprep.subr.mxu0 0.0
          %641 = vmatpush1.msra.mxu0 0.0
          %642 = vmatprep.subr.mxu0 0.0
          %643 = vmatpush1.msra.mxu0 0.0
          %644 = vmatprep.subr.mxu0 0.0
          %645 = vmatpush1.msra.mxu0 0.0
          %646 = vmatprep.subr.mxu0 0.0
          %647 = vmatpush1.msra.mxu0 0.0
          %648 = vmatprep.subr.mxu0 0.0
          %649 = vmatpush1.msra.mxu0 0.0
          %650 = vmatprep.subr.mxu0 0.0
          %651 = vmatpush1.msra.mxu0 0.0
          %652 = vmatprep.subr.mxu0 0.0
          %653 = vmatpush1.msra.mxu0 0.0
          %654 = vmatprep.subr.mxu0 0.0
          %655 = vmatpush1.msra.mxu0 0.0
          %656 = vmatprep.subr.mxu0 0.0
          %657 = vmatpush1.msra.mxu0 0.0
          %658 = vmatprep.subr.mxu0 0.0
          %659 = vmatpush1.msra.mxu0 0.0
          %660 = vmatprep.subr.mxu0 0.0
          %661 = vmatpush1.msra.mxu0 0.0
          %662 = vmatprep.subr.mxu0 0.0
          %663 = vmatpush1.msra.mxu0 0.0
          %664 = vmatprep.subr.mxu0 0.0
          %665 = vmatpush1.msra.mxu0 0.0
          %666 = vmatprep.subr.mxu0 0.0
          %667 = vmatpush1.msra.mxu0 0.0
          %668 = vmatprep.subr.mxu0 0.0
          %669 = vmatpush1.msra.mxu0 0.0
          %670 = vmatprep.subr.mxu0 0.0
          %671 = vmatpush1.msra.mxu0 0.0
          %672 = vmatprep.subr.mxu0 0.0
          %673 = vmatpush1.msra.mxu0 0.0
          %674 = vmatprep.subr.mxu0 0.0
          %675 = vmatpush1.msra.mxu0 0.0
          %676 = vmatprep.subr.mxu0 0.0
          %677 = vmatpush1.msra.mxu0 0.0
          %678 = vmatprep.subr.mxu0 0.0
          %679 = vmatpush1.msra.mxu0 0.0
          %680 = vmatprep.subr.mxu0 0.0
          %681 = vmatpush1.msra.mxu0 0.0
          %682 = vmatprep.subr.mxu0 0.0
          %683 = vmatpush1.msra.mxu0 0.0
          %684 = vmatprep.subr.mxu0 0.0
          %685 = vmatpush1.msra.mxu0 0.0
          %686 = vmatprep.subr.mxu0 0.0
          %687 = vmatpush1.msra.mxu0 0.0
          %688 = vmatprep.subr.mxu0 0.0
          %689 = vmatpush1.msra.mxu0 0.0
          %690 = vmatprep.subr.mxu0 0.0
          %691 = vmatpush1.msra.mxu0 0.0
          %692 = vmatprep.subr.mxu0 0.0
          %693 = vmatpush1.msra.mxu0 0.0
          %694 = vmatprep.mubr.f32.mxu0 0.0
          %695 = vmatmul.mubr.f32.gmra.mrb[0].mxu0 %v625
          %v696 = vpop.f32.mrb[0].mxu0
          %v697 = vadd.f32 0.0, %v696
          %v698 = vpop.f32.mrb[0].mxu0
          %699 = vmatprep.mubr.f32.mxu0 0.0
          %700 = vmatmul.mubr.f32.gmra.mrb[0].mxu0 %v628
          %v701 = vpop.f32.mrb[0].mxu0
          %v702 = vadd.f32 0.0, %v701
          %v703 = vpop.f32.mrb[0].mxu0
          %704 = vdwg.mxu0
          %v705 = vsub.f32 %v622, %v697
          %v706 = vsub.f32 %v623, %v702
          %v707 = vmul.f32 %v705, 0.5
          %v708 = vmul.f32 %v706, 0.5
          %v710 = vsel %vm316, %v620, 0
          %v713 = vsel %vm316, %v621, 0
          %715 = vmatprep.subr.mxu0 0.0
          %716 = vmatpush1.msra.mxu0 %v707
          %717 = vmatprep.subr.mxu0 0.0
          %718 = vmatpush1.msra.mxu0 %v708
          %719 = vmatprep.subr.mxu0 0.0
          %720 = vmatpush1.msra.mxu0 0.0
          %721 = vmatprep.subr.mxu0 0.0
          %722 = vmatpush1.msra.mxu0 0.0
          %723 = vmatprep.subr.mxu0 0.0
          %724 = vmatpush1.msra.mxu0 0.0
          %725 = vmatprep.subr.mxu0 0.0
          %726 = vmatpush1.msra.mxu0 0.0
          %727 = vmatprep.subr.mxu0 0.0
          %728 = vmatpush1.msra.mxu0 0.0
          %729 = vmatprep.subr.mxu0 0.0
          %730 = vmatpush1.msra.mxu0 0.0
          %731 = vmatprep.subr.mxu0 0.0
          %732 = vmatpush1.msra.mxu0 0.0
          %733 = vmatprep.subr.mxu0 0.0
          %734 = vmatpush1.msra.mxu0 0.0
          %735 = vmatprep.subr.mxu0 0.0
          %736 = vmatpush1.msra.mxu0 0.0
          %737 = vmatprep.subr.mxu0 0.0
          %738 = vmatpush1.msra.mxu0 0.0
          %739 = vmatprep.subr.mxu0 0.0
          %740 = vmatpush1.msra.mxu0 0.0
          %741 = vmatprep.subr.mxu0 0.0
          %742 = vmatpush1.msra.mxu0 0.0
          %743 = vmatprep.subr.mxu0 0.0
          %744 = vmatpush1.msra.mxu0 0.0
          %745 = vmatprep.subr.mxu0 0.0
          %746 = vmatpush1.msra.mxu0 0.0
          %747 = vmatprep.subr.mxu0 0.0
          %748 = vmatpush1.msra.mxu0 0.0
          %749 = vmatprep.subr.mxu0 0.0
          %750 = vmatpush1.msra.mxu0 0.0
          %751 = vmatprep.subr.mxu0 0.0
          %752 = vmatpush1.msra.mxu0 0.0
          %753 = vmatprep.subr.mxu0 0.0
          %754 = vmatpush1.msra.mxu0 0.0
          %755 = vmatprep.subr.mxu0 0.0
          %756 = vmatpush1.msra.mxu0 0.0
          %757 = vmatprep.subr.mxu0 0.0
          %758 = vmatpush1.msra.mxu0 0.0
          %759 = vmatprep.subr.mxu0 0.0
          %760 = vmatpush1.msra.mxu0 0.0
          %761 = vmatprep.subr.mxu0 0.0
          %762 = vmatpush1.msra.mxu0 0.0
          %763 = vmatprep.subr.mxu0 0.0
          %764 = vmatpush1.msra.mxu0 0.0
          %765 = vmatprep.subr.mxu0 0.0
          %766 = vmatpush1.msra.mxu0 0.0
          %767 = vmatprep.subr.mxu0 0.0
          %768 = vmatpush1.msra.mxu0 0.0
          %769 = vmatprep.subr.mxu0 0.0
          %770 = vmatpush1.msra.mxu0 0.0
          %771 = vmatprep.subr.mxu0 0.0
          %772 = vmatpush1.msra.mxu0 0.0
          %773 = vmatprep.subr.mxu0 0.0
          %774 = vmatpush1.msra.mxu0 0.0
          %775 = vmatprep.subr.mxu0 0.0
          %776 = vmatpush1.msra.mxu0 0.0
          %777 = vmatprep.subr.mxu0 0.0
          %778 = vmatpush1.msra.mxu0 0.0
          %779 = vmatprep.mubr.f32.mxu0 0.0
          %780 = vmatmul.mubr.f32.gmra.mrb[0].mxu0 %v710
          %v781 = vpop.f32.mrb[0].mxu0
          %v782 = vadd.f32 0.0, %v781
          %v783 = vpop.f32.mrb[0].mxu0
          %784 = vmatprep.mubr.f32.mxu0 0.0
          %785 = vmatmul.mubr.f32.gmra.mrb[0].mxu0 %v713
          %v786 = vpop.f32.mrb[0].mxu0
          %v787 = vadd.f32 0.0, %v786
          %v788 = vpop.f32.mrb[0].mxu0
          %789 = vdwg.mxu0
          %v791 = vsel %vm316, %v707, 0
          %v794 = vsel %vm316, %v708, 0
          %796 = vmatprep.subr.mxu0 0.0
          %797 = vmatpush1.msra.mxu0 %v468
          %798 = vmatprep.subr.mxu0 0.0
          %799 = vmatpush1.msra.mxu0 %v469
          %800 = vmatprep.subr.mxu0 0.0
          %801 = vmatpush1.msra.mxu0 0.0
          %802 = vmatprep.subr.mxu0 0.0
          %803 = vmatpush1.msra.mxu0 0.0
          %804 = vmatprep.subr.mxu0 0.0
          %805 = vmatpush1.msra.mxu0 0.0
          %806 = vmatprep.subr.mxu0 0.0
          %807 = vmatpush1.msra.mxu0 0.0
          %808 = vmatprep.subr.mxu0 0.0
          %809 = vmatpush1.msra.mxu0 0.0
          %810 = vmatprep.subr.mxu0 0.0
          %811 = vmatpush1.msra.mxu0 0.0
          %812 = vmatprep.subr.mxu0 0.0
          %813 = vmatpush1.msra.mxu0 0.0
          %814 = vmatprep.subr.mxu0 0.0
          %815 = vmatpush1.msra.mxu0 0.0
          %816 = vmatprep.subr.mxu0 0.0
          %817 = vmatpush1.msra.mxu0 0.0
          %818 = vmatprep.subr.mxu0 0.0
          %819 = vmatpush1.msra.mxu0 0.0
          %820 = vmatprep.subr.mxu0 0.0
          %821 = vmatpush1.msra.mxu0 0.0
          %822 = vmatprep.subr.mxu0 0.0
          %823 = vmatpush1.msra.mxu0 0.0
          %824 = vmatprep.subr.mxu0 0.0
          %825 = vmatpush1.msra.mxu0 0.0
          %826 = vmatprep.subr.mxu0 0.0
          %827 = vmatpush1.msra.mxu0 0.0
          %828 = vmatprep.subr.mxu0 0.0
          %829 = vmatpush1.msra.mxu0 0.0
          %830 = vmatprep.subr.mxu0 0.0
          %831 = vmatpush1.msra.mxu0 0.0
          %832 = vmatprep.subr.mxu0 0.0
          %833 = vmatpush1.msra.mxu0 0.0
          %834 = vmatprep.subr.mxu0 0.0
          %835 = vmatpush1.msra.mxu0 0.0
          %836 = vmatprep.subr.mxu0 0.0
          %837 = vmatpush1.msra.mxu0 0.0
          %838 = vmatprep.subr.mxu0 0.0
          %839 = vmatpush1.msra.mxu0 0.0
          %840 = vmatprep.subr.mxu0 0.0
          %841 = vmatpush1.msra.mxu0 0.0
          %842 = vmatprep.subr.mxu0 0.0
          %843 = vmatpush1.msra.mxu0 0.0
          %844 = vmatprep.subr.mxu0 0.0
          %845 = vmatpush1.msra.mxu0 0.0
          %846 = vmatprep.subr.mxu0 0.0
          %847 = vmatpush1.msra.mxu0 0.0
          %848 = vmatprep.subr.mxu0 0.0
          %849 = vmatpush1.msra.mxu0 0.0
          %850 = vmatprep.subr.mxu0 0.0
          %851 = vmatpush1.msra.mxu0 0.0
          %852 = vmatprep.subr.mxu0 0.0
          %853 = vmatpush1.msra.mxu0 0.0
          %854 = vmatprep.subr.mxu0 0.0
          %855 = vmatpush1.msra.mxu0 0.0
          %856 = vmatprep.subr.mxu0 0.0
          %857 = vmatpush1.msra.mxu0 0.0
          %858 = vmatprep.subr.mxu0 0.0
          %859 = vmatpush1.msra.mxu0 0.0
          %860 = vmatprep.mubr.f32.mxu0 0.0
          %861 = vmatmul.mubr.f32.gmra.mrb[0].mxu0 %v791
          %v862 = vpop.f32.mrb[0].mxu0
          %v863 = vadd.f32 0.0, %v862
          %v864 = vpop.f32.mrb[0].mxu0
          %865 = vmatprep.mubr.f32.mxu0 0.0
          %866 = vmatmul.mubr.f32.gmra.mrb[0].mxu0 %v794
          %v867 = vpop.f32.mrb[0].mxu0
          %v868 = vadd.f32 0.0, %v867
          %v869 = vpop.f32.mrb[0].mxu0
          %870 = vdwg.mxu0
          %v872 = vsel %vm316, %v863, 0
          %v875 = vsel %vm316, %v868, 0
          %877 = vmatprep.subr.mxu0 0.0
          %878 = vmatpush1.msra.mxu0 %v782
          %879 = vmatprep.subr.mxu0 0.0
          %880 = vmatpush1.msra.mxu0 %v787
          %881 = vmatprep.subr.mxu0 0.0
          %882 = vmatpush1.msra.mxu0 0.0
          %883 = vmatprep.subr.mxu0 0.0
          %884 = vmatpush1.msra.mxu0 0.0
          %885 = vmatprep.subr.mxu0 0.0
          %886 = vmatpush1.msra.mxu0 0.0
          %887 = vmatprep.subr.mxu0 0.0
          %888 = vmatpush1.msra.mxu0 0.0
          %889 = vmatprep.subr.mxu0 0.0
          %890 = vmatpush1.msra.mxu0 0.0
          %891 = vmatprep.subr.mxu0 0.0
          %892 = vmatpush1.msra.mxu0 0.0
          %893 = vmatprep.subr.mxu0 0.0
          %894 = vmatpush1.msra.mxu0 0.0
          %895 = vmatprep.subr.mxu0 0.0
          %896 = vmatpush1.msra.mxu0 0.0
          %897 = vmatprep.subr.mxu0 0.0
          %898 = vmatpush1.msra.mxu0 0.0
          %899 = vmatprep.subr.mxu0 0.0
          %900 = vmatpush1.msra.mxu0 0.0
          %901 = vmatprep.subr.mxu0 0.0
          %902 = vmatpush1.msra.mxu0 0.0
          %903 = vmatprep.subr.mxu0 0.0
          %904 = vmatpush1.msra.mxu0 0.0
          %905 = vmatprep.subr.mxu0 0.0
          %906 = vmatpush1.msra.mxu0 0.0
          %907 = vmatprep.subr.mxu0 0.0
          %908 = vmatpush1.msra.mxu0 0.0
          %909 = vmatprep.subr.mxu0 0.0
          %910 = vmatpush1.msra.mxu0 0.0
          %911 = vmatprep.subr.mxu0 0.0
          %912 = vmatpush1.msra.mxu0 0.0
          %913 = vmatprep.subr.mxu0 0.0
          %914 = vmatpush1.msra.mxu0 0.0
          %915 = vmatprep.subr.mxu0 0.0
          %916 = vmatpush1.msra.mxu0 0.0
          %917 = vmatprep.subr.mxu0 0.0
          %918 = vmatpush1.msra.mxu0 0.0
          %919 = vmatprep.subr.mxu0 0.0
          %920 = vmatpush1.msra.mxu0 0.0
          %921 = vmatprep.subr.mxu0 0.0
          %922 = vmatpush1.msra.mxu0 0.0
          %923 = vmatprep.subr.mxu0 0.0
          %924 = vmatpush1.msra.mxu0 0.0
          %925 = vmatprep.subr.mxu0 0.0
          %926 = vmatpush1.msra.mxu0 0.0
          %927 = vmatprep.subr.mxu0 0.0
          %928 = vmatpush1.msra.mxu0 0.0
          %929 = vmatprep.subr.mxu0 0.0
          %930 = vmatpush1.msra.mxu0 0.0
          %931 = vmatprep.subr.mxu0 0.0
          %932 = vmatpush1.msra.mxu0 0.0
          %933 = vmatprep.subr.mxu0 0.0
          %934 = vmatpush1.msra.mxu0 0.0
          %935 = vmatprep.subr.mxu0 0.0
          %936 = vmatpush1.msra.mxu0 0.0
          %937 = vmatprep.subr.mxu0 0.0
          %938 = vmatpush1.msra.mxu0 0.0
          %939 = vmatprep.subr.mxu0 0.0
          %940 = vmatpush1.msra.mxu0 0.0
          %941 = vmatprep.mubr.f32.mxu0 0.0
          %942 = vmatmul.mubr.f32.gmra.mrb[0].mxu0 %v872
          %v943 = vpop.f32.mrb[0].mxu0
          %v944 = vadd.f32 0.0, %v943
          %v945 = vpop.f32.mrb[0].mxu0
          %946 = vmatprep.mubr.f32.mxu0 0.0
          %947 = vmatmul.mubr.f32.gmra.mrb[0].mxu0 %v875
          %v948 = vpop.f32.mrb[0].mxu0
          %v949 = vadd.f32 0.0, %v948
          %v950 = vpop.f32.mrb[0].mxu0
          %951 = vdwg.mxu0
          %v952 = vsub.f32 %v622, %v944
          %v953 = vsub.f32 %v623, %v949
          %v954 = vmul.f32 %v952, 0.5
          %v955 = vmul.f32 %v953, 0.5
          %v957 = vsel %vm316, %v782, 0
          %v960 = vsel %vm316, %v787, 0
          %962 = vmatprep.subr.mxu0 0.0
          %963 = vmatpush1.msra.mxu0 %v954
          %964 = vmatprep.subr.mxu0 0.0
          %965 = vmatpush1.msra.mxu0 %v955
          %966 = vmatprep.subr.mxu0 0.0
          %967 = vmatpush1.msra.mxu0 0.0
          %968 = vmatprep.subr.mxu0 0.0
          %969 = vmatpush1.msra.mxu0 0.0
          %970 = vmatprep.subr.mxu0 0.0
          %971 = vmatpush1.msra.mxu0 0.0
          %972 = vmatprep.subr.mxu0 0.0
          %973 = vmatpush1.msra.mxu0 0.0
          %974 = vmatprep.subr.mxu0 0.0
          %975 = vmatpush1.msra.mxu0 0.0
          %976 = vmatprep.subr.mxu0 0.0
          %977 = vmatpush1.msra.mxu0 0.0
          %978 = vmatprep.subr.mxu0 0.0
          %979 = vmatpush1.msra.mxu0 0.0
          %980 = vmatprep.subr.mxu0 0.0
          %981 = vmatpush1.msra.mxu0 0.0
          %982 = vmatprep.subr.mxu0 0.0
          %983 = vmatpush1.msra.mxu0 0.0
          %984 = vmatprep.subr.mxu0 0.0
          %985 = vmatpush1.msra.mxu0 0.0
          %986 = vmatprep.subr.mxu0 0.0
          %987 = vmatpush1.msra.mxu0 0.0
          %988 = vmatprep.subr.mxu0 0.0
          %989 = vmatpush1.msra.mxu0 0.0
          %990 = vmatprep.subr.mxu0 0.0
          %991 = vmatpush1.msra.mxu0 0.0
          %992 = vmatprep.subr.mxu0 0.0
          %993 = vmatpush1.msra.mxu0 0.0
          %994 = vmatprep.subr.mxu0 0.0
          %995 = vmatpush1.msra.mxu0 0.0
          %996 = vmatprep.subr.mxu0 0.0
          %997 = vmatpush1.msra.mxu0 0.0
          %998 = vmatprep.subr.mxu0 0.0
          %999 = vmatpush1.msra.mxu0 0.0
          %1000 = vmatprep.subr.mxu0 0.0
          %1001 = vmatpush1.msra.mxu0 0.0
          %1002 = vmatprep.subr.mxu0 0.0
          %1003 = vmatpush1.msra.mxu0 0.0
          %1004 = vmatprep.subr.mxu0 0.0
          %1005 = vmatpush1.msra.mxu0 0.0
          %1006 = vmatprep.subr.mxu0 0.0
          %1007 = vmatpush1.msra.mxu0 0.0
          %1008 = vmatprep.subr.mxu0 0.0
          %1009 = vmatpush1.msra.mxu0 0.0
          %1010 = vmatprep.subr.mxu0 0.0
          %1011 = vmatpush1.msra.mxu0 0.0
          %1012 = vmatprep.subr.mxu0 0.0
          %1013 = vmatpush1.msra.mxu0 0.0
          %1014 = vmatprep.subr.mxu0 0.0
          %1015 = vmatpush1.msra.mxu0 0.0
          %1016 = vmatprep.subr.mxu0 0.0
          %1017 = vmatpush1.msra.mxu0 0.0
          %1018 = vmatprep.subr.mxu0 0.0
          %1019 = vmatpush1.msra.mxu0 0.0
          %1020 = vmatprep.subr.mxu0 0.0
          %1021 = vmatpush1.msra.mxu0 0.0
          %1022 = vmatprep.subr.mxu0 0.0
          %1023 = vmatpush1.msra.mxu0 0.0
          %1024 = vmatprep.subr.mxu0 0.0
          %1025 = vmatpush1.msra.mxu0 0.0
          %1026 = vmatprep.mubr.f32.mxu0 0.0
          %1027 = vmatmul.mubr.f32.gmra.mrb[0].mxu0 %v957
          %v1028 = vpop.f32.mrb[0].mxu0
          %v1029 = vadd.f32 0.0, %v1028
          %v1030 = vpop.f32.mrb[0].mxu0
          %1031 = vmatprep.mubr.f32.mxu0 0.0
          %1032 = vmatmul.mubr.f32.gmra.mrb[0].mxu0 %v960
          %v1033 = vpop.f32.mrb[0].mxu0
          %v1034 = vadd.f32 0.0, %v1033
          %v1035 = vpop.f32.mrb[0].mxu0
          %1036 = vdwg.mxu0
          %v1038 = vsel %vm316, %v954, 0
          %v1041 = vsel %vm316, %v955, 0
          %1043 = vmatprep.subr.mxu0 0.0
          %1044 = vmatpush1.msra.mxu0 %v863
          %1045 = vmatprep.subr.mxu0 0.0
          %1046 = vmatpush1.msra.mxu0 %v868
          %1047 = vmatprep.subr.mxu0 0.0
          %1048 = vmatpush1.msra.mxu0 0.0
          %1049 = vmatprep.subr.mxu0 0.0
          %1050 = vmatpush1.msra.mxu0 0.0
          %1051 = vmatprep.subr.mxu0 0.0
          %1052 = vmatpush1.msra.mxu0 0.0
          %1053 = vmatprep.subr.mxu0 0.0
          %1054 = vmatpush1.msra.mxu0 0.0
          %1055 = vmatprep.subr.mxu0 0.0
          %1056 = vmatpush1.msra.mxu0 0.0
          %1057 = vmatprep.subr.mxu0 0.0
          %1058 = vmatpush1.msra.mxu0 0.0
          %1059 = vmatprep.subr.mxu0 0.0
          %1060 = vmatpush1.msra.mxu0 0.0
          %1061 = vmatprep.subr.mxu0 0.0
          %1062 = vmatpush1.msra.mxu0 0.0
          %1063 = vmatprep.subr.mxu0 0.0
          %1064 = vmatpush1.msra.mxu0 0.0
          %1065 = vmatprep.subr.mxu0 0.0
          %1066 = vmatpush1.msra.mxu0 0.0
          %1067 = vmatprep.subr.mxu0 0.0
          %1068 = vmatpush1.msra.mxu0 0.0
          %1069 = vmatprep.subr.mxu0 0.0
          %1070 = vmatpush1.msra.mxu0 0.0
          %1071 = vmatprep.subr.mxu0 0.0
          %1072 = vmatpush1.msra.mxu0 0.0
          %1073 = vmatprep.subr.mxu0 0.0
          %1074 = vmatpush1.msra.mxu0 0.0
          %1075 = vmatprep.subr.mxu0 0.0
          %1076 = vmatpush1.msra.mxu0 0.0
          %1077 = vmatprep.subr.mxu0 0.0
          %1078 = vmatpush1.msra.mxu0 0.0
          %1079 = vmatprep.subr.mxu0 0.0
          %1080 = vmatpush1.msra.mxu0 0.0
          %1081 = vmatprep.subr.mxu0 0.0
          %1082 = vmatpush1.msra.mxu0 0.0
          %1083 = vmatprep.subr.mxu0 0.0
          %1084 = vmatpush1.msra.mxu0 0.0
          %1085 = vmatprep.subr.mxu0 0.0
          %1086 = vmatpush1.msra.mxu0 0.0
          %1087 = vmatprep.subr.mxu0 0.0
          %1088 = vmatpush1.msra.mxu0 0.0
          %1089 = vmatprep.subr.mxu0 0.0
          %1090 = vmatpush1.msra.mxu0 0.0
          %1091 = vmatprep.subr.mxu0 0.0
          %1092 = vmatpush1.msra.mxu0 0.0
          %1093 = vmatprep.subr.mxu0 0.0
          %1094 = vmatpush1.msra.mxu0 0.0
          %1095 = vmatprep.subr.mxu0 0.0
          %1096 = vmatpush1.msra.mxu0 0.0
          %1097 = vmatprep.subr.mxu0 0.0
          %1098 = vmatpush1.msra.mxu0 0.0
          %1099 = vmatprep.subr.mxu0 0.0
          %1100 = vmatpush1.msra.mxu0 0.0
          %1101 = vmatprep.subr.mxu0 0.0
          %1102 = vmatpush1.msra.mxu0 0.0
          %1103 = vmatprep.subr.mxu0 0.0
          %1104 = vmatpush1.msra.mxu0 0.0
          %1105 = vmatprep.subr.mxu0 0.0
          %1106 = vmatpush1.msra.mxu0 0.0
          %1107 = vmatprep.mubr.f32.mxu0 0.0
          %1108 = vmatmul.mubr.f32.gmra.mrb[0].mxu0 %v1038
          %v1109 = vpop.f32.mrb[0].mxu0
          %v1110 = vadd.f32 0.0, %v1109
          %v1111 = vpop.f32.mrb[0].mxu0
          %1112 = vmatprep.mubr.f32.mxu0 0.0
          %1113 = vmatmul.mubr.f32.gmra.mrb[0].mxu0 %v1041
          %v1114 = vpop.f32.mrb[0].mxu0
          %v1115 = vadd.f32 0.0, %v1114
          %v1116 = vpop.f32.mrb[0].mxu0
          %1117 = vdwg.mxu0
          %v1119 = vsel %vm316, %v1110, 0
          %v1122 = vsel %vm316, %v1115, 0
          %1124 = vmatprep.subr.mxu0 0.0
          %1125 = vmatpush1.msra.mxu0 %v1029
          %1126 = vmatprep.subr.mxu0 0.0
          %1127 = vmatpush1.msra.mxu0 %v1034
          %1128 = vmatprep.subr.mxu0 0.0
          %1129 = vmatpush1.msra.mxu0 0.0
          %1130 = vmatprep.subr.mxu0 0.0
          %1131 = vmatpush1.msra.mxu0 0.0
          %1132 = vmatprep.subr.mxu0 0.0
          %1133 = vmatpush1.msra.mxu0 0.0
          %1134 = vmatprep.subr.mxu0 0.0
          %1135 = vmatpush1.msra.mxu0 0.0
          %1136 = vmatprep.subr.mxu0 0.0
          %1137 = vmatpush1.msra.mxu0 0.0
          %1138 = vmatprep.subr.mxu0 0.0
          %1139 = vmatpush1.msra.mxu0 0.0
          %1140 = vmatprep.subr.mxu0 0.0
          %1141 = vmatpush1.msra.mxu0 0.0
          %1142 = vmatprep.subr.mxu0 0.0
          %1143 = vmatpush1.msra.mxu0 0.0
          %1144 = vmatprep.subr.mxu0 0.0
          %1145 = vmatpush1.msra.mxu0 0.0
          %1146 = vmatprep.subr.mxu0 0.0
          %1147 = vmatpush1.msra.mxu0 0.0
          %1148 = vmatprep.subr.mxu0 0.0
          %1149 = vmatpush1.msra.mxu0 0.0
          %1150 = vmatprep.subr.mxu0 0.0
          %1151 = vmatpush1.msra.mxu0 0.0
          %1152 = vmatprep.subr.mxu0 0.0
          %1153 = vmatpush1.msra.mxu0 0.0
          %1154 = vmatprep.subr.mxu0 0.0
          %1155 = vmatpush1.msra.mxu0 0.0
          %1156 = vmatprep.subr.mxu0 0.0
          %1157 = vmatpush1.msra.mxu0 0.0
          %1158 = vmatprep.subr.mxu0 0.0
          %1159 = vmatpush1.msra.mxu0 0.0
          %1160 = vmatprep.subr.mxu0 0.0
          %1161 = vmatpush1.msra.mxu0 0.0
          %1162 = vmatprep.subr.mxu0 0.0
          %1163 = vmatpush1.msra.mxu0 0.0
          %1164 = vmatprep.subr.mxu0 0.0
          %1165 = vmatpush1.msra.mxu0 0.0
          %1166 = vmatprep.subr.mxu0 0.0
          %1167 = vmatpush1.msra.mxu0 0.0
          %1168 = vmatprep.subr.mxu0 0.0
          %1169 = vmatpush1.msra.mxu0 0.0
          %1170 = vmatprep.subr.mxu0 0.0
          %1171 = vmatpush1.msra.mxu0 0.0
          %1172 = vmatprep.subr.mxu0 0.0
          %1173 = vmatpush1.msra.mxu0 0.0
          %1174 = vmatprep.subr.mxu0 0.0
          %1175 = vmatpush1.msra.mxu0 0.0
          %1176 = vmatprep.subr.mxu0 0.0
          %1177 = vmatpush1.msra.mxu0 0.0
          %1178 = vmatprep.subr.mxu0 0.0
          %1179 = vmatpush1.msra.mxu0 0.0
          %1180 = vmatprep.subr.mxu0 0.0
          %1181 = vmatpush1.msra.mxu0 0.0
          %1182 = vmatprep.subr.mxu0 0.0
          %1183 = vmatpush1.msra.mxu0 0.0
          %1184 = vmatprep.subr.mxu0 0.0
          %1185 = vmatpush1.msra.mxu0 0.0
          %1186 = vmatprep.subr.mxu0 0.0
          %1187 = vmatpush1.msra.mxu0 0.0
          %1188 = vmatprep.mubr.f32.mxu0 0.0
          %1189 = vmatmul.mubr.f32.gmra.mrb[0].mxu0 %v1119
          %v1190 = vpop.f32.mrb[0].mxu0
          %v1191 = vadd.f32 0.0, %v1190
          %v1192 = vpop.f32.mrb[0].mxu0
          %1193 = vmatprep.mubr.f32.mxu0 0.0
          %1194 = vmatmul.mubr.f32.gmra.mrb[0].mxu0 %v1122
          %v1195 = vpop.f32.mrb[0].mxu0
          %v1196 = vadd.f32 0.0, %v1195
          %v1197 = vpop.f32.mrb[0].mxu0
          %1198 = vdwg.mxu0
          %v1199 = vsub.f32 %v622, %v1191
          %v1200 = vsub.f32 %v623, %v1196
          %v1201 = vmul.f32 %v1199, 0.5
          %v1202 = vmul.f32 %v1200, 0.5
          %v1204 = vsel %vm316, %v1029, 0
          %v1207 = vsel %vm316, %v1034, 0
          %1209 = vmatprep.subr.mxu0 0.0
          %1210 = vmatpush1.msra.mxu0 %v1201
          %1211 = vmatprep.subr.mxu0 0.0
          %1212 = vmatpush1.msra.mxu0 %v1202
          %1213 = vmatprep.subr.mxu0 0.0
          %1214 = vmatpush1.msra.mxu0 0.0
          %1215 = vmatprep.subr.mxu0 0.0
          %1216 = vmatpush1.msra.mxu0 0.0
          %1217 = vmatprep.subr.mxu0 0.0
          %1218 = vmatpush1.msra.mxu0 0.0
          %1219 = vmatprep.subr.mxu0 0.0
          %1220 = vmatpush1.msra.mxu0 0.0
          %1221 = vmatprep.subr.mxu0 0.0
          %1222 = vmatpush1.msra.mxu0 0.0
          %1223 = vmatprep.subr.mxu0 0.0
          %1224 = vmatpush1.msra.mxu0 0.0
          %1225 = vmatprep.subr.mxu0 0.0
          %1226 = vmatpush1.msra.mxu0 0.0
          %1227 = vmatprep.subr.mxu0 0.0
          %1228 = vmatpush1.msra.mxu0 0.0
          %1229 = vmatprep.subr.mxu0 0.0
          %1230 = vmatpush1.msra.mxu0 0.0
          %1231 = vmatprep.subr.mxu0 0.0
          %1232 = vmatpush1.msra.mxu0 0.0
          %1233 = vmatprep.subr.mxu0 0.0
          %1234 = vmatpush1.msra.mxu0 0.0
          %1235 = vmatprep.subr.mxu0 0.0
          %1236 = vmatpush1.msra.mxu0 0.0
          %1237 = vmatprep.subr.mxu0 0.0
          %1238 = vmatpush1.msra.mxu0 0.0
          %1239 = vmatprep.subr.mxu0 0.0
          %1240 = vmatpush1.msra.mxu0 0.0
          %1241 = vmatprep.subr.mxu0 0.0
          %1242 = vmatpush1.msra.mxu0 0.0
          %1243 = vmatprep.subr.mxu0 0.0
          %1244 = vmatpush1.msra.mxu0 0.0
          %1245 = vmatprep.subr.mxu0 0.0
          %1246 = vmatpush1.msra.mxu0 0.0
          %1247 = vmatprep.subr.mxu0 0.0
          %1248 = vmatpush1.msra.mxu0 0.0
          %1249 = vmatprep.subr.mxu0 0.0
          %1250 = vmatpush1.msra.mxu0 0.0
          %1251 = vmatprep.subr.mxu0 0.0
          %1252 = vmatpush1.msra.mxu0 0.0
          %1253 = vmatprep.subr.mxu0 0.0
          %1254 = vmatpush1.msra.mxu0 0.0
          %1255 = vmatprep.subr.mxu0 0.0
          %1256 = vmatpush1.msra.mxu0 0.0
          %1257 = vmatprep.subr.mxu0 0.0
          %1258 = vmatpush1.msra.mxu0 0.0
          %1259 = vmatprep.subr.mxu0 0.0
          %1260 = vmatpush1.msra.mxu0 0.0
          %1261 = vmatprep.subr.mxu0 0.0
          %1262 = vmatpush1.msra.mxu0 0.0
          %1263 = vmatprep.subr.mxu0 0.0
          %1264 = vmatpush1.msra.mxu0 0.0
          %1265 = vmatprep.subr.mxu0 0.0
          %1266 = vmatpush1.msra.mxu0 0.0
          %1267 = vmatprep.subr.mxu0 0.0
          %1268 = vmatpush1.msra.mxu0 0.0
          %1269 = vmatprep.subr.mxu0 0.0
          %1270 = vmatpush1.msra.mxu0 0.0
          %1271 = vmatprep.subr.mxu0 0.0
          %1272 = vmatpush1.msra.mxu0 0.0
          %1273 = vmatprep.mubr.f32.mxu0 0.0
          %1274 = vmatmul.mubr.f32.gmra.mrb[0].mxu0 %v1204
          %v1275 = vpop.f32.mrb[0].mxu0
          %v1276 = vadd.f32 0.0, %v1275
          %v1277 = vpop.f32.mrb[0].mxu0
          %1278 = vmatprep.mubr.f32.mxu0 0.0
          %1279 = vmatmul.mubr.f32.gmra.mrb[0].mxu0 %v1207
          %v1280 = vpop.f32.mrb[0].mxu0
          %v1281 = vadd.f32 0.0, %v1280
          %v1282 = vpop.f32.mrb[0].mxu0
          %1283 = vdwg.mxu0
          %v1285 = vsel %vm316, %v1201, 0
          %v1288 = vsel %vm316, %v1202, 0
          %1290 = vmatprep.subr.mxu0 0.0
          %1291 = vmatpush1.msra.mxu0 %v1110
          %1292 = vmatprep.subr.mxu0 0.0
          %1293 = vmatpush1.msra.mxu0 %v1115
          %1294 = vmatprep.subr.mxu0 0.0
          %1295 = vmatpush1.msra.mxu0 0.0
          %1296 = vmatprep.subr.mxu0 0.0
          %1297 = vmatpush1.msra.mxu0 0.0
          %1298 = vmatprep.subr.mxu0 0.0
          %1299 = vmatpush1.msra.mxu0 0.0
          %1300 = vmatprep.subr.mxu0 0.0
          %1301 = vmatpush1.msra.mxu0 0.0
          %1302 = vmatprep.subr.mxu0 0.0
          %1303 = vmatpush1.msra.mxu0 0.0
          %1304 = vmatprep.subr.mxu0 0.0
          %1305 = vmatpush1.msra.mxu0 0.0
          %1306 = vmatprep.subr.mxu0 0.0
          %1307 = vmatpush1.msra.mxu0 0.0
          %1308 = vmatprep.subr.mxu0 0.0
          %1309 = vmatpush1.msra.mxu0 0.0
          %1310 = vmatprep.subr.mxu0 0.0
          %1311 = vmatpush1.msra.mxu0 0.0
          %1312 = vmatprep.subr.mxu0 0.0
          %1313 = vmatpush1.msra.mxu0 0.0
          %1314 = vmatprep.subr.mxu0 0.0
          %1315 = vmatpush1.msra.mxu0 0.0
          %1316 = vmatprep.subr.mxu0 0.0
          %1317 = vmatpush1.msra.mxu0 0.0
          %1318 = vmatprep.subr.mxu0 0.0
          %1319 = vmatpush1.msra.mxu0 0.0
          %1320 = vmatprep.subr.mxu0 0.0
          %1321 = vmatpush1.msra.mxu0 0.0
          %1322 = vmatprep.subr.mxu0 0.0
          %1323 = vmatpush1.msra.mxu0 0.0
          %1324 = vmatprep.subr.mxu0 0.0
          %1325 = vmatpush1.msra.mxu0 0.0
          %1326 = vmatprep.subr.mxu0 0.0
          %1327 = vmatpush1.msra.mxu0 0.0
          %1328 = vmatprep.subr.mxu0 0.0
          %1329 = vmatpush1.msra.mxu0 0.0
          %1330 = vmatprep.subr.mxu0 0.0
          %1331 = vmatpush1.msra.mxu0 0.0
          %1332 = vmatprep.subr.mxu0 0.0
          %1333 = vmatpush1.msra.mxu0 0.0
          %1334 = vmatprep.subr.mxu0 0.0
          %1335 = vmatpush1.msra.mxu0 0.0
          %1336 = vmatprep.subr.mxu0 0.0
          %1337 = vmatpush1.msra.mxu0 0.0
          %1338 = vmatprep.subr.mxu0 0.0
          %1339 = vmatpush1.msra.mxu0 0.0
          %1340 = vmatprep.subr.mxu0 0.0
          %1341 = vmatpush1.msra.mxu0 0.0
          %1342 = vmatprep.subr.mxu0 0.0
          %1343 = vmatpush1.msra.mxu0 0.0
          %1344 = vmatprep.subr.mxu0 0.0
          %1345 = vmatpush1.msra.mxu0 0.0
          %1346 = vmatprep.subr.mxu0 0.0
          %1347 = vmatpush1.msra.mxu0 0.0
          %1348 = vmatprep.subr.mxu0 0.0
          %1349 = vmatpush1.msra.mxu0 0.0
          %1350 = vmatprep.subr.mxu0 0.0
          %1351 = vmatpush1.msra.mxu0 0.0
          %1352 = vmatprep.subr.mxu0 0.0
          %1353 = vmatpush1.msra.mxu0 0.0
          %1354 = vmatprep.mubr.f32.mxu0 0.0
          %1355 = vmatmul.mubr.f32.gmra.mrb[0].mxu0 %v1285
          %v1356 = vpop.f32.mrb[0].mxu0
          %v1357 = vadd.f32 0.0, %v1356
          %v1358 = vpop.f32.mrb[0].mxu0
          %1359 = vmatprep.mubr.f32.mxu0 0.0
          %1360 = vmatmul.mubr.f32.gmra.mrb[0].mxu0 %v1288
          %v1361 = vpop.f32.mrb[0].mxu0
          %v1362 = vadd.f32 0.0, %v1361
          %v1363 = vpop.f32.mrb[0].mxu0
          %1364 = vdwg.mxu0
          %v1366 = vsel %vm316, %v1357, 0
          %v1369 = vsel %vm316, %v1362, 0
          %1371 = vmatprep.subr.mxu0 0.0
          %1372 = vmatpush1.msra.mxu0 %v1276
          %1373 = vmatprep.subr.mxu0 0.0
          %1374 = vmatpush1.msra.mxu0 %v1281
          %1375 = vmatprep.subr.mxu0 0.0
          %1376 = vmatpush1.msra.mxu0 0.0
          %1377 = vmatprep.subr.mxu0 0.0
          %1378 = vmatpush1.msra.mxu0 0.0
          %1379 = vmatprep.subr.mxu0 0.0
          %1380 = vmatpush1.msra.mxu0 0.0
          %1381 = vmatprep.subr.mxu0 0.0
          %1382 = vmatpush1.msra.mxu0 0.0
          %1383 = vmatprep.subr.mxu0 0.0
          %1384 = vmatpush1.msra.mxu0 0.0
          %1385 = vmatprep.subr.mxu0 0.0
          %1386 = vmatpush1.msra.mxu0 0.0
          %1387 = vmatprep.subr.mxu0 0.0
          %1388 = vmatpush1.msra.mxu0 0.0
          %1389 = vmatprep.subr.mxu0 0.0
          %1390 = vmatpush1.msra.mxu0 0.0
          %1391 = vmatprep.subr.mxu0 0.0
          %1392 = vmatpush1.msra.mxu0 0.0
          %1393 = vmatprep.subr.mxu0 0.0
          %1394 = vmatpush1.msra.mxu0 0.0
          %1395 = vmatprep.subr.mxu0 0.0
          %1396 = vmatpush1.msra.mxu0 0.0
          %1397 = vmatprep.subr.mxu0 0.0
          %1398 = vmatpush1.msra.mxu0 0.0
          %1399 = vmatprep.subr.mxu0 0.0
          %1400 = vmatpush1.msra.mxu0 0.0
          %1401 = vmatprep.subr.mxu0 0.0
          %1402 = vmatpush1.msra.mxu0 0.0
          %1403 = vmatprep.subr.mxu0 0.0
          %1404 = vmatpush1.msra.mxu0 0.0
          %1405 = vmatprep.subr.mxu0 0.0
          %1406 = vmatpush1.msra.mxu0 0.0
          %1407 = vmatprep.subr.mxu0 0.0
          %1408 = vmatpush1.msra.mxu0 0.0
          %1409 = vmatprep.subr.mxu0 0.0
          %1410 = vmatpush1.msra.mxu0 0.0
          %1411 = vmatprep.subr.mxu0 0.0
          %1412 = vmatpush1.msra.mxu0 0.0
          %1413 = vmatprep.subr.mxu0 0.0
          %1414 = vmatpush1.msra.mxu0 0.0
          %1415 = vmatprep.subr.mxu0 0.0
          %1416 = vmatpush1.msra.mxu0 0.0
          %1417 = vmatprep.subr.mxu0 0.0
          %1418 = vmatpush1.msra.mxu0 0.0
          %1419 = vmatprep.subr.mxu0 0.0
          %1420 = vmatpush1.msra.mxu0 0.0
          %1421 = vmatprep.subr.mxu0 0.0
          %1422 = vmatpush1.msra.mxu0 0.0
          %1423 = vmatprep.subr.mxu0 0.0
          %1424 = vmatpush1.msra.mxu0 0.0
          %1425 = vmatprep.subr.mxu0 0.0
          %1426 = vmatpush1.msra.mxu0 0.0
          %1427 = vmatprep.subr.mxu0 0.0
          %1428 = vmatpush1.msra.mxu0 0.0
          %1429 = vmatprep.subr.mxu0 0.0
          %1430 = vmatpush1.msra.mxu0 0.0
          %1431 = vmatprep.subr.mxu0 0.0
          %1432 = vmatpush1.msra.mxu0 0.0
          %1433 = vmatprep.subr.mxu0 0.0
          %1434 = vmatpush1.msra.mxu0 0.0
          %1435 = vmatprep.mubr.f32.mxu0 0.0
          %1436 = vmatmul.mubr.f32.gmra.mrb[0].mxu0 %v1366
          %v1437 = vpop.f32.mrb[0].mxu0
          %v1438 = vadd.f32 0.0, %v1437
          %v1439 = vpop.f32.mrb[0].mxu0
          %1440 = vmatprep.mubr.f32.mxu0 0.0
          %1441 = vmatmul.mubr.f32.gmra.mrb[0].mxu0 %v1369
          %v1442 = vpop.f32.mrb[0].mxu0
          %v1443 = vadd.f32 0.0, %v1442
          %v1444 = vpop.f32.mrb[0].mxu0
          %1445 = vdwg.mxu0
          %v1446 = vsub.f32 %v622, %v1438
          %v1447 = vsub.f32 %v623, %v1443
          %v1448 = vmul.f32 %v1446, 0.5
          %v1449 = vmul.f32 %v1447, 0.5
          %v1451 = vsel %vm316, %v1276, 0
          %v1454 = vsel %vm316, %v1281, 0
          %1456 = vmatprep.subr.mxu0 0.0
          %1457 = vmatpush1.msra.mxu0 %v1448
          %1458 = vmatprep.subr.mxu0 0.0
          %1459 = vmatpush1.msra.mxu0 %v1449
          %1460 = vmatprep.subr.mxu0 0.0
          %1461 = vmatpush1.msra.mxu0 0.0
          %1462 = vmatprep.subr.mxu0 0.0
          %1463 = vmatpush1.msra.mxu0 0.0
          %1464 = vmatprep.subr.mxu0 0.0
          %1465 = vmatpush1.msra.mxu0 0.0
          %1466 = vmatprep.subr.mxu0 0.0
          %1467 = vmatpush1.msra.mxu0 0.0
          %1468 = vmatprep.subr.mxu0 0.0
          %1469 = vmatpush1.msra.mxu0 0.0
          %1470 = vmatprep.subr.mxu0 0.0
          %1471 = vmatpush1.msra.mxu0 0.0
          %1472 = vmatprep.subr.mxu0 0.0
          %1473 = vmatpush1.msra.mxu0 0.0
          %1474 = vmatprep.subr.mxu0 0.0
          %1475 = vmatpush1.msra.mxu0 0.0
          %1476 = vmatprep.subr.mxu0 0.0
          %1477 = vmatpush1.msra.mxu0 0.0
          %1478 = vmatprep.subr.mxu0 0.0
          %1479 = vmatpush1.msra.mxu0 0.0
          %1480 = vmatprep.subr.mxu0 0.0
          %1481 = vmatpush1.msra.mxu0 0.0
          %1482 = vmatprep.subr.mxu0 0.0
          %1483 = vmatpush1.msra.mxu0 0.0
          %1484 = vmatprep.subr.mxu0 0.0
          %1485 = vmatpush1.msra.mxu0 0.0
          %1486 = vmatprep.subr.mxu0 0.0
          %1487 = vmatpush1.msra.mxu0 0.0
          %1488 = vmatprep.subr.mxu0 0.0
          %1489 = vmatpush1.msra.mxu0 0.0
          %1490 = vmatprep.subr.mxu0 0.0
          %1491 = vmatpush1.msra.mxu0 0.0
          %1492 = vmatprep.subr.mxu0 0.0
          %1493 = vmatpush1.msra.mxu0 0.0
          %1494 = vmatprep.subr.mxu0 0.0
          %1495 = vmatpush1.msra.mxu0 0.0
          %1496 = vmatprep.subr.mxu0 0.0
          %1497 = vmatpush1.msra.mxu0 0.0
          %1498 = vmatprep.subr.mxu0 0.0
          %1499 = vmatpush1.msra.mxu0 0.0
          %1500 = vmatprep.subr.mxu0 0.0
          %1501 = vmatpush1.msra.mxu0 0.0
          %1502 = vmatprep.subr.mxu0 0.0
          %1503 = vmatpush1.msra.mxu0 0.0
          %1504 = vmatprep.subr.mxu0 0.0
          %1505 = vmatpush1.msra.mxu0 0.0
          %1506 = vmatprep.subr.mxu0 0.0
          %1507 = vmatpush1.msra.mxu0 0.0
          %1508 = vmatprep.subr.mxu0 0.0
          %1509 = vmatpush1.msra.mxu0 0.0
          %1510 = vmatprep.subr.mxu0 0.0
          %1511 = vmatpush1.msra.mxu0 0.0
          %1512 = vmatprep.subr.mxu0 0.0
          %1513 = vmatpush1.msra.mxu0 0.0
          %1514 = vmatprep.subr.mxu0 0.0
          %1515 = vmatpush1.msra.mxu0 0.0
          %1516 = vmatprep.subr.mxu0 0.0
          %1517 = vmatpush1.msra.mxu0 0.0
          %1518 = vmatprep.subr.mxu0 0.0
          %1519 = vmatpush1.msra.mxu0 0.0
          %1520 = vmatprep.mubr.f32.mxu0 0.0
          %1521 = vmatmul.mubr.f32.gmra.mrb[0].mxu0 %v1451
          %v1522 = vpop.f32.mrb[0].mxu0
          %v1523 = vadd.f32 0.0, %v1522
          %v1524 = vpop.f32.mrb[0].mxu0
          %1525 = vmatprep.mubr.f32.mxu0 0.0
          %1526 = vmatmul.mubr.f32.gmra.mrb[0].mxu0 %v1454
          %v1527 = vpop.f32.mrb[0].mxu0
          %v1528 = vadd.f32 0.0, %v1527
          %v1529 = vpop.f32.mrb[0].mxu0
          %1530 = vdwg.mxu0
          %v1532 = vsel %vm316, %v1448, 0
          %v1535 = vsel %vm316, %v1449, 0
          %1537 = vmatprep.subr.mxu0 0.0
          %1538 = vmatpush1.msra.mxu0 %v1357
          %1539 = vmatprep.subr.mxu0 0.0
          %1540 = vmatpush1.msra.mxu0 %v1362
          %1541 = vmatprep.subr.mxu0 0.0
          %1542 = vmatpush1.msra.mxu0 0.0
          %1543 = vmatprep.subr.mxu0 0.0
          %1544 = vmatpush1.msra.mxu0 0.0
          %1545 = vmatprep.subr.mxu0 0.0
          %1546 = vmatpush1.msra.mxu0 0.0
          %1547 = vmatprep.subr.mxu0 0.0
          %1548 = vmatpush1.msra.mxu0 0.0
          %1549 = vmatprep.subr.mxu0 0.0
          %1550 = vmatpush1.msra.mxu0 0.0
          %1551 = vmatprep.subr.mxu0 0.0
          %1552 = vmatpush1.msra.mxu0 0.0
          %1553 = vmatprep.subr.mxu0 0.0
          %1554 = vmatpush1.msra.mxu0 0.0
          %1555 = vmatprep.subr.mxu0 0.0
          %1556 = vmatpush1.msra.mxu0 0.0
          %1557 = vmatprep.subr.mxu0 0.0
          %1558 = vmatpush1.msra.mxu0 0.0
          %1559 = vmatprep.subr.mxu0 0.0
          %1560 = vmatpush1.msra.mxu0 0.0
          %1561 = vmatprep.subr.mxu0 0.0
          %1562 = vmatpush1.msra.mxu0 0.0
          %1563 = vmatprep.subr.mxu0 0.0
          %1564 = vmatpush1.msra.mxu0 0.0
          %1565 = vmatprep.subr.mxu0 0.0
          %1566 = vmatpush1.msra.mxu0 0.0
          %1567 = vmatprep.subr.mxu0 0.0
          %1568 = vmatpush1.msra.mxu0 0.0
          %1569 = vmatprep.subr.mxu0 0.0
          %1570 = vmatpush1.msra.mxu0 0.0
          %1571 = vmatprep.subr.mxu0 0.0
          %1572 = vmatpush1.msra.mxu0 0.0
          %1573 = vmatprep.subr.mxu0 0.0
          %1574 = vmatpush1.msra.mxu0 0.0
          %1575 = vmatprep.subr.mxu0 0.0
          %1576 = vmatpush1.msra.mxu0 0.0
          %1577 = vmatprep.subr.mxu0 0.0
          %1578 = vmatpush1.msra.mxu0 0.0
          %1579 = vmatprep.subr.mxu0 0.0
          %1580 = vmatpush1.msra.mxu0 0.0
          %1581 = vmatprep.subr.mxu0 0.0
          %1582 = vmatpush1.msra.mxu0 0.0
          %1583 = vmatprep.subr.mxu0 0.0
          %1584 = vmatpush1.msra.mxu0 0.0
          %1585 = vmatprep.subr.mxu0 0.0
          %1586 = vmatpush1.msra.mxu0 0.0
          %1587 = vmatprep.subr.mxu0 0.0
          %1588 = vmatpush1.msra.mxu0 0.0
          %1589 = vmatprep.subr.mxu0 0.0
          %1590 = vmatpush1.msra.mxu0 0.0
          %1591 = vmatprep.subr.mxu0 0.0
          %1592 = vmatpush1.msra.mxu0 0.0
          %1593 = vmatprep.subr.mxu0 0.0
          %1594 = vmatpush1.msra.mxu0 0.0
          %1595 = vmatprep.subr.mxu0 0.0
          %1596 = vmatpush1.msra.mxu0 0.0
          %1597 = vmatprep.subr.mxu0 0.0
          %1598 = vmatpush1.msra.mxu0 0.0
          %1599 = vmatprep.subr.mxu0 0.0
          %1600 = vmatpush1.msra.mxu0 0.0
          %1601 = vmatprep.mubr.f32.mxu0 0.0
          %1602 = vmatmul.mubr.f32.gmra.mrb[0].mxu0 %v1532
          %v1603 = vpop.f32.mrb[0].mxu0
          %v1604 = vadd.f32 0.0, %v1603
          %v1605 = vpop.f32.mrb[0].mxu0
          %1606 = vmatprep.mubr.f32.mxu0 0.0
          %1607 = vmatmul.mubr.f32.gmra.mrb[0].mxu0 %v1535
          %v1608 = vpop.f32.mrb[0].mxu0
          %v1609 = vadd.f32 0.0, %v1608
          %v1610 = vpop.f32.mrb[0].mxu0
          %1611 = vdwg.mxu0
          %v1613 = vsel %vm316, %v1604, 0
          %v1616 = vsel %vm316, %v1609, 0
          %1618 = vmatprep.subr.mxu0 0.0
          %1619 = vmatpush1.msra.mxu0 %v1523
          %1620 = vmatprep.subr.mxu0 0.0
          %1621 = vmatpush1.msra.mxu0 %v1528
          %1622 = vmatprep.subr.mxu0 0.0
          %1623 = vmatpush1.msra.mxu0 0.0
          %1624 = vmatprep.subr.mxu0 0.0
          %1625 = vmatpush1.msra.mxu0 0.0
          %1626 = vmatprep.subr.mxu0 0.0
          %1627 = vmatpush1.msra.mxu0 0.0
          %1628 = vmatprep.subr.mxu0 0.0
          %1629 = vmatpush1.msra.mxu0 0.0
          %1630 = vmatprep.subr.mxu0 0.0
          %1631 = vmatpush1.msra.mxu0 0.0
          %1632 = vmatprep.subr.mxu0 0.0
          %1633 = vmatpush1.msra.mxu0 0.0
          %1634 = vmatprep.subr.mxu0 0.0
          %1635 = vmatpush1.msra.mxu0 0.0
          %1636 = vmatprep.subr.mxu0 0.0
          %1637 = vmatpush1.msra.mxu0 0.0
          %1638 = vmatprep.subr.mxu0 0.0
          %1639 = vmatpush1.msra.mxu0 0.0
          %1640 = vmatprep.subr.mxu0 0.0
          %1641 = vmatpush1.msra.mxu0 0.0
          %1642 = vmatprep.subr.mxu0 0.0
          %1643 = vmatpush1.msra.mxu0 0.0
          %1644 = vmatprep.subr.mxu0 0.0
          %1645 = vmatpush1.msra.mxu0 0.0
          %1646 = vmatprep.subr.mxu0 0.0
          %1647 = vmatpush1.msra.mxu0 0.0
          %1648 = vmatprep.subr.mxu0 0.0
          %1649 = vmatpush1.msra.mxu0 0.0
          %1650 = vmatprep.subr.mxu0 0.0
          %1651 = vmatpush1.msra.mxu0 0.0
          %1652 = vmatprep.subr.mxu0 0.0
          %1653 = vmatpush1.msra.mxu0 0.0
          %1654 = vmatprep.subr.mxu0 0.0
          %1655 = vmatpush1.msra.mxu0 0.0
          %1656 = vmatprep.subr.mxu0 0.0
          %1657 = vmatpush1.msra.mxu0 0.0
          %1658 = vmatprep.subr.mxu0 0.0
          %1659 = vmatpush1.msra.mxu0 0.0
          %1660 = vmatprep.subr.mxu0 0.0
          %1661 = vmatpush1.msra.mxu0 0.0
          %1662 = vmatprep.subr.mxu0 0.0
          %1663 = vmatpush1.msra.mxu0 0.0
          %1664 = vmatprep.subr.mxu0 0.0
          %1665 = vmatpush1.msra.mxu0 0.0
          %1666 = vmatprep.subr.mxu0 0.0
          %1667 = vmatpush1.msra.mxu0 0.0
          %1668 = vmatprep.subr.mxu0 0.0
          %1669 = vmatpush1.msra.mxu0 0.0
          %1670 = vmatprep.subr.mxu0 0.0
          %1671 = vmatpush1.msra.mxu0 0.0
          %1672 = vmatprep.subr.mxu0 0.0
          %1673 = vmatpush1.msra.mxu0 0.0
          %1674 = vmatprep.subr.mxu0 0.0
          %1675 = vmatpush1.msra.mxu0 0.0
          %1676 = vmatprep.subr.mxu0 0.0
          %1677 = vmatpush1.msra.mxu0 0.0
          %1678 = vmatprep.subr.mxu0 0.0
          %1679 = vmatpush1.msra.mxu0 0.0
          %1680 = vmatprep.subr.mxu0 0.0
          %1681 = vmatpush1.msra.mxu0 0.0
          %1682 = vmatprep.mubr.f32.mxu0 0.0
          %1683 = vmatmul.mubr.f32.gmra.mrb[0].mxu0 %v1613
          %v1684 = vpop.f32.mrb[0].mxu0
          %v1685 = vadd.f32 0.0, %v1684
          %v1686 = vpop.f32.mrb[0].mxu0
          %1687 = vmatprep.mubr.f32.mxu0 0.0
          %1688 = vmatmul.mubr.f32.gmra.mrb[0].mxu0 %v1616
          %v1689 = vpop.f32.mrb[0].mxu0
          %v1690 = vadd.f32 0.0, %v1689
          %v1691 = vpop.f32.mrb[0].mxu0
          %1692 = vdwg.mxu0
          %v1693 = vsub.f32 %v622, %v1685
          %v1694 = vsub.f32 %v623, %v1690
          %v1695 = vmul.f32 %v1693, 0.5
          %v1696 = vmul.f32 %v1694, 0.5
          %v1698 = vsel %vm316, %v1523, 0
          %v1701 = vsel %vm316, %v1528, 0
          %1703 = vmatprep.subr.mxu0 0.0
          %1704 = vmatpush1.msra.mxu0 %v1695
          %1705 = vmatprep.subr.mxu0 0.0
          %1706 = vmatpush1.msra.mxu0 %v1696
          %1707 = vmatprep.subr.mxu0 0.0
          %1708 = vmatpush1.msra.mxu0 0.0
          %1709 = vmatprep.subr.mxu0 0.0
          %1710 = vmatpush1.msra.mxu0 0.0
          %1711 = vmatprep.subr.mxu0 0.0
          %1712 = vmatpush1.msra.mxu0 0.0
          %1713 = vmatprep.subr.mxu0 0.0
          %1714 = vmatpush1.msra.mxu0 0.0
          %1715 = vmatprep.subr.mxu0 0.0
          %1716 = vmatpush1.msra.mxu0 0.0
          %1717 = vmatprep.subr.mxu0 0.0
          %1718 = vmatpush1.msra.mxu0 0.0
          %1719 = vmatprep.subr.mxu0 0.0
          %1720 = vmatpush1.msra.mxu0 0.0
          %1721 = vmatprep.subr.mxu0 0.0
          %1722 = vmatpush1.msra.mxu0 0.0
          %1723 = vmatprep.subr.mxu0 0.0
          %1724 = vmatpush1.msra.mxu0 0.0
          %1725 = vmatprep.subr.mxu0 0.0
          %1726 = vmatpush1.msra.mxu0 0.0
          %1727 = vmatprep.subr.mxu0 0.0
          %1728 = vmatpush1.msra.mxu0 0.0
          %1729 = vmatprep.subr.mxu0 0.0
          %1730 = vmatpush1.msra.mxu0 0.0
          %1731 = vmatprep.subr.mxu0 0.0
          %1732 = vmatpush1.msra.mxu0 0.0
          %1733 = vmatprep.subr.mxu0 0.0
          %1734 = vmatpush1.msra.mxu0 0.0
          %1735 = vmatprep.subr.mxu0 0.0
          %1736 = vmatpush1.msra.mxu0 0.0
          %1737 = vmatprep.subr.mxu0 0.0
          %1738 = vmatpush1.msra.mxu0 0.0
          %1739 = vmatprep.subr.mxu0 0.0
          %1740 = vmatpush1.msra.mxu0 0.0
          %1741 = vmatprep.subr.mxu0 0.0
          %1742 = vmatpush1.msra.mxu0 0.0
          %1743 = vmatprep.subr.mxu0 0.0
          %1744 = vmatpush1.msra.mxu0 0.0
          %1745 = vmatprep.subr.mxu0 0.0
          %1746 = vmatpush1.msra.mxu0 0.0
          %1747 = vmatprep.subr.mxu0 0.0
          %1748 = vmatpush1.msra.mxu0 0.0
          %1749 = vmatprep.subr.mxu0 0.0
          %1750 = vmatpush1.msra.mxu0 0.0
          %1751 = vmatprep.subr.mxu0 0.0
          %1752 = vmatpush1.msra.mxu0 0.0
          %1753 = vmatprep.subr.mxu0 0.0
          %1754 = vmatpush1.msra.mxu0 0.0
          %1755 = vmatprep.subr.mxu0 0.0
          %1756 = vmatpush1.msra.mxu0 0.0
          %1757 = vmatprep.subr.mxu0 0.0
          %1758 = vmatpush1.msra.mxu0 0.0
          %1759 = vmatprep.subr.mxu0 0.0
          %1760 = vmatpush1.msra.mxu0 0.0
          %1761 = vmatprep.subr.mxu0 0.0
          %1762 = vmatpush1.msra.mxu0 0.0
          %1763 = vmatprep.subr.mxu0 0.0
          %1764 = vmatpush1.msra.mxu0 0.0
          %1765 = vmatprep.subr.mxu0 0.0
          %1766 = vmatpush1.msra.mxu0 0.0
          %1767 = vmatprep.mubr.f32.mxu0 0.0
          %1768 = vmatmul.mubr.f32.gmra.mrb[0].mxu0 %v1698
          %v1769 = vpop.f32.mrb[0].mxu0
          %v1770 = vadd.f32 0.0, %v1769
          %v1771 = vpop.f32.mrb[0].mxu0
          %1772 = vmatprep.mubr.f32.mxu0 0.0
          %1773 = vmatmul.mubr.f32.gmra.mrb[0].mxu0 %v1701
          %v1774 = vpop.f32.mrb[0].mxu0
          %v1775 = vadd.f32 0.0, %v1774
          %v1776 = vpop.f32.mrb[0].mxu0
          %1777 = vdwg.mxu0
          %v1779 = vsel %vm316, %v1695, 0
          %v1782 = vsel %vm316, %v1696, 0
          %1784 = vmatprep.subr.mxu0 0.0
          %1785 = vmatpush1.msra.mxu0 %v1604
          %1786 = vmatprep.subr.mxu0 0.0
          %1787 = vmatpush1.msra.mxu0 %v1609
          %1788 = vmatprep.subr.mxu0 0.0
          %1789 = vmatpush1.msra.mxu0 0.0
          %1790 = vmatprep.subr.mxu0 0.0
          %1791 = vmatpush1.msra.mxu0 0.0
          %1792 = vmatprep.subr.mxu0 0.0
          %1793 = vmatpush1.msra.mxu0 0.0
          %1794 = vmatprep.subr.mxu0 0.0
          %1795 = vmatpush1.msra.mxu0 0.0
          %1796 = vmatprep.subr.mxu0 0.0
          %1797 = vmatpush1.msra.mxu0 0.0
          %1798 = vmatprep.subr.mxu0 0.0
          %1799 = vmatpush1.msra.mxu0 0.0
          %1800 = vmatprep.subr.mxu0 0.0
          %1801 = vmatpush1.msra.mxu0 0.0
          %1802 = vmatprep.subr.mxu0 0.0
          %1803 = vmatpush1.msra.mxu0 0.0
          %1804 = vmatprep.subr.mxu0 0.0
          %1805 = vmatpush1.msra.mxu0 0.0
          %1806 = vmatprep.subr.mxu0 0.0
          %1807 = vmatpush1.msra.mxu0 0.0
          %1808 = vmatprep.subr.mxu0 0.0
          %1809 = vmatpush1.msra.mxu0 0.0
          %1810 = vmatprep.subr.mxu0 0.0
          %1811 = vmatpush1.msra.mxu0 0.0
          %1812 = vmatprep.subr.mxu0 0.0
          %1813 = vmatpush1.msra.mxu0 0.0
          %1814 = vmatprep.subr.mxu0 0.0
          %1815 = vmatpush1.msra.mxu0 0.0
          %1816 = vmatprep.subr.mxu0 0.0
          %1817 = vmatpush1.msra.mxu0 0.0
          %1818 = vmatprep.subr.mxu0 0.0
          %1819 = vmatpush1.msra.mxu0 0.0
          %1820 = vmatprep.subr.mxu0 0.0
          %1821 = vmatpush1.msra.mxu0 0.0
          %1822 = vmatprep.subr.mxu0 0.0
          %1823 = vmatpush1.msra.mxu0 0.0
          %1824 = vmatprep.subr.mxu0 0.0
          %1825 = vmatpush1.msra.mxu0 0.0
          %1826 = vmatprep.subr.mxu0 0.0
          %1827 = vmatpush1.msra.mxu0 0.0
          %1828 = vmatprep.subr.mxu0 0.0
          %1829 = vmatpush1.msra.mxu0 0.0
          %1830 = vmatprep.subr.mxu0 0.0
          %1831 = vmatpush1.msra.mxu0 0.0
          %1832 = vmatprep.subr.mxu0 0.0
          %1833 = vmatpush1.msra.mxu0 0.0
          %1834 = vmatprep.subr.mxu0 0.0
          %1835 = vmatpush1.msra.mxu0 0.0
          %1836 = vmatprep.subr.mxu0 0.0
          %1837 = vmatpush1.msra.mxu0 0.0
          %1838 = vmatprep.subr.mxu0 0.0
          %1839 = vmatpush1.msra.mxu0 0.0
          %1840 = vmatprep.subr.mxu0 0.0
          %1841 = vmatpush1.msra.mxu0 0.0
          %1842 = vmatprep.subr.mxu0 0.0
          %1843 = vmatpush1.msra.mxu0 0.0
          %1844 = vmatprep.subr.mxu0 0.0
          %1845 = vmatpush1.msra.mxu0 0.0
          %1846 = vmatprep.subr.mxu0 0.0
          %1847 = vmatpush1.msra.mxu0 0.0
          %1848 = vmatprep.mubr.f32.mxu0 0.0
          %1849 = vmatmul.mubr.f32.gmra.mrb[0].mxu0 %v1779
          %v1850 = vpop.f32.mrb[0].mxu0
          %v1851 = vadd.f32 0.0, %v1850
          %v1852 = vpop.f32.mrb[0].mxu0
          %1853 = vmatprep.mubr.f32.mxu0 0.0
          %1854 = vmatmul.mubr.f32.gmra.mrb[0].mxu0 %v1782
          %v1855 = vpop.f32.mrb[0].mxu0
          %v1856 = vadd.f32 0.0, %v1855
          %v1857 = vpop.f32.mrb[0].mxu0
          %1858 = vdwg.mxu0
          %v1860 = vsel %vm316, %v1851, 0
          %v1863 = vsel %vm316, %v1856, 0
          %1865 = vmatprep.subr.mxu0 0.0
          %1866 = vmatpush1.msra.mxu0 %v1770
          %1867 = vmatprep.subr.mxu0 0.0
          %1868 = vmatpush1.msra.mxu0 %v1775
          %1869 = vmatprep.subr.mxu0 0.0
          %1870 = vmatpush1.msra.mxu0 0.0
          %1871 = vmatprep.subr.mxu0 0.0
          %1872 = vmatpush1.msra.mxu0 0.0
          %1873 = vmatprep.subr.mxu0 0.0
          %1874 = vmatpush1.msra.mxu0 0.0
          %1875 = vmatprep.subr.mxu0 0.0
          %1876 = vmatpush1.msra.mxu0 0.0
          %1877 = vmatprep.subr.mxu0 0.0
          %1878 = vmatpush1.msra.mxu0 0.0
          %1879 = vmatprep.subr.mxu0 0.0
          %1880 = vmatpush1.msra.mxu0 0.0
          %1881 = vmatprep.subr.mxu0 0.0
          %1882 = vmatpush1.msra.mxu0 0.0
          %1883 = vmatprep.subr.mxu0 0.0
          %1884 = vmatpush1.msra.mxu0 0.0
          %1885 = vmatprep.subr.mxu0 0.0
          %1886 = vmatpush1.msra.mxu0 0.0
          %1887 = vmatprep.subr.mxu0 0.0
          %1888 = vmatpush1.msra.mxu0 0.0
          %1889 = vmatprep.subr.mxu0 0.0
          %1890 = vmatpush1.msra.mxu0 0.0
          %1891 = vmatprep.subr.mxu0 0.0
          %1892 = vmatpush1.msra.mxu0 0.0
          %1893 = vmatprep.subr.mxu0 0.0
          %1894 = vmatpush1.msra.mxu0 0.0
          %1895 = vmatprep.subr.mxu0 0.0
          %1896 = vmatpush1.msra.mxu0 0.0
          %1897 = vmatprep.subr.mxu0 0.0
          %1898 = vmatpush1.msra.mxu0 0.0
          %1899 = vmatprep.subr.mxu0 0.0
          %1900 = vmatpush1.msra.mxu0 0.0
          %1901 = vmatprep.subr.mxu0 0.0
          %1902 = vmatpush1.msra.mxu0 0.0
          %1903 = vmatprep.subr.mxu0 0.0
          %1904 = vmatpush1.msra.mxu0 0.0
          %1905 = vmatprep.subr.mxu0 0.0
          %1906 = vmatpush1.msra.mxu0 0.0
          %1907 = vmatprep.subr.mxu0 0.0
          %1908 = vmatpush1.msra.mxu0 0.0
          %1909 = vmatprep.subr.mxu0 0.0
          %1910 = vmatpush1.msra.mxu0 0.0
          %1911 = vmatprep.subr.mxu0 0.0
          %1912 = vmatpush1.msra.mxu0 0.0
          %1913 = vmatprep.subr.mxu0 0.0
          %1914 = vmatpush1.msra.mxu0 0.0
          %1915 = vmatprep.subr.mxu0 0.0
          %1916 = vmatpush1.msra.mxu0 0.0
          %1917 = vmatprep.subr.mxu0 0.0
          %1918 = vmatpush1.msra.mxu0 0.0
          %1919 = vmatprep.subr.mxu0 0.0
          %1920 = vmatpush1.msra.mxu0 0.0
          %1921 = vmatprep.subr.mxu0 0.0
          %1922 = vmatpush1.msra.mxu0 0.0
          %1923 = vmatprep.subr.mxu0 0.0
          %1924 = vmatpush1.msra.mxu0 0.0
          %1925 = vmatprep.subr.mxu0 0.0
          %1926 = vmatpush1.msra.mxu0 0.0
          %1927 = vmatprep.subr.mxu0 0.0
          %1928 = vmatpush1.msra.mxu0 0.0
          %1929 = vmatprep.mubr.f32.mxu0 0.0
          %1930 = vmatmul.mubr.f32.gmra.mrb[0].mxu0 %v1860
          %v1931 = vpop.f32.mrb[0].mxu0
          %v1932 = vadd.f32 0.0, %v1931
          %v1933 = vpop.f32.mrb[0].mxu0
          %1934 = vmatprep.mubr.f32.mxu0 0.0
          %1935 = vmatmul.mubr.f32.gmra.mrb[0].mxu0 %v1863
          %v1936 = vpop.f32.mrb[0].mxu0
          %v1937 = vadd.f32 0.0, %v1936
          %v1938 = vpop.f32.mrb[0].mxu0
          %1939 = vdwg.mxu0
          %v1940 = vsub.f32 %v622, %v1932
          %v1941 = vsub.f32 %v623, %v1937
          %v1942 = vmul.f32 %v1940, 0.5
          %v1943 = vmul.f32 %v1941, 0.5
          %v1945 = vsel %vm316, %v1770, 0
          %v1948 = vsel %vm316, %v1775, 0
          %1950 = vmatprep.subr.mxu0 0.0
          %1951 = vmatpush1.msra.mxu0 %v1942
          %1952 = vmatprep.subr.mxu0 0.0
          %1953 = vmatpush1.msra.mxu0 %v1943
          %1954 = vmatprep.subr.mxu0 0.0
          %1955 = vmatpush1.msra.mxu0 0.0
          %1956 = vmatprep.subr.mxu0 0.0
          %1957 = vmatpush1.msra.mxu0 0.0
          %1958 = vmatprep.subr.mxu0 0.0
          %1959 = vmatpush1.msra.mxu0 0.0
          %1960 = vmatprep.subr.mxu0 0.0
          %1961 = vmatpush1.msra.mxu0 0.0
          %1962 = vmatprep.subr.mxu0 0.0
          %1963 = vmatpush1.msra.mxu0 0.0
          %1964 = vmatprep.subr.mxu0 0.0
          %1965 = vmatpush1.msra.mxu0 0.0
          %1966 = vmatprep.subr.mxu0 0.0
          %1967 = vmatpush1.msra.mxu0 0.0
          %1968 = vmatprep.subr.mxu0 0.0
          %1969 = vmatpush1.msra.mxu0 0.0
          %1970 = vmatprep.subr.mxu0 0.0
          %1971 = vmatpush1.msra.mxu0 0.0
          %1972 = vmatprep.subr.mxu0 0.0
          %1973 = vmatpush1.msra.mxu0 0.0
          %1974 = vmatprep.subr.mxu0 0.0
          %1975 = vmatpush1.msra.mxu0 0.0
          %1976 = vmatprep.subr.mxu0 0.0
          %1977 = vmatpush1.msra.mxu0 0.0
          %1978 = vmatprep.subr.mxu0 0.0
          %1979 = vmatpush1.msra.mxu0 0.0
          %1980 = vmatprep.subr.mxu0 0.0
          %1981 = vmatpush1.msra.mxu0 0.0
          %1982 = vmatprep.subr.mxu0 0.0
          %1983 = vmatpush1.msra.mxu0 0.0
          %1984 = vmatprep.subr.mxu0 0.0
          %1985 = vmatpush1.msra.mxu0 0.0
          %1986 = vmatprep.subr.mxu0 0.0
          %1987 = vmatpush1.msra.mxu0 0.0
          %1988 = vmatprep.subr.mxu0 0.0
          %1989 = vmatpush1.msra.mxu0 0.0
          %1990 = vmatprep.subr.mxu0 0.0
          %1991 = vmatpush1.msra.mxu0 0.0
          %1992 = vmatprep.subr.mxu0 0.0
          %1993 = vmatpush1.msra.mxu0 0.0
          %1994 = vmatprep.subr.mxu0 0.0
          %1995 = vmatpush1.msra.mxu0 0.0
          %1996 = vmatprep.subr.mxu0 0.0
          %1997 = vmatpush1.msra.mxu0 0.0
          %1998 = vmatprep.subr.mxu0 0.0
          %1999 = vmatpush1.msra.mxu0 0.0
          %2000 = vmatprep.subr.mxu0 0.0
          %2001 = vmatpush1.msra.mxu0 0.0
          %2002 = vmatprep.subr.mxu0 0.0
          %2003 = vmatpush1.msra.mxu0 0.0
          %2004 = vmatprep.subr.mxu0 0.0
          %2005 = vmatpush1.msra.mxu0 0.0
          %2006 = vmatprep.subr.mxu0 0.0
          %2007 = vmatpush1.msra.mxu0 0.0
          %2008 = vmatprep.subr.mxu0 0.0
          %2009 = vmatpush1.msra.mxu0 0.0
          %2010 = vmatprep.subr.mxu0 0.0
          %2011 = vmatpush1.msra.mxu0 0.0
          %2012 = vmatprep.subr.mxu0 0.0
          %2013 = vmatpush1.msra.mxu0 0.0
          %2014 = vmatprep.mubr.f32.mxu0 0.0
          %2015 = vmatmul.mubr.f32.gmra.mrb[0].mxu0 %v1945
          %v2016 = vpop.f32.mrb[0].mxu0
          %v2017 = vadd.f32 0.0, %v2016
          %v2018 = vpop.f32.mrb[0].mxu0
          %2019 = vmatprep.mubr.f32.mxu0 0.0
          %2020 = vmatmul.mubr.f32.gmra.mrb[0].mxu0 %v1948
          %v2021 = vpop.f32.mrb[0].mxu0
          %v2022 = vadd.f32 0.0, %v2021
          %v2023 = vpop.f32.mrb[0].mxu0
          %2024 = vdwg.mxu0
          %v2026 = vsel %vm316, %v1942, 0
          %v2029 = vsel %vm316, %v1943, 0
          %2031 = vmatprep.subr.mxu0 0.0
          %2032 = vmatpush1.msra.mxu0 %v1851
          %2033 = vmatprep.subr.mxu0 0.0
          %2034 = vmatpush1.msra.mxu0 %v1856
          %2035 = vmatprep.subr.mxu0 0.0
          %2036 = vmatpush1.msra.mxu0 0.0
          %2037 = vmatprep.subr.mxu0 0.0
          %2038 = vmatpush1.msra.mxu0 0.0
          %2039 = vmatprep.subr.mxu0 0.0
          %2040 = vmatpush1.msra.mxu0 0.0
          %2041 = vmatprep.subr.mxu0 0.0
          %2042 = vmatpush1.msra.mxu0 0.0
          %2043 = vmatprep.subr.mxu0 0.0
          %2044 = vmatpush1.msra.mxu0 0.0
          %2045 = vmatprep.subr.mxu0 0.0
          %2046 = vmatpush1.msra.mxu0 0.0
          %2047 = vmatprep.subr.mxu0 0.0
          %2048 = vmatpush1.msra.mxu0 0.0
          %2049 = vmatprep.subr.mxu0 0.0
          %2050 = vmatpush1.msra.mxu0 0.0
          %2051 = vmatprep.subr.mxu0 0.0
          %2052 = vmatpush1.msra.mxu0 0.0
          %2053 = vmatprep.subr.mxu0 0.0
          %2054 = vmatpush1.msra.mxu0 0.0
          %2055 = vmatprep.subr.mxu0 0.0
          %2056 = vmatpush1.msra.mxu0 0.0
          %2057 = vmatprep.subr.mxu0 0.0
          %2058 = vmatpush1.msra.mxu0 0.0
          %2059 = vmatprep.subr.mxu0 0.0
          %2060 = vmatpush1.msra.mxu0 0.0
          %2061 = vmatprep.subr.mxu0 0.0
          %2062 = vmatpush1.msra.mxu0 0.0
          %2063 = vmatprep.subr.mxu0 0.0
          %2064 = vmatpush1.msra.mxu0 0.0
          %2065 = vmatprep.subr.mxu0 0.0
          %2066 = vmatpush1.msra.mxu0 0.0
          %2067 = vmatprep.subr.mxu0 0.0
          %2068 = vmatpush1.msra.mxu0 0.0
          %2069 = vmatprep.subr.mxu0 0.0
          %2070 = vmatpush1.msra.mxu0 0.0
          %2071 = vmatprep.subr.mxu0 0.0
          %2072 = vmatpush1.msra.mxu0 0.0
          %2073 = vmatprep.subr.mxu0 0.0
          %2074 = vmatpush1.msra.mxu0 0.0
          %2075 = vmatprep.subr.mxu0 0.0
          %2076 = vmatpush1.msra.mxu0 0.0
          %2077 = vmatprep.subr.mxu0 0.0
          %2078 = vmatpush1.msra.mxu0 0.0
          %2079 = vmatprep.subr.mxu0 0.0
          %2080 = vmatpush1.msra.mxu0 0.0
          %2081 = vmatprep.subr.mxu0 0.0
          %2082 = vmatpush1.msra.mxu0 0.0
          %2083 = vmatprep.subr.mxu0 0.0
          %2084 = vmatpush1.msra.mxu0 0.0
          %2085 = vmatprep.subr.mxu0 0.0
          %2086 = vmatpush1.msra.mxu0 0.0
          %2087 = vmatprep.subr.mxu0 0.0
          %2088 = vmatpush1.msra.mxu0 0.0
          %2089 = vmatprep.subr.mxu0 0.0
          %2090 = vmatpush1.msra.mxu0 0.0
          %2091 = vmatprep.subr.mxu0 0.0
          %2092 = vmatpush1.msra.mxu0 0.0
          %2093 = vmatprep.subr.mxu0 0.0
          %2094 = vmatpush1.msra.mxu0 0.0
          %2095 = vmatprep.mubr.f32.mxu0 0.0
          %2096 = vmatmul.mubr.f32.gmra.mrb[0].mxu0 %v2026
          %v2097 = vpop.f32.mrb[0].mxu0
          %v2098 = vadd.f32 0.0, %v2097
          %v2099 = vpop.f32.mrb[0].mxu0
          %2100 = vmatprep.mubr.f32.mxu0 0.0
          %2101 = vmatmul.mubr.f32.gmra.mrb[0].mxu0 %v2029
          %v2102 = vpop.f32.mrb[0].mxu0
          %v2103 = vadd.f32 0.0, %v2102
          %v2104 = vpop.f32.mrb[0].mxu0
          %2105 = vdwg.mxu0
          %v2107 = vsel %vm316, %v2098, 0
          %v2110 = vsel %vm316, %v2103, 0
          %2112 = vmatprep.subr.mxu0 0.0
          %2113 = vmatpush1.msra.mxu0 %v2017
          %2114 = vmatprep.subr.mxu0 0.0
          %2115 = vmatpush1.msra.mxu0 %v2022
          %2116 = vmatprep.subr.mxu0 0.0
          %2117 = vmatpush1.msra.mxu0 0.0
          %2118 = vmatprep.subr.mxu0 0.0
          %2119 = vmatpush1.msra.mxu0 0.0
          %2120 = vmatprep.subr.mxu0 0.0
          %2121 = vmatpush1.msra.mxu0 0.0
          %2122 = vmatprep.subr.mxu0 0.0
          %2123 = vmatpush1.msra.mxu0 0.0
          %2124 = vmatprep.subr.mxu0 0.0
          %2125 = vmatpush1.msra.mxu0 0.0
          %2126 = vmatprep.subr.mxu0 0.0
          %2127 = vmatpush1.msra.mxu0 0.0
          %2128 = vmatprep.subr.mxu0 0.0
          %2129 = vmatpush1.msra.mxu0 0.0
          %2130 = vmatprep.subr.mxu0 0.0
          %2131 = vmatpush1.msra.mxu0 0.0
          %2132 = vmatprep.subr.mxu0 0.0
          %2133 = vmatpush1.msra.mxu0 0.0
          %2134 = vmatprep.subr.mxu0 0.0
          %2135 = vmatpush1.msra.mxu0 0.0
          %2136 = vmatprep.subr.mxu0 0.0
          %2137 = vmatpush1.msra.mxu0 0.0
          %2138 = vmatprep.subr.mxu0 0.0
          %2139 = vmatpush1.msra.mxu0 0.0
          %2140 = vmatprep.subr.mxu0 0.0
          %2141 = vmatpush1.msra.mxu0 0.0
          %2142 = vmatprep.subr.mxu0 0.0
          %2143 = vmatpush1.msra.mxu0 0.0
          %2144 = vmatprep.subr.mxu0 0.0
          %2145 = vmatpush1.msra.mxu0 0.0
          %2146 = vmatprep.subr.mxu0 0.0
          %2147 = vmatpush1.msra.mxu0 0.0
          %2148 = vmatprep.subr.mxu0 0.0
          %2149 = vmatpush1.msra.mxu0 0.0
          %2150 = vmatprep.subr.mxu0 0.0
          %2151 = vmatpush1.msra.mxu0 0.0
          %2152 = vmatprep.subr.mxu0 0.0
          %2153 = vmatpush1.msra.mxu0 0.0
          %2154 = vmatprep.subr.mxu0 0.0
          %2155 = vmatpush1.msra.mxu0 0.0
          %2156 = vmatprep.subr.mxu0 0.0
          %2157 = vmatpush1.msra.mxu0 0.0
          %2158 = vmatprep.subr.mxu0 0.0
          %2159 = vmatpush1.msra.mxu0 0.0
          %2160 = vmatprep.subr.mxu0 0.0
          %2161 = vmatpush1.msra.mxu0 0.0
          %2162 = vmatprep.subr.mxu0 0.0
          %2163 = vmatpush1.msra.mxu0 0.0
          %2164 = vmatprep.subr.mxu0 0.0
          %2165 = vmatpush1.msra.mxu0 0.0
          %2166 = vmatprep.subr.mxu0 0.0
          %2167 = vmatpush1.msra.mxu0 0.0
          %2168 = vmatprep.subr.mxu0 0.0
          %2169 = vmatpush1.msra.mxu0 0.0
          %2170 = vmatprep.subr.mxu0 0.0
          %2171 = vmatpush1.msra.mxu0 0.0
          %2172 = vmatprep.subr.mxu0 0.0
          %2173 = vmatpush1.msra.mxu0 0.0
          %2174 = vmatprep.subr.mxu0 0.0
          %2175 = vmatpush1.msra.mxu0 0.0
          %2176 = vmatprep.mubr.f32.mxu0 0.0
          %2177 = vmatmul.mubr.f32.gmra.mrb[0].mxu0 %v2107
          %v2178 = vpop.f32.mrb[0].mxu0
          %v2179 = vadd.f32 0.0, %v2178
          %v2180 = vpop.f32.mrb[0].mxu0
          %2181 = vmatprep.mubr.f32.mxu0 0.0
          %2182 = vmatmul.mubr.f32.gmra.mrb[0].mxu0 %v2110
          %v2183 = vpop.f32.mrb[0].mxu0
          %v2184 = vadd.f32 0.0, %v2183
          %v2185 = vpop.f32.mrb[0].mxu0
          %2186 = vdwg.mxu0
          %v2187 = vsub.f32 %v622, %v2179
          %v2188 = vsub.f32 %v623, %v2184
          %v2189 = vmul.f32 %v2187, 0.5
          %v2190 = vmul.f32 %v2188, 0.5
          %v2192 = vsel %vm316, %v2017, 0
          %v2195 = vsel %vm316, %v2022, 0
          %2197 = vmatprep.subr.mxu0 0.0
          %2198 = vmatpush1.msra.mxu0 %v2189
          %2199 = vmatprep.subr.mxu0 0.0
          %2200 = vmatpush1.msra.mxu0 %v2190
          %2201 = vmatprep.subr.mxu0 0.0
          %2202 = vmatpush1.msra.mxu0 0.0
          %2203 = vmatprep.subr.mxu0 0.0
          %2204 = vmatpush1.msra.mxu0 0.0
          %2205 = vmatprep.subr.mxu0 0.0
          %2206 = vmatpush1.msra.mxu0 0.0
          %2207 = vmatprep.subr.mxu0 0.0
          %2208 = vmatpush1.msra.mxu0 0.0
          %2209 = vmatprep.subr.mxu0 0.0
          %2210 = vmatpush1.msra.mxu0 0.0
          %2211 = vmatprep.subr.mxu0 0.0
          %2212 = vmatpush1.msra.mxu0 0.0
          %2213 = vmatprep.subr.mxu0 0.0
          %2214 = vmatpush1.msra.mxu0 0.0
          %2215 = vmatprep.subr.mxu0 0.0
          %2216 = vmatpush1.msra.mxu0 0.0
          %2217 = vmatprep.subr.mxu0 0.0
          %2218 = vmatpush1.msra.mxu0 0.0
          %2219 = vmatprep.subr.mxu0 0.0
          %2220 = vmatpush1.msra.mxu0 0.0
          %2221 = vmatprep.subr.mxu0 0.0
          %2222 = vmatpush1.msra.mxu0 0.0
          %2223 = vmatprep.subr.mxu0 0.0
          %2224 = vmatpush1.msra.mxu0 0.0
          %2225 = vmatprep.subr.mxu0 0.0
          %2226 = vmatpush1.msra.mxu0 0.0
          %2227 = vmatprep.subr.mxu0 0.0
          %2228 = vmatpush1.msra.mxu0 0.0
          %2229 = vmatprep.subr.mxu0 0.0
          %2230 = vmatpush1.msra.mxu0 0.0
          %2231 = vmatprep.subr.mxu0 0.0
          %2232 = vmatpush1.msra.mxu0 0.0
          %2233 = vmatprep.subr.mxu0 0.0
          %2234 = vmatpush1.msra.mxu0 0.0
          %2235 = vmatprep.subr.mxu0 0.0
          %2236 = vmatpush1.msra.mxu0 0.0
          %2237 = vmatprep.subr.mxu0 0.0
          %2238 = vmatpush1.msra.mxu0 0.0
          %2239 = vmatprep.subr.mxu0 0.0
          %2240 = vmatpush1.msra.mxu0 0.0
          %2241 = vmatprep.subr.mxu0 0.0
          %2242 = vmatpush1.msra.mxu0 0.0
          %2243 = vmatprep.subr.mxu0 0.0
          %2244 = vmatpush1.msra.mxu0 0.0
          %2245 = vmatprep.subr.mxu0 0.0
          %2246 = vmatpush1.msra.mxu0 0.0
          %2247 = vmatprep.subr.mxu0 0.0
          %2248 = vmatpush1.msra.mxu0 0.0
          %2249 = vmatprep.subr.mxu0 0.0
          %2250 = vmatpush1.msra.mxu0 0.0
          %2251 = vmatprep.subr.mxu0 0.0
          %2252 = vmatpush1.msra.mxu0 0.0
          %2253 = vmatprep.subr.mxu0 0.0
          %2254 = vmatpush1.msra.mxu0 0.0
          %2255 = vmatprep.subr.mxu0 0.0
          %2256 = vmatpush1.msra.mxu0 0.0
          %2257 = vmatprep.subr.mxu0 0.0
          %2258 = vmatpush1.msra.mxu0 0.0
          %2259 = vmatprep.subr.mxu0 0.0
          %2260 = vmatpush1.msra.mxu0 0.0
          %2261 = vmatprep.mubr.f32.mxu0 0.0
          %2262 = vmatmul.mubr.f32.gmra.mrb[0].mxu0 %v2192
          %v2263 = vpop.f32.mrb[0].mxu0
          %v2264 = vadd.f32 0.0, %v2263
          %v2265 = vpop.f32.mrb[0].mxu0
          %2266 = vmatprep.mubr.f32.mxu0 0.0
          %2267 = vmatmul.mubr.f32.gmra.mrb[0].mxu0 %v2195
          %v2268 = vpop.f32.mrb[0].mxu0
          %v2269 = vadd.f32 0.0, %v2268
          %v2270 = vpop.f32.mrb[0].mxu0
          %2271 = vdwg.mxu0
          %v2273 = vsel %vm316, %v2189, 0
          %v2276 = vsel %vm316, %v2190, 0
          %2278 = vmatprep.subr.mxu0 0.0
          %2279 = vmatpush1.msra.mxu0 %v2098
          %2280 = vmatprep.subr.mxu0 0.0
          %2281 = vmatpush1.msra.mxu0 %v2103
          %2282 = vmatprep.subr.mxu0 0.0
          %2283 = vmatpush1.msra.mxu0 0.0
          %2284 = vmatprep.subr.mxu0 0.0
          %2285 = vmatpush1.msra.mxu0 0.0
          %2286 = vmatprep.subr.mxu0 0.0
          %2287 = vmatpush1.msra.mxu0 0.0
          %2288 = vmatprep.subr.mxu0 0.0
          %2289 = vmatpush1.msra.mxu0 0.0
          %2290 = vmatprep.subr.mxu0 0.0
          %2291 = vmatpush1.msra.mxu0 0.0
          %2292 = vmatprep.subr.mxu0 0.0
          %2293 = vmatpush1.msra.mxu0 0.0
          %2294 = vmatprep.subr.mxu0 0.0
          %2295 = vmatpush1.msra.mxu0 0.0
          %2296 = vmatprep.subr.mxu0 0.0
          %2297 = vmatpush1.msra.mxu0 0.0
          %2298 = vmatprep.subr.mxu0 0.0
          %2299 = vmatpush1.msra.mxu0 0.0
          %2300 = vmatprep.subr.mxu0 0.0
          %2301 = vmatpush1.msra.mxu0 0.0
          %2302 = vmatprep.subr.mxu0 0.0
          %2303 = vmatpush1.msra.mxu0 0.0
          %2304 = vmatprep.subr.mxu0 0.0
          %2305 = vmatpush1.msra.mxu0 0.0
          %2306 = vmatprep.subr.mxu0 0.0
          %2307 = vmatpush1.msra.mxu0 0.0
          %2308 = vmatprep.subr.mxu0 0.0
          %2309 = vmatpush1.msra.mxu0 0.0
          %2310 = vmatprep.subr.mxu0 0.0
          %2311 = vmatpush1.msra.mxu0 0.0
          %2312 = vmatprep.subr.mxu0 0.0
          %2313 = vmatpush1.msra.mxu0 0.0
          %2314 = vmatprep.subr.mxu0 0.0
          %2315 = vmatpush1.msra.mxu0 0.0
          %2316 = vmatprep.subr.mxu0 0.0
          %2317 = vmatpush1.msra.mxu0 0.0
          %2318 = vmatprep.subr.mxu0 0.0
          %2319 = vmatpush1.msra.mxu0 0.0
          %2320 = vmatprep.subr.mxu0 0.0
          %2321 = vmatpush1.msra.mxu0 0.0
          %2322 = vmatprep.subr.mxu0 0.0
          %2323 = vmatpush1.msra.mxu0 0.0
          %2324 = vmatprep.subr.mxu0 0.0
          %2325 = vmatpush1.msra.mxu0 0.0
          %2326 = vmatprep.subr.mxu0 0.0
          %2327 = vmatpush1.msra.mxu0 0.0
          %2328 = vmatprep.subr.mxu0 0.0
          %2329 = vmatpush1.msra.mxu0 0.0
          %2330 = vmatprep.subr.mxu0 0.0
          %2331 = vmatpush1.msra.mxu0 0.0
          %2332 = vmatprep.subr.mxu0 0.0
          %2333 = vmatpush1.msra.mxu0 0.0
          %2334 = vmatprep.subr.mxu0 0.0
          %2335 = vmatpush1.msra.mxu0 0.0
          %2336 = vmatprep.subr.mxu0 0.0
          %2337 = vmatpush1.msra.mxu0 0.0
          %2338 = vmatprep.subr.mxu0 0.0
          %2339 = vmatpush1.msra.mxu0 0.0
          %2340 = vmatprep.subr.mxu0 0.0
          %2341 = vmatpush1.msra.mxu0 0.0
          %2342 = vmatprep.mubr.f32.mxu0 0.0
          %2343 = vmatmul.mubr.f32.gmra.mrb[0].mxu0 %v2273
          %v2344 = vpop.f32.mrb[0].mxu0
          %v2345 = vadd.f32 0.0, %v2344
          %v2346 = vpop.f32.mrb[0].mxu0
          %2347 = vmatprep.mubr.f32.mxu0 0.0
          %2348 = vmatmul.mubr.f32.gmra.mrb[0].mxu0 %v2276
          %v2349 = vpop.f32.mrb[0].mxu0
          %v2350 = vadd.f32 0.0, %v2349
          %v2351 = vpop.f32.mrb[0].mxu0
          %2352 = vdwg.mxu0
          %v2354 = vsel %vm316, %v2345, 0
          %v2357 = vsel %vm316, %v2350, 0
          %2359 = vmatprep.subr.mxu0 0.0
          %2360 = vmatpush1.msra.mxu0 %v2264
          %2361 = vmatprep.subr.mxu0 0.0
          %2362 = vmatpush1.msra.mxu0 %v2269
          %2363 = vmatprep.subr.mxu0 0.0
          %2364 = vmatpush1.msra.mxu0 0.0
          %2365 = vmatprep.subr.mxu0 0.0
          %2366 = vmatpush1.msra.mxu0 0.0
          %2367 = vmatprep.subr.mxu0 0.0
          %2368 = vmatpush1.msra.mxu0 0.0
          %2369 = vmatprep.subr.mxu0 0.0
          %2370 = vmatpush1.msra.mxu0 0.0
          %2371 = vmatprep.subr.mxu0 0.0
          %2372 = vmatpush1.msra.mxu0 0.0
          %2373 = vmatprep.subr.mxu0 0.0
          %2374 = vmatpush1.msra.mxu0 0.0
          %2375 = vmatprep.subr.mxu0 0.0
          %2376 = vmatpush1.msra.mxu0 0.0
          %2377 = vmatprep.subr.mxu0 0.0
          %2378 = vmatpush1.msra.mxu0 0.0
          %2379 = vmatprep.subr.mxu0 0.0
          %2380 = vmatpush1.msra.mxu0 0.0
          %2381 = vmatprep.subr.mxu0 0.0
          %2382 = vmatpush1.msra.mxu0 0.0
          %2383 = vmatprep.subr.mxu0 0.0
          %2384 = vmatpush1.msra.mxu0 0.0
          %2385 = vmatprep.subr.mxu0 0.0
          %2386 = vmatpush1.msra.mxu0 0.0
          %2387 = vmatprep.subr.mxu0 0.0
          %2388 = vmatpush1.msra.mxu0 0.0
          %2389 = vmatprep.subr.mxu0 0.0
          %2390 = vmatpush1.msra.mxu0 0.0
          %2391 = vmatprep.subr.mxu0 0.0
          %2392 = vmatpush1.msra.mxu0 0.0
          %2393 = vmatprep.subr.mxu0 0.0
          %2394 = vmatpush1.msra.mxu0 0.0
          %2395 = vmatprep.subr.mxu0 0.0
          %2396 = vmatpush1.msra.mxu0 0.0
          %2397 = vmatprep.subr.mxu0 0.0
          %2398 = vmatpush1.msra.mxu0 0.0
          %2399 = vmatprep.subr.mxu0 0.0
          %2400 = vmatpush1.msra.mxu0 0.0
          %2401 = vmatprep.subr.mxu0 0.0
          %2402 = vmatpush1.msra.mxu0 0.0
          %2403 = vmatprep.subr.mxu0 0.0
          %2404 = vmatpush1.msra.mxu0 0.0
          %2405 = vmatprep.subr.mxu0 0.0
          %2406 = vmatpush1.msra.mxu0 0.0
          %2407 = vmatprep.subr.mxu0 0.0
          %2408 = vmatpush1.msra.mxu0 0.0
          %2409 = vmatprep.subr.mxu0 0.0
          %2410 = vmatpush1.msra.mxu0 0.0
          %2411 = vmatprep.subr.mxu0 0.0
          %2412 = vmatpush1.msra.mxu0 0.0
          %2413 = vmatprep.subr.mxu0 0.0
          %2414 = vmatpush1.msra.mxu0 0.0
          %2415 = vmatprep.subr.mxu0 0.0
          %2416 = vmatpush1.msra.mxu0 0.0
          %2417 = vmatprep.subr.mxu0 0.0
          %2418 = vmatpush1.msra.mxu0 0.0
          %2419 = vmatprep.subr.mxu0 0.0
          %2420 = vmatpush1.msra.mxu0 0.0
          %2421 = vmatprep.subr.mxu0 0.0
          %2422 = vmatpush1.msra.mxu0 0.0
          %2423 = vmatprep.mubr.f32.mxu0 0.0
          %2424 = vmatmul.mubr.f32.gmra.mrb[0].mxu0 %v2354
          %v2425 = vpop.f32.mrb[0].mxu0
          %v2426 = vadd.f32 0.0, %v2425
          %v2427 = vpop.f32.mrb[0].mxu0
          %2428 = vmatprep.mubr.f32.mxu0 0.0
          %2429 = vmatmul.mubr.f32.gmra.mrb[0].mxu0 %v2357
          %v2430 = vpop.f32.mrb[0].mxu0
          %v2431 = vadd.f32 0.0, %v2430
          %v2432 = vpop.f32.mrb[0].mxu0
          %2433 = vdwg.mxu0
          %v2434 = vsub.f32 %v622, %v2426
          %v2435 = vsub.f32 %v623, %v2431
          %v2436 = vmul.f32 %v2434, 0.5
          %v2437 = vmul.f32 %v2435, 0.5
          %v2439 = vsel %vm316, %v2264, 0
          %v2442 = vsel %vm316, %v2269, 0
          %2444 = vmatprep.subr.mxu0 0.0
          %2445 = vmatpush1.msra.mxu0 %v2436
          %2446 = vmatprep.subr.mxu0 0.0
          %2447 = vmatpush1.msra.mxu0 %v2437
          %2448 = vmatprep.subr.mxu0 0.0
          %2449 = vmatpush1.msra.mxu0 0.0
          %2450 = vmatprep.subr.mxu0 0.0
          %2451 = vmatpush1.msra.mxu0 0.0
          %2452 = vmatprep.subr.mxu0 0.0
          %2453 = vmatpush1.msra.mxu0 0.0
          %2454 = vmatprep.subr.mxu0 0.0
          %2455 = vmatpush1.msra.mxu0 0.0
          %2456 = vmatprep.subr.mxu0 0.0
          %2457 = vmatpush1.msra.mxu0 0.0
          %2458 = vmatprep.subr.mxu0 0.0
          %2459 = vmatpush1.msra.mxu0 0.0
          %2460 = vmatprep.subr.mxu0 0.0
          %2461 = vmatpush1.msra.mxu0 0.0
          %2462 = vmatprep.subr.mxu0 0.0
          %2463 = vmatpush1.msra.mxu0 0.0
          %2464 = vmatprep.subr.mxu0 0.0
          %2465 = vmatpush1.msra.mxu0 0.0
          %2466 = vmatprep.subr.mxu0 0.0
          %2467 = vmatpush1.msra.mxu0 0.0
          %2468 = vmatprep.subr.mxu0 0.0
          %2469 = vmatpush1.msra.mxu0 0.0
          %2470 = vmatprep.subr.mxu0 0.0
          %2471 = vmatpush1.msra.mxu0 0.0
          %2472 = vmatprep.subr.mxu0 0.0
          %2473 = vmatpush1.msra.mxu0 0.0
          %2474 = vmatprep.subr.mxu0 0.0
          %2475 = vmatpush1.msra.mxu0 0.0
          %2476 = vmatprep.subr.mxu0 0.0
          %2477 = vmatpush1.msra.mxu0 0.0
          %2478 = vmatprep.subr.mxu0 0.0
          %2479 = vmatpush1.msra.mxu0 0.0
          %2480 = vmatprep.subr.mxu0 0.0
          %2481 = vmatpush1.msra.mxu0 0.0
          %2482 = vmatprep.subr.mxu0 0.0
          %2483 = vmatpush1.msra.mxu0 0.0
          %2484 = vmatprep.subr.mxu0 0.0
          %2485 = vmatpush1.msra.mxu0 0.0
          %2486 = vmatprep.subr.mxu0 0.0
          %2487 = vmatpush1.msra.mxu0 0.0
          %2488 = vmatprep.subr.mxu0 0.0
          %2489 = vmatpush1.msra.mxu0 0.0
          %2490 = vmatprep.subr.mxu0 0.0
          %2491 = vmatpush1.msra.mxu0 0.0
          %2492 = vmatprep.subr.mxu0 0.0
          %2493 = vmatpush1.msra.mxu0 0.0
          %2494 = vmatprep.subr.mxu0 0.0
          %2495 = vmatpush1.msra.mxu0 0.0
          %2496 = vmatprep.subr.mxu0 0.0
          %2497 = vmatpush1.msra.mxu0 0.0
          %2498 = vmatprep.subr.mxu0 0.0
          %2499 = vmatpush1.msra.mxu0 0.0
          %2500 = vmatprep.subr.mxu0 0.0
          %2501 = vmatpush1.msra.mxu0 0.0
          %2502 = vmatprep.subr.mxu0 0.0
          %2503 = vmatpush1.msra.mxu0 0.0
          %2504 = vmatprep.subr.mxu0 0.0
          %2505 = vmatpush1.msra.mxu0 0.0
          %2506 = vmatprep.subr.mxu0 0.0
          %2507 = vmatpush1.msra.mxu0 0.0
          %2508 = vmatprep.mubr.f32.mxu0 0.0
          %2509 = vmatmul.mubr.f32.gmra.mrb[0].mxu0 %v2439
          %v2510 = vpop.f32.mrb[0].mxu0
          %v2511 = vadd.f32 0.0, %v2510
          %v2512 = vpop.f32.mrb[0].mxu0
          %2513 = vmatprep.mubr.f32.mxu0 0.0
          %2514 = vmatmul.mubr.f32.gmra.mrb[0].mxu0 %v2442
          %v2515 = vpop.f32.mrb[0].mxu0
          %v2516 = vadd.f32 0.0, %v2515
          %v2517 = vpop.f32.mrb[0].mxu0
          %2518 = vdwg.mxu0
          %v2520 = vsel %vm316, %v2436, 0
          %v2523 = vsel %vm316, %v2437, 0
          %2525 = vmatprep.subr.mxu0 0.0
          %2526 = vmatpush1.msra.mxu0 %v2345
          %2527 = vmatprep.subr.mxu0 0.0
          %2528 = vmatpush1.msra.mxu0 %v2350
          %2529 = vmatprep.subr.mxu0 0.0
          %2530 = vmatpush1.msra.mxu0 0.0
          %2531 = vmatprep.subr.mxu0 0.0
          %2532 = vmatpush1.msra.mxu0 0.0
          %2533 = vmatprep.subr.mxu0 0.0
          %2534 = vmatpush1.msra.mxu0 0.0
          %2535 = vmatprep.subr.mxu0 0.0
          %2536 = vmatpush1.msra.mxu0 0.0
          %2537 = vmatprep.subr.mxu0 0.0
          %2538 = vmatpush1.msra.mxu0 0.0
          %2539 = vmatprep.subr.mxu0 0.0
          %2540 = vmatpush1.msra.mxu0 0.0
          %2541 = vmatprep.subr.mxu0 0.0
          %2542 = vmatpush1.msra.mxu0 0.0
          %2543 = vmatprep.subr.mxu0 0.0
          %2544 = vmatpush1.msra.mxu0 0.0
          %2545 = vmatprep.subr.mxu0 0.0
          %2546 = vmatpush1.msra.mxu0 0.0
          %2547 = vmatprep.subr.mxu0 0.0
          %2548 = vmatpush1.msra.mxu0 0.0
          %2549 = vmatprep.subr.mxu0 0.0
          %2550 = vmatpush1.msra.mxu0 0.0
          %2551 = vmatprep.subr.mxu0 0.0
          %2552 = vmatpush1.msra.mxu0 0.0
          %2553 = vmatprep.subr.mxu0 0.0
          %2554 = vmatpush1.msra.mxu0 0.0
          %2555 = vmatprep.subr.mxu0 0.0
          %2556 = vmatpush1.msra.mxu0 0.0
          %2557 = vmatprep.subr.mxu0 0.0
          %2558 = vmatpush1.msra.mxu0 0.0
          %2559 = vmatprep.subr.mxu0 0.0
          %2560 = vmatpush1.msra.mxu0 0.0
          %2561 = vmatprep.subr.mxu0 0.0
          %2562 = vmatpush1.msra.mxu0 0.0
          %2563 = vmatprep.subr.mxu0 0.0
          %2564 = vmatpush1.msra.mxu0 0.0
          %2565 = vmatprep.subr.mxu0 0.0
          %2566 = vmatpush1.msra.mxu0 0.0
          %2567 = vmatprep.subr.mxu0 0.0
          %2568 = vmatpush1.msra.mxu0 0.0
          %2569 = vmatprep.subr.mxu0 0.0
          %2570 = vmatpush1.msra.mxu0 0.0
          %2571 = vmatprep.subr.mxu0 0.0
          %2572 = vmatpush1.msra.mxu0 0.0
          %2573 = vmatprep.subr.mxu0 0.0
          %2574 = vmatpush1.msra.mxu0 0.0
          %2575 = vmatprep.subr.mxu0 0.0
          %2576 = vmatpush1.msra.mxu0 0.0
          %2577 = vmatprep.subr.mxu0 0.0
          %2578 = vmatpush1.msra.mxu0 0.0
          %2579 = vmatprep.subr.mxu0 0.0
          %2580 = vmatpush1.msra.mxu0 0.0
          %2581 = vmatprep.subr.mxu0 0.0
          %2582 = vmatpush1.msra.mxu0 0.0
          %2583 = vmatprep.subr.mxu0 0.0
          %2584 = vmatpush1.msra.mxu0 0.0
          %2585 = vmatprep.subr.mxu0 0.0
          %2586 = vmatpush1.msra.mxu0 0.0
          %2587 = vmatprep.subr.mxu0 0.0
          %2588 = vmatpush1.msra.mxu0 0.0
          %2589 = vmatprep.mubr.f32.mxu0 0.0
          %2590 = vmatmul.mubr.f32.gmra.mrb[0].mxu0 %v2520
          %v2591 = vpop.f32.mrb[0].mxu0
          %v2592 = vadd.f32 0.0, %v2591
          %v2593 = vpop.f32.mrb[0].mxu0
          %2594 = vmatprep.mubr.f32.mxu0 0.0
          %2595 = vmatmul.mubr.f32.gmra.mrb[0].mxu0 %v2523
          %v2596 = vpop.f32.mrb[0].mxu0
          %v2597 = vadd.f32 0.0, %v2596
          %v2598 = vpop.f32.mrb[0].mxu0
          %2599 = vdwg.mxu0
          %v2601 = vsel %vm316, %v2592, 0
          %v2604 = vsel %vm316, %v2597, 0
          %2606 = vmatprep.subr.mxu0 0.0
          %2607 = vmatpush1.msra.mxu0 %v2511
          %2608 = vmatprep.subr.mxu0 0.0
          %2609 = vmatpush1.msra.mxu0 %v2516
          %2610 = vmatprep.subr.mxu0 0.0
          %2611 = vmatpush1.msra.mxu0 0.0
          %2612 = vmatprep.subr.mxu0 0.0
          %2613 = vmatpush1.msra.mxu0 0.0
          %2614 = vmatprep.subr.mxu0 0.0
          %2615 = vmatpush1.msra.mxu0 0.0
          %2616 = vmatprep.subr.mxu0 0.0
          %2617 = vmatpush1.msra.mxu0 0.0
          %2618 = vmatprep.subr.mxu0 0.0
          %2619 = vmatpush1.msra.mxu0 0.0
          %2620 = vmatprep.subr.mxu0 0.0
          %2621 = vmatpush1.msra.mxu0 0.0
          %2622 = vmatprep.subr.mxu0 0.0
          %2623 = vmatpush1.msra.mxu0 0.0
          %2624 = vmatprep.subr.mxu0 0.0
          %2625 = vmatpush1.msra.mxu0 0.0
          %2626 = vmatprep.subr.mxu0 0.0
          %2627 = vmatpush1.msra.mxu0 0.0
          %2628 = vmatprep.subr.mxu0 0.0
          %2629 = vmatpush1.msra.mxu0 0.0
          %2630 = vmatprep.subr.mxu0 0.0
          %2631 = vmatpush1.msra.mxu0 0.0
          %2632 = vmatprep.subr.mxu0 0.0
          %2633 = vmatpush1.msra.mxu0 0.0
          %2634 = vmatprep.subr.mxu0 0.0
          %2635 = vmatpush1.msra.mxu0 0.0
          %2636 = vmatprep.subr.mxu0 0.0
          %2637 = vmatpush1.msra.mxu0 0.0
          %2638 = vmatprep.subr.mxu0 0.0
          %2639 = vmatpush1.msra.mxu0 0.0
          %2640 = vmatprep.subr.mxu0 0.0
          %2641 = vmatpush1.msra.mxu0 0.0
          %2642 = vmatprep.subr.mxu0 0.0
          %2643 = vmatpush1.msra.mxu0 0.0
          %2644 = vmatprep.subr.mxu0 0.0
          %2645 = vmatpush1.msra.mxu0 0.0
          %2646 = vmatprep.subr.mxu0 0.0
          %2647 = vmatpush1.msra.mxu0 0.0
          %2648 = vmatprep.subr.mxu0 0.0
          %2649 = vmatpush1.msra.mxu0 0.0
          %2650 = vmatprep.subr.mxu0 0.0
          %2651 = vmatpush1.msra.mxu0 0.0
          %2652 = vmatprep.subr.mxu0 0.0
          %2653 = vmatpush1.msra.mxu0 0.0
          %2654 = vmatprep.subr.mxu0 0.0
          %2655 = vmatpush1.msra.mxu0 0.0
          %2656 = vmatprep.subr.mxu0 0.0
          %2657 = vmatpush1.msra.mxu0 0.0
          %2658 = vmatprep.subr.mxu0 0.0
          %2659 = vmatpush1.msra.mxu0 0.0
          %2660 = vmatprep.subr.mxu0 0.0
          %2661 = vmatpush1.msra.mxu0 0.0
          %2662 = vmatprep.subr.mxu0 0.0
          %2663 = vmatpush1.msra.mxu0 0.0
          %2664 = vmatprep.subr.mxu0 0.0
          %2665 = vmatpush1.msra.mxu0 0.0
          %2666 = vmatprep.subr.mxu0 0.0
          %2667 = vmatpush1.msra.mxu0 0.0
          %2668 = vmatprep.subr.mxu0 0.0
          %2669 = vmatpush1.msra.mxu0 0.0
          %2670 = vmatprep.mubr.f32.mxu0 0.0
          %2671 = vmatmul.mubr.f32.gmra.mrb[0].mxu0 %v2601
          %v2672 = vpop.f32.mrb[0].mxu0
          %v2673 = vadd.f32 0.0, %v2672
          %v2674 = vpop.f32.mrb[0].mxu0
          %2675 = vmatprep.mubr.f32.mxu0 0.0
          %2676 = vmatmul.mubr.f32.gmra.mrb[0].mxu0 %v2604
          %v2677 = vpop.f32.mrb[0].mxu0
          %v2678 = vadd.f32 0.0, %v2677
          %v2679 = vpop.f32.mrb[0].mxu0
          %2680 = vdwg.mxu0
          %v2681 = vsub.f32 %v622, %v2673
          %v2682 = vsub.f32 %v623, %v2678
          %v2683 = vmul.f32 %v2681, 0.5
          %v2684 = vmul.f32 %v2682, 0.5
          %v2686 = vsel %vm316, %v2683, 0
          %v2689 = vsel %vm316, %v2684, 0
          %2691 = vmatprep.subr.mxu0 0.0
          %2692 = vmatpush1.msra.mxu0 %v2592
          %2693 = vmatprep.subr.mxu0 0.0
          %2694 = vmatpush1.msra.mxu0 %v2597
          %2695 = vmatprep.subr.mxu0 0.0
          %2696 = vmatpush1.msra.mxu0 0.0
          %2697 = vmatprep.subr.mxu0 0.0
          %2698 = vmatpush1.msra.mxu0 0.0
          %2699 = vmatprep.subr.mxu0 0.0
          %2700 = vmatpush1.msra.mxu0 0.0
          %2701 = vmatprep.subr.mxu0 0.0
          %2702 = vmatpush1.msra.mxu0 0.0
          %2703 = vmatprep.subr.mxu0 0.0
          %2704 = vmatpush1.msra.mxu0 0.0
          %2705 = vmatprep.subr.mxu0 0.0
          %2706 = vmatpush1.msra.mxu0 0.0
          %2707 = vmatprep.subr.mxu0 0.0
          %2708 = vmatpush1.msra.mxu0 0.0
          %2709 = vmatprep.subr.mxu0 0.0
          %2710 = vmatpush1.msra.mxu0 0.0
          %2711 = vmatprep.subr.mxu0 0.0
          %2712 = vmatpush1.msra.mxu0 0.0
          %2713 = vmatprep.subr.mxu0 0.0
          %2714 = vmatpush1.msra.mxu0 0.0
          %2715 = vmatprep.subr.mxu0 0.0
          %2716 = vmatpush1.msra.mxu0 0.0
          %2717 = vmatprep.subr.mxu0 0.0
          %2718 = vmatpush1.msra.mxu0 0.0
          %2719 = vmatprep.subr.mxu0 0.0
          %2720 = vmatpush1.msra.mxu0 0.0
          %2721 = vmatprep.subr.mxu0 0.0
          %2722 = vmatpush1.msra.mxu0 0.0
          %2723 = vmatprep.subr.mxu0 0.0
          %2724 = vmatpush1.msra.mxu0 0.0
          %2725 = vmatprep.subr.mxu0 0.0
          %2726 = vmatpush1.msra.mxu0 0.0
          %2727 = vmatprep.subr.mxu0 0.0
          %2728 = vmatpush1.msra.mxu0 0.0
          %2729 = vmatprep.subr.mxu0 0.0
          %2730 = vmatpush1.msra.mxu0 0.0
          %2731 = vmatprep.subr.mxu0 0.0
          %2732 = vmatpush1.msra.mxu0 0.0
          %2733 = vmatprep.subr.mxu0 0.0
          %2734 = vmatpush1.msra.mxu0 0.0
          %2735 = vmatprep.subr.mxu0 0.0
          %2736 = vmatpush1.msra.mxu0 0.0
          %2737 = vmatprep.subr.mxu0 0.0
          %2738 = vmatpush1.msra.mxu0 0.0
          %2739 = vmatprep.subr.mxu0 0.0
          %2740 = vmatpush1.msra.mxu0 0.0
          %2741 = vmatprep.subr.mxu0 0.0
          %2742 = vmatpush1.msra.mxu0 0.0
          %2743 = vmatprep.subr.mxu0 0.0
          %2744 = vmatpush1.msra.mxu0 0.0
          %2745 = vmatprep.subr.mxu0 0.0
          %2746 = vmatpush1.msra.mxu0 0.0
          %2747 = vmatprep.subr.mxu0 0.0
          %2748 = vmatpush1.msra.mxu0 0.0
          %2749 = vmatprep.subr.mxu0 0.0
          %2750 = vmatpush1.msra.mxu0 0.0
          %2751 = vmatprep.subr.mxu0 0.0
          %2752 = vmatpush1.msra.mxu0 0.0
          %2753 = vmatprep.subr.mxu0 0.0
          %2754 = vmatpush1.msra.mxu0 0.0
          %2755 = vmatprep.mubr.f32.mxu0 0.0
          %2756 = vmatmul.mubr.f32.gmra.mrb[0].mxu0 %v2686
          %v2757 = vpop.f32.mrb[0].mxu0
          %v2758 = vadd.f32 0.0, %v2757
          %v2759 = vpop.f32.mrb[0].mxu0
          %2760 = vmatprep.mubr.f32.mxu0 0.0
          %2761 = vmatmul.mubr.f32.gmra.mrb[0].mxu0 %v2689
          %v2762 = vpop.f32.mrb[0].mxu0
          %v2763 = vadd.f32 0.0, %v2762
          %v2764 = vpop.f32.mrb[0].mxu0
          %2765 = vdwg.mxu0
          %v2766 = vstv %s615
          %v2767 = vrsqrt.pop %v2766
          %s2768 = vtos %v2767
          %v2769 = vstv %s2768
          %v2770 = vmul.f32 %v2758, %v2769
          %v2771 = vmul.f32 %v2763, %v2769
          %v2772 = vsel %vm316, %v471, 0
          %2774 = vmatprep.subr.mxu0 0.0
          %2775 = vmatpush1.msra.mxu0 %v2770
          %2776 = vmatprep.subr.mxu0 0.0
          %2777 = vmatpush1.msra.mxu0 %v2771
          %2778 = vmatprep.subr.mxu0 0.0
          %2779 = vmatpush1.msra.mxu0 0.0
          %2780 = vmatprep.subr.mxu0 0.0
          %2781 = vmatpush1.msra.mxu0 0.0
          %2782 = vmatprep.subr.mxu0 0.0
          %2783 = vmatpush1.msra.mxu0 0.0
          %2784 = vmatprep.subr.mxu0 0.0
          %2785 = vmatpush1.msra.mxu0 0.0
          %2786 = vmatprep.subr.mxu0 0.0
          %2787 = vmatpush1.msra.mxu0 0.0
          %2788 = vmatprep.subr.mxu0 0.0
          %2789 = vmatpush1.msra.mxu0 0.0
          %2790 = vmatprep.subr.mxu0 0.0
          %2791 = vmatpush1.msra.mxu0 0.0
          %2792 = vmatprep.subr.mxu0 0.0
          %2793 = vmatpush1.msra.mxu0 0.0
          %2794 = vmatprep.subr.mxu0 0.0
          %2795 = vmatpush1.msra.mxu0 0.0
          %2796 = vmatprep.subr.mxu0 0.0
          %2797 = vmatpush1.msra.mxu0 0.0
          %2798 = vmatprep.subr.mxu0 0.0
          %2799 = vmatpush1.msra.mxu0 0.0
          %2800 = vmatprep.subr.mxu0 0.0
          %2801 = vmatpush1.msra.mxu0 0.0
          %2802 = vmatprep.subr.mxu0 0.0
          %2803 = vmatpush1.msra.mxu0 0.0
          %2804 = vmatprep.subr.mxu0 0.0
          %2805 = vmatpush1.msra.mxu0 0.0
          %2806 = vmatprep.subr.mxu0 0.0
          %2807 = vmatpush1.msra.mxu0 0.0
          %2808 = vmatprep.subr.mxu0 0.0
          %2809 = vmatpush1.msra.mxu0 0.0
          %2810 = vmatprep.subr.mxu0 0.0
          %2811 = vmatpush1.msra.mxu0 0.0
          %2812 = vmatprep.subr.mxu0 0.0
          %2813 = vmatpush1.msra.mxu0 0.0
          %2814 = vmatprep.subr.mxu0 0.0
          %2815 = vmatpush1.msra.mxu0 0.0
          %2816 = vmatprep.subr.mxu0 0.0
          %2817 = vmatpush1.msra.mxu0 0.0
          %2818 = vmatprep.subr.mxu0 0.0
          %2819 = vmatpush1.msra.mxu0 0.0
          %2820 = vmatprep.subr.mxu0 0.0
          %2821 = vmatpush1.msra.mxu0 0.0
          %2822 = vmatprep.subr.mxu0 0.0
          %2823 = vmatpush1.msra.mxu0 0.0
          %2824 = vmatprep.subr.mxu0 0.0
          %2825 = vmatpush1.msra.mxu0 0.0
          %2826 = vmatprep.subr.mxu0 0.0
          %2827 = vmatpush1.msra.mxu0 0.0
          %2828 = vmatprep.subr.mxu0 0.0
          %2829 = vmatpush1.msra.mxu0 0.0
          %2830 = vmatprep.subr.mxu0 0.0
          %2831 = vmatpush1.msra.mxu0 0.0
          %2832 = vmatprep.subr.mxu0 0.0
          %2833 = vmatpush1.msra.mxu0 0.0
          %2834 = vmatprep.subr.mxu0 0.0
          %2835 = vmatpush1.msra.mxu0 0.0
          %2836 = vmatprep.subr.mxu0 0.0
          %2837 = vmatpush1.msra.mxu0 0.0
          %2838 = vmatprep.mubr.f32.mxu0 0.0
          %2839 = vmatmul.mubr.f32.gmra.mrb[0].mxu0 %v2772
          %v2840 = vpop.f32.mrb[0].mxu0
          %v2841 = vadd.f32 0.0, %v2840
          %v2842 = vpop.f32.mrb[0].mxu0
          %2843 = vdwg.mxu0
          %v2844 = vsub.f32 0.0, %v2841
          %2845 = vst.msk [vmem:[#allocation4] sm:$0xff] %vm316, %v2770
          %2846 = vst.msk [vmem:[#allocation4 + $0x8] sm:$0xff] %vm316, %v2771
          %vm2847 = vcmask 122880
          %2848 = vst.msk [vmem:[#allocation6] sm:$0x1] %vm2847, %v2844
          %v2849 = vlaneseq
          %v2850 = vshrl.u32 %v2849, 7
          %v2851 = vsub.s32 0, %v2850
          %v2852 = vrot.slane %v471, %v2851
          %2853 = vrot.lane.b32.xlu0 %v2852, 112
          %v2854 = vpop.permute.xlu0 %2853
          %2856 = vxpose.xlu0.b32.start [1/16] %v2854, 128
          %2857 = vxpose.xlu0.b32.cont [2/16] 0.0, 128
          %2858 = vxpose.xlu0.b32.cont [3/16] 0.0, 128
          %2859 = vxpose.xlu0.b32.cont [4/16] 0.0, 128
          %2860 = vxpose.xlu0.b32.cont [5/16] 0.0, 128
          %2861 = vxpose.xlu0.b32.cont [6/16] 0.0, 128
          %2862 = vxpose.xlu0.b32.cont [7/16] 0.0, 128
          %2863 = vxpose.xlu0.b32.cont [8/16] 0.0, 128
          %2864 = vxpose.xlu0.b32.cont [9/16] 0.0, 128
          %2865 = vxpose.xlu0.b32.cont [10/16] 0.0, 128
          %2866 = vxpose.xlu0.b32.cont [11/16] 0.0, 128
          %2867 = vxpose.xlu0.b32.cont [12/16] 0.0, 128
          %2868 = vxpose.xlu0.b32.cont [13/16] 0.0, 128
          %2869 = vxpose.xlu0.b32.cont [14/16] 0.0, 128
          %2870 = vxpose.xlu0.b32.cont [15/16] 0.0, 128
          %2871 = vxpose.xlu0.b32.end [16/16] 0.0, 128
          %v2872 = vpop.trf.xlu0
          %v2873 = vpop.trf.xlu0
          %v2874 = vpop.trf.xlu0
          %v2875 = vpop.trf.xlu0
          %v2876 = vpop.trf.xlu0
          %v2877 = vpop.trf.xlu0
          %v2878 = vpop.trf.xlu0
          %v2879 = vpop.trf.xlu0
          %v2880 = vpop.trf.xlu0
          %v2881 = vpop.trf.xlu0
          %v2882 = vpop.trf.xlu0
          %v2883 = vpop.trf.xlu0
          %v2884 = vpop.trf.xlu0
          %v2885 = vpop.trf.xlu0
          %v2886 = vpop.trf.xlu0
          %v2887 = vpop.trf.xlu0
          %v2889 = vsel %vm504, %v2872, 0
          %v2892 = vsel %vm504, %v2873, 0
          %v2894 = vsel %vm511, %v2854, 0
          %2896 = vmatprep.subr.mxu0 0.0
          %2897 = vmatpush1.msra.mxu0 %v2894
          %2898 = vmatprep.subr.mxu0 0.0
          %2899 = vmatpush1.msra.mxu0 0.0
          %2900 = vmatprep.subr.mxu0 0.0
          %2901 = vmatpush1.msra.mxu0 0.0
          %2902 = vmatprep.subr.mxu0 0.0
          %2903 = vmatpush1.msra.mxu0 0.0
          %2904 = vmatprep.subr.mxu0 0.0
          %2905 = vmatpush1.msra.mxu0 0.0
          %2906 = vmatprep.subr.mxu0 0.0
          %2907 = vmatpush1.msra.mxu0 0.0
          %2908 = vmatprep.subr.mxu0 0.0
          %2909 = vmatpush1.msra.mxu0 0.0
          %2910 = vmatprep.subr.mxu0 0.0
          %2911 = vmatpush1.msra.mxu0 0.0
          %2912 = vmatprep.subr.mxu0 0.0
          %2913 = vmatpush1.msra.mxu0 0.0
          %2914 = vmatprep.subr.mxu0 0.0
          %2915 = vmatpush1.msra.mxu0 0.0
          %2916 = vmatprep.subr.mxu0 0.0
          %2917 = vmatpush1.msra.mxu0 0.0
          %2918 = vmatprep.subr.mxu0 0.0
          %2919 = vmatpush1.msra.mxu0 0.0
          %2920 = vmatprep.subr.mxu0 0.0
          %2921 = vmatpush1.msra.mxu0 0.0
          %2922 = vmatprep.subr.mxu0 0.0
          %2923 = vmatpush1.msra.mxu0 0.0
          %2924 = vmatprep.subr.mxu0 0.0
          %2925 = vmatpush1.msra.mxu0 0.0
          %2926 = vmatprep.subr.mxu0 0.0
          %2927 = vmatpush1.msra.mxu0 0.0
          %2928 = vmatprep.subr.mxu0 0.0
          %2929 = vmatpush1.msra.mxu0 0.0
          %2930 = vmatprep.subr.mxu0 0.0
          %2931 = vmatpush1.msra.mxu0 0.0
          %2932 = vmatprep.subr.mxu0 0.0
          %2933 = vmatpush1.msra.mxu0 0.0
          %2934 = vmatprep.subr.mxu0 0.0
          %2935 = vmatpush1.msra.mxu0 0.0
          %2936 = vmatprep.subr.mxu0 0.0
          %2937 = vmatpush1.msra.mxu0 0.0
          %2938 = vmatprep.subr.mxu0 0.0
          %2939 = vmatpush1.msra.mxu0 0.0
          %2940 = vmatprep.subr.mxu0 0.0
          %2941 = vmatpush1.msra.mxu0 0.0
          %2942 = vmatprep.subr.mxu0 0.0
          %2943 = vmatpush1.msra.mxu0 0.0
          %2944 = vmatprep.subr.mxu0 0.0
          %2945 = vmatpush1.msra.mxu0 0.0
          %2946 = vmatprep.subr.mxu0 0.0
          %2947 = vmatpush1.msra.mxu0 0.0
          %2948 = vmatprep.subr.mxu0 0.0
          %2949 = vmatpush1.msra.mxu0 0.0
          %2950 = vmatprep.subr.mxu0 0.0
          %2951 = vmatpush1.msra.mxu0 0.0
          %2952 = vmatprep.subr.mxu0 0.0
          %2953 = vmatpush1.msra.mxu0 0.0
          %2954 = vmatprep.subr.mxu0 0.0
          %2955 = vmatpush1.msra.mxu0 0.0
          %2956 = vmatprep.subr.mxu0 0.0
          %2957 = vmatpush1.msra.mxu0 0.0
          %2958 = vmatprep.subr.mxu0 0.0
          %2959 = vmatpush1.msra.mxu0 0.0
          %2960 = vmatprep.mubr.f32.mxu0 0.0
          %2961 = vmatmul.mubr.f32.gmra.mrb[0].mxu0 %v2889
          %v2962 = vpop.f32.mrb[0].mxu0
          %v2963 = vadd.f32 0.0, %v2962
          %v2964 = vpop.f32.mrb[0].mxu0
          %2965 = vmatprep.mubr.f32.mxu0 0.0
          %2966 = vmatmul.mubr.f32.gmra.mrb[0].mxu0 %v2892
          %v2967 = vpop.f32.mrb[0].mxu0
          %v2968 = vadd.f32 0.0, %v2967
          %v2969 = vpop.f32.mrb[0].mxu0
          %2970 = vdwg.mxu0
          %v2971 = vld [vmem:[%s319] sm:$0xff]
          %v2972 = vld [vmem:[%s319 + $0x8] sm:$0xff]
          %v2973 = vmul.f32 %v2963, 64.0
          %v2974 = vmul.f32 %v2968, 64.0
          %v2975 = vsub.f32 %v2971, %v2973
          %v2976 = vsub.f32 %v2972, %v2974
          %v2977 = vmul.f32 %v2975, 0.015873017
          %v2978 = vmul.f32 %v2976, 0.015873017
          %v2979 = vadd.f32 %v2977, %v598
          %v2980 = vadd.f32 %v2978, %v599
          %v2981 = vmul.f32 %v2979, %v468
          %v2982 = vmul.f32 %v2980, %v469
          %v2983 = vsel %vm316, %v2981, 0.0
          %v2984 = vsel %vm316, %v2982, 0.0
          %v2985 = vadd.f32 %v2983, %v2984
          %2986 = vadd.xlane.f32.xlu0 %v2985
          %v2987 = vpop.xlane.xlu0 %2986
          %v2988 = vrot.slane %v2987, 4
          %v2989 = vadd.f32 %v2987, %v2988
          %v2990 = vrot.slane %v2989, 2
          %v2991 = vadd.f32 %v2989, %v2990
          %v2992 = vrot.slane %v2991, 1
          %v2993 = vadd.f32 %v2991, %v2992
          %s2994 = vtos %v2993
          %v2995 = vstv %s2994
          %v2996 = vrcp.pop %v2995
          %s2997 = vtos %v2996
          %v2998 = vstv %s2997
          %v2999 = vmul.f32 %v2979, %v2998
          %v3000 = vmul.f32 %v2980, %v2998
          %3001 = vmatprep.subr.mxu0 0.0
          %3002 = vmatpush1.msra.mxu0 %v2999
          %3003 = vmatprep.subr.mxu0 0.0
          %3004 = vmatpush1.msra.mxu0 %v3000
          %3005 = vmatprep.subr.mxu0 0.0
          %3006 = vmatpush1.msra.mxu0 0.0
          %3007 = vmatprep.subr.mxu0 0.0
          %3008 = vmatpush1.msra.mxu0 0.0
          %3009 = vmatprep.subr.mxu0 0.0
          %3010 = vmatpush1.msra.mxu0 0.0
          %3011 = vmatprep.subr.mxu0 0.0
          %3012 = vmatpush1.msra.mxu0 0.0
          %3013 = vmatprep.subr.mxu0 0.0
          %3014 = vmatpush1.msra.mxu0 0.0
          %3015 = vmatprep.subr.mxu0 0.0
          %3016 = vmatpush1.msra.mxu0 0.0
          %3017 = vmatprep.subr.mxu0 0.0
          %3018 = vmatpush1.msra.mxu0 0.0
          %3019 = vmatprep.subr.mxu0 0.0
          %3020 = vmatpush1.msra.mxu0 0.0
          %3021 = vmatprep.subr.mxu0 0.0
          %3022 = vmatpush1.msra.mxu0 0.0
          %3023 = vmatprep.subr.mxu0 0.0
          %3024 = vmatpush1.msra.mxu0 0.0
          %3025 = vmatprep.subr.mxu0 0.0
          %3026 = vmatpush1.msra.mxu0 0.0
          %3027 = vmatprep.subr.mxu0 0.0
          %3028 = vmatpush1.msra.mxu0 0.0
          %3029 = vmatprep.subr.mxu0 0.0
          %3030 = vmatpush1.msra.mxu0 0.0
          %3031 = vmatprep.subr.mxu0 0.0
          %3032 = vmatpush1.msra.mxu0 0.0
          %3033 = vmatprep.subr.mxu0 0.0
          %3034 = vmatpush1.msra.mxu0 0.0
          %3035 = vmatprep.subr.mxu0 0.0
          %3036 = vmatpush1.msra.mxu0 0.0
          %3037 = vmatprep.subr.mxu0 0.0
          %3038 = vmatpush1.msra.mxu0 0.0
          %3039 = vmatprep.subr.mxu0 0.0
          %3040 = vmatpush1.msra.mxu0 0.0
          %3041 = vmatprep.subr.mxu0 0.0
          %3042 = vmatpush1.msra.mxu0 0.0
          %3043 = vmatprep.subr.mxu0 0.0
          %3044 = vmatpush1.msra.mxu0 0.0
          %3045 = vmatprep.subr.mxu0 0.0
          %3046 = vmatpush1.msra.mxu0 0.0
          %3047 = vmatprep.subr.mxu0 0.0
          %3048 = vmatpush1.msra.mxu0 0.0
          %3049 = vmatprep.subr.mxu0 0.0
          %3050 = vmatpush1.msra.mxu0 0.0
          %3051 = vmatprep.subr.mxu0 0.0
          %3052 = vmatpush1.msra.mxu0 0.0
          %3053 = vmatprep.subr.mxu0 0.0
          %3054 = vmatpush1.msra.mxu0 0.0
          %3055 = vmatprep.subr.mxu0 0.0
          %3056 = vmatpush1.msra.mxu0 0.0
          %3057 = vmatprep.subr.mxu0 0.0
          %3058 = vmatpush1.msra.mxu0 0.0
          %3059 = vmatprep.subr.mxu0 0.0
          %3060 = vmatpush1.msra.mxu0 0.0
          %3061 = vmatprep.subr.mxu0 0.0
          %3062 = vmatpush1.msra.mxu0 0.0
          %3063 = vmatprep.subr.mxu0 0.0
          %3064 = vmatpush1.msra.mxu0 0.0
          %3065 = vmatprep.mubr.f32.mxu0 0.0
          %3066 = vmatmul.mubr.f32.gmra.mrb[0].mxu0 %v625
          %v3067 = vpop.f32.mrb[0].mxu0
          %v3068 = vadd.f32 0.0, %v3067
          %v3069 = vpop.f32.mrb[0].mxu0
          %3070 = vmatprep.mubr.f32.mxu0 0.0
          %3071 = vmatmul.mubr.f32.gmra.mrb[0].mxu0 %v628
          %v3072 = vpop.f32.mrb[0].mxu0
          %v3073 = vadd.f32 0.0, %v3072
          %v3074 = vpop.f32.mrb[0].mxu0
          %3075 = vdwg.mxu0
          %v3076 = vsub.f32 %v622, %v3068
          %v3077 = vsub.f32 %v623, %v3073
          %v3078 = vmul.f32 %v3076, 0.5
          %v3079 = vmul.f32 %v3077, 0.5
          %v3081 = vsel %vm316, %v2999, 0
          %v3084 = vsel %vm316, %v3000, 0
          %3086 = vmatprep.subr.mxu0 0.0
          %3087 = vmatpush1.msra.mxu0 %v3078
          %3088 = vmatprep.subr.mxu0 0.0
          %3089 = vmatpush1.msra.mxu0 %v3079
          %3090 = vmatprep.subr.mxu0 0.0
          %3091 = vmatpush1.msra.mxu0 0.0
          %3092 = vmatprep.subr.mxu0 0.0
          %3093 = vmatpush1.msra.mxu0 0.0
          %3094 = vmatprep.subr.mxu0 0.0
          %3095 = vmatpush1.msra.mxu0 0.0
          %3096 = vmatprep.subr.mxu0 0.0
          %3097 = vmatpush1.msra.mxu0 0.0
          %3098 = vmatprep.subr.mxu0 0.0
          %3099 = vmatpush1.msra.mxu0 0.0
          %3100 = vmatprep.subr.mxu0 0.0
          %3101 = vmatpush1.msra.mxu0 0.0
          %3102 = vmatprep.subr.mxu0 0.0
          %3103 = vmatpush1.msra.mxu0 0.0
          %3104 = vmatprep.subr.mxu0 0.0
          %3105 = vmatpush1.msra.mxu0 0.0
          %3106 = vmatprep.subr.mxu0 0.0
          %3107 = vmatpush1.msra.mxu0 0.0
          %3108 = vmatprep.subr.mxu0 0.0
          %3109 = vmatpush1.msra.mxu0 0.0
          %3110 = vmatprep.subr.mxu0 0.0
          %3111 = vmatpush1.msra.mxu0 0.0
          %3112 = vmatprep.subr.mxu0 0.0
          %3113 = vmatpush1.msra.mxu0 0.0
          %3114 = vmatprep.subr.mxu0 0.0
          %3115 = vmatpush1.msra.mxu0 0.0
          %3116 = vmatprep.subr.mxu0 0.0
          %3117 = vmatpush1.msra.mxu0 0.0
          %3118 = vmatprep.subr.mxu0 0.0
          %3119 = vmatpush1.msra.mxu0 0.0
          %3120 = vmatprep.subr.mxu0 0.0
          %3121 = vmatpush1.msra.mxu0 0.0
          %3122 = vmatprep.subr.mxu0 0.0
          %3123 = vmatpush1.msra.mxu0 0.0
          %3124 = vmatprep.subr.mxu0 0.0
          %3125 = vmatpush1.msra.mxu0 0.0
          %3126 = vmatprep.subr.mxu0 0.0
          %3127 = vmatpush1.msra.mxu0 0.0
          %3128 = vmatprep.subr.mxu0 0.0
          %3129 = vmatpush1.msra.mxu0 0.0
          %3130 = vmatprep.subr.mxu0 0.0
          %3131 = vmatpush1.msra.mxu0 0.0
          %3132 = vmatprep.subr.mxu0 0.0
          %3133 = vmatpush1.msra.mxu0 0.0
          %3134 = vmatprep.subr.mxu0 0.0
          %3135 = vmatpush1.msra.mxu0 0.0
          %3136 = vmatprep.subr.mxu0 0.0
          %3137 = vmatpush1.msra.mxu0 0.0
          %3138 = vmatprep.subr.mxu0 0.0
          %3139 = vmatpush1.msra.mxu0 0.0
          %3140 = vmatprep.subr.mxu0 0.0
          %3141 = vmatpush1.msra.mxu0 0.0
          %3142 = vmatprep.subr.mxu0 0.0
          %3143 = vmatpush1.msra.mxu0 0.0
          %3144 = vmatprep.subr.mxu0 0.0
          %3145 = vmatpush1.msra.mxu0 0.0
          %3146 = vmatprep.subr.mxu0 0.0
          %3147 = vmatpush1.msra.mxu0 0.0
          %3148 = vmatprep.subr.mxu0 0.0
          %3149 = vmatpush1.msra.mxu0 0.0
          %3150 = vmatprep.mubr.f32.mxu0 0.0
          %3151 = vmatmul.mubr.f32.gmra.mrb[0].mxu0 %v3081
          %v3152 = vpop.f32.mrb[0].mxu0
          %v3153 = vadd.f32 0.0, %v3152
          %v3154 = vpop.f32.mrb[0].mxu0
          %3155 = vmatprep.mubr.f32.mxu0 0.0
          %3156 = vmatmul.mubr.f32.gmra.mrb[0].mxu0 %v3084
          %v3157 = vpop.f32.mrb[0].mxu0
          %v3158 = vadd.f32 0.0, %v3157
          %v3159 = vpop.f32.mrb[0].mxu0
          %3160 = vdwg.mxu0
          %v3162 = vsel %vm316, %v3078, 0
          %v3165 = vsel %vm316, %v3079, 0
          %3167 = vmatprep.subr.mxu0 0.0
          %3168 = vmatpush1.msra.mxu0 %v468
          %3169 = vmatprep.subr.mxu0 0.0
          %3170 = vmatpush1.msra.mxu0 %v469
          %3171 = vmatprep.subr.mxu0 0.0
          %3172 = vmatpush1.msra.mxu0 0.0
          %3173 = vmatprep.subr.mxu0 0.0
          %3174 = vmatpush1.msra.mxu0 0.0
          %3175 = vmatprep.subr.mxu0 0.0
          %3176 = vmatpush1.msra.mxu0 0.0
          %3177 = vmatprep.subr.mxu0 0.0
          %3178 = vmatpush1.msra.mxu0 0.0
          %3179 = vmatprep.subr.mxu0 0.0
          %3180 = vmatpush1.msra.mxu0 0.0
          %3181 = vmatprep.subr.mxu0 0.0
          %3182 = vmatpush1.msra.mxu0 0.0
          %3183 = vmatprep.subr.mxu0 0.0
          %3184 = vmatpush1.msra.mxu0 0.0
          %3185 = vmatprep.subr.mxu0 0.0
          %3186 = vmatpush1.msra.mxu0 0.0
          %3187 = vmatprep.subr.mxu0 0.0
          %3188 = vmatpush1.msra.mxu0 0.0
          %3189 = vmatprep.subr.mxu0 0.0
          %3190 = vmatpush1.msra.mxu0 0.0
          %3191 = vmatprep.subr.mxu0 0.0
          %3192 = vmatpush1.msra.mxu0 0.0
          %3193 = vmatprep.subr.mxu0 0.0
          %3194 = vmatpush1.msra.mxu0 0.0
          %3195 = vmatprep.subr.mxu0 0.0
          %3196 = vmatpush1.msra.mxu0 0.0
          %3197 = vmatprep.subr.mxu0 0.0
          %3198 = vmatpush1.msra.mxu0 0.0
          %3199 = vmatprep.subr.mxu0 0.0
          %3200 = vmatpush1.msra.mxu0 0.0
          %3201 = vmatprep.subr.mxu0 0.0
          %3202 = vmatpush1.msra.mxu0 0.0
          %3203 = vmatprep.subr.mxu0 0.0
          %3204 = vmatpush1.msra.mxu0 0.0
          %3205 = vmatprep.subr.mxu0 0.0
          %3206 = vmatpush1.msra.mxu0 0.0
          %3207 = vmatprep.subr.mxu0 0.0
          %3208 = vmatpush1.msra.mxu0 0.0
          %3209 = vmatprep.subr.mxu0 0.0
          %3210 = vmatpush1.msra.mxu0 0.0
          %3211 = vmatprep.subr.mxu0 0.0
          %3212 = vmatpush1.msra.mxu0 0.0
          %3213 = vmatprep.subr.mxu0 0.0
          %3214 = vmatpush1.msra.mxu0 0.0
          %3215 = vmatprep.subr.mxu0 0.0
          %3216 = vmatpush1.msra.mxu0 0.0
          %3217 = vmatprep.subr.mxu0 0.0
          %3218 = vmatpush1.msra.mxu0 0.0
          %3219 = vmatprep.subr.mxu0 0.0
          %3220 = vmatpush1.msra.mxu0 0.0
          %3221 = vmatprep.subr.mxu0 0.0
          %3222 = vmatpush1.msra.mxu0 0.0
          %3223 = vmatprep.subr.mxu0 0.0
          %3224 = vmatpush1.msra.mxu0 0.0
          %3225 = vmatprep.subr.mxu0 0.0
          %3226 = vmatpush1.msra.mxu0 0.0
          %3227 = vmatprep.subr.mxu0 0.0
          %3228 = vmatpush1.msra.mxu0 0.0
          %3229 = vmatprep.subr.mxu0 0.0
          %3230 = vmatpush1.msra.mxu0 0.0
          %3231 = vmatprep.mubr.f32.mxu0 0.0
          %3232 = vmatmul.mubr.f32.gmra.mrb[0].mxu0 %v3162
          %v3233 = vpop.f32.mrb[0].mxu0
          %v3234 = vadd.f32 0.0, %v3233
          %v3235 = vpop.f32.mrb[0].mxu0
          %3236 = vmatprep.mubr.f32.mxu0 0.0
          %3237 = vmatmul.mubr.f32.gmra.mrb[0].mxu0 %v3165
          %v3238 = vpop.f32.mrb[0].mxu0
          %v3239 = vadd.f32 0.0, %v3238
          %v3240 = vpop.f32.mrb[0].mxu0
          %3241 = vdwg.mxu0
          %v3243 = vsel %vm316, %v3234, 0
          %v3246 = vsel %vm316, %v3239, 0
          %3248 = vmatprep.subr.mxu0 0.0
          %3249 = vmatpush1.msra.mxu0 %v3153
          %3250 = vmatprep.subr.mxu0 0.0
          %3251 = vmatpush1.msra.mxu0 %v3158
          %3252 = vmatprep.subr.mxu0 0.0
          %3253 = vmatpush1.msra.mxu0 0.0
          %3254 = vmatprep.subr.mxu0 0.0
          %3255 = vmatpush1.msra.mxu0 0.0
          %3256 = vmatprep.subr.mxu0 0.0
          %3257 = vmatpush1.msra.mxu0 0.0
          %3258 = vmatprep.subr.mxu0 0.0
          %3259 = vmatpush1.msra.mxu0 0.0
          %3260 = vmatprep.subr.mxu0 0.0
          %3261 = vmatpush1.msra.mxu0 0.0
          %3262 = vmatprep.subr.mxu0 0.0
          %3263 = vmatpush1.msra.mxu0 0.0
          %3264 = vmatprep.subr.mxu0 0.0
          %3265 = vmatpush1.msra.mxu0 0.0
          %3266 = vmatprep.subr.mxu0 0.0
          %3267 = vmatpush1.msra.mxu0 0.0
          %3268 = vmatprep.subr.mxu0 0.0
          %3269 = vmatpush1.msra.mxu0 0.0
          %3270 = vmatprep.subr.mxu0 0.0
          %3271 = vmatpush1.msra.mxu0 0.0
          %3272 = vmatprep.subr.mxu0 0.0
          %3273 = vmatpush1.msra.mxu0 0.0
          %3274 = vmatprep.subr.mxu0 0.0
          %3275 = vmatpush1.msra.mxu0 0.0
          %3276 = vmatprep.subr.mxu0 0.0
          %3277 = vmatpush1.msra.mxu0 0.0
          %3278 = vmatprep.subr.mxu0 0.0
          %3279 = vmatpush1.msra.mxu0 0.0
          %3280 = vmatprep.subr.mxu0 0.0
          %3281 = vmatpush1.msra.mxu0 0.0
          %3282 = vmatprep.subr.mxu0 0.0
          %3283 = vmatpush1.msra.mxu0 0.0
          %3284 = vmatprep.subr.mxu0 0.0
          %3285 = vmatpush1.msra.mxu0 0.0
          %3286 = vmatprep.subr.mxu0 0.0
          %3287 = vmatpush1.msra.mxu0 0.0
          %3288 = vmatprep.subr.mxu0 0.0
          %3289 = vmatpush1.msra.mxu0 0.0
          %3290 = vmatprep.subr.mxu0 0.0
          %3291 = vmatpush1.msra.mxu0 0.0
          %3292 = vmatprep.subr.mxu0 0.0
          %3293 = vmatpush1.msra.mxu0 0.0
          %3294 = vmatprep.subr.mxu0 0.0
          %3295 = vmatpush1.msra.mxu0 0.0
          %3296 = vmatprep.subr.mxu0 0.0
          %3297 = vmatpush1.msra.mxu0 0.0
          %3298 = vmatprep.subr.mxu0 0.0
          %3299 = vmatpush1.msra.mxu0 0.0
          %3300 = vmatprep.subr.mxu0 0.0
          %3301 = vmatpush1.msra.mxu0 0.0
          %3302 = vmatprep.subr.mxu0 0.0
          %3303 = vmatpush1.msra.mxu0 0.0
          %3304 = vmatprep.subr.mxu0 0.0
          %3305 = vmatpush1.msra.mxu0 0.0
          %3306 = vmatprep.subr.mxu0 0.0
          %3307 = vmatpush1.msra.mxu0 0.0
          %3308 = vmatprep.subr.mxu0 0.0
          %3309 = vmatpush1.msra.mxu0 0.0
          %3310 = vmatprep.subr.mxu0 0.0
          %3311 = vmatpush1.msra.mxu0 0.0
          %3312 = vmatprep.mubr.f32.mxu0 0.0
          %3313 = vmatmul.mubr.f32.gmra.mrb[0].mxu0 %v3243
          %v3314 = vpop.f32.mrb[0].mxu0
          %v3315 = vadd.f32 0.0, %v3314
          %v3316 = vpop.f32.mrb[0].mxu0
          %3317 = vmatprep.mubr.f32.mxu0 0.0
          %3318 = vmatmul.mubr.f32.gmra.mrb[0].mxu0 %v3246
          %v3319 = vpop.f32.mrb[0].mxu0
          %v3320 = vadd.f32 0.0, %v3319
          %v3321 = vpop.f32.mrb[0].mxu0
          %3322 = vdwg.mxu0
          %v3323 = vsub.f32 %v622, %v3315
          %v3324 = vsub.f32 %v623, %v3320
          %v3325 = vmul.f32 %v3323, 0.5
          %v3326 = vmul.f32 %v3324, 0.5
          %v3328 = vsel %vm316, %v3153, 0
          %v3331 = vsel %vm316, %v3158, 0
          %3333 = vmatprep.subr.mxu0 0.0
          %3334 = vmatpush1.msra.mxu0 %v3325
          %3335 = vmatprep.subr.mxu0 0.0
          %3336 = vmatpush1.msra.mxu0 %v3326
          %3337 = vmatprep.subr.mxu0 0.0
          %3338 = vmatpush1.msra.mxu0 0.0
          %3339 = vmatprep.subr.mxu0 0.0
          %3340 = vmatpush1.msra.mxu0 0.0
          %3341 = vmatprep.subr.mxu0 0.0
          %3342 = vmatpush1.msra.mxu0 0.0
          %3343 = vmatprep.subr.mxu0 0.0
          %3344 = vmatpush1.msra.mxu0 0.0
          %3345 = vmatprep.subr.mxu0 0.0
          %3346 = vmatpush1.msra.mxu0 0.0
          %3347 = vmatprep.subr.mxu0 0.0
          %3348 = vmatpush1.msra.mxu0 0.0
          %3349 = vmatprep.subr.mxu0 0.0
          %3350 = vmatpush1.msra.mxu0 0.0
          %3351 = vmatprep.subr.mxu0 0.0
          %3352 = vmatpush1.msra.mxu0 0.0
          %3353 = vmatprep.subr.mxu0 0.0
          %3354 = vmatpush1.msra.mxu0 0.0
          %3355 = vmatprep.subr.mxu0 0.0
          %3356 = vmatpush1.msra.mxu0 0.0
          %3357 = vmatprep.subr.mxu0 0.0
          %3358 = vmatpush1.msra.mxu0 0.0
          %3359 = vmatprep.subr.mxu0 0.0
          %3360 = vmatpush1.msra.mxu0 0.0
          %3361 = vmatprep.subr.mxu0 0.0
          %3362 = vmatpush1.msra.mxu0 0.0
          %3363 = vmatprep.subr.mxu0 0.0
          %3364 = vmatpush1.msra.mxu0 0.0
          %3365 = vmatprep.subr.mxu0 0.0
          %3366 = vmatpush1.msra.mxu0 0.0
          %3367 = vmatprep.subr.mxu0 0.0
          %3368 = vmatpush1.msra.mxu0 0.0
          %3369 = vmatprep.subr.mxu0 0.0
          %3370 = vmatpush1.msra.mxu0 0.0
          %3371 = vmatprep.subr.mxu0 0.0
          %3372 = vmatpush1.msra.mxu0 0.0
          %3373 = vmatprep.subr.mxu0 0.0
          %3374 = vmatpush1.msra.mxu0 0.0
          %3375 = vmatprep.subr.mxu0 0.0
          %3376 = vmatpush1.msra.mxu0 0.0
          %3377 = vmatprep.subr.mxu0 0.0
          %3378 = vmatpush1.msra.mxu0 0.0
          %3379 = vmatprep.subr.mxu0 0.0
          %3380 = vmatpush1.msra.mxu0 0.0
          %3381 = vmatprep.subr.mxu0 0.0
          %3382 = vmatpush1.msra.mxu0 0.0
          %3383 = vmatprep.subr.mxu0 0.0
          %3384 = vmatpush1.msra.mxu0 0.0
          %3385 = vmatprep.subr.mxu0 0.0
          %3386 = vmatpush1.msra.mxu0 0.0
          %3387 = vmatprep.subr.mxu0 0.0
          %3388 = vmatpush1.msra.mxu0 0.0
          %3389 = vmatprep.subr.mxu0 0.0
          %3390 = vmatpush1.msra.mxu0 0.0
          %3391 = vmatprep.subr.mxu0 0.0
          %3392 = vmatpush1.msra.mxu0 0.0
          %3393 = vmatprep.subr.mxu0 0.0
          %3394 = vmatpush1.msra.mxu0 0.0
          %3395 = vmatprep.subr.mxu0 0.0
          %3396 = vmatpush1.msra.mxu0 0.0
          %3397 = vmatprep.mubr.f32.mxu0 0.0
          %3398 = vmatmul.mubr.f32.gmra.mrb[0].mxu0 %v3328
          %v3399 = vpop.f32.mrb[0].mxu0
          %v3400 = vadd.f32 0.0, %v3399
          %v3401 = vpop.f32.mrb[0].mxu0
          %3402 = vmatprep.mubr.f32.mxu0 0.0
          %3403 = vmatmul.mubr.f32.gmra.mrb[0].mxu0 %v3331
          %v3404 = vpop.f32.mrb[0].mxu0
          %v3405 = vadd.f32 0.0, %v3404
          %v3406 = vpop.f32.mrb[0].mxu0
          %3407 = vdwg.mxu0
          %v3409 = vsel %vm316, %v3325, 0
          %v3412 = vsel %vm316, %v3326, 0
          %3414 = vmatprep.subr.mxu0 0.0
          %3415 = vmatpush1.msra.mxu0 %v3234
          %3416 = vmatprep.subr.mxu0 0.0
          %3417 = vmatpush1.msra.mxu0 %v3239
          %3418 = vmatprep.subr.mxu0 0.0
          %3419 = vmatpush1.msra.mxu0 0.0
          %3420 = vmatprep.subr.mxu0 0.0
          %3421 = vmatpush1.msra.mxu0 0.0
          %3422 = vmatprep.subr.mxu0 0.0
          %3423 = vmatpush1.msra.mxu0 0.0
          %3424 = vmatprep.subr.mxu0 0.0
          %3425 = vmatpush1.msra.mxu0 0.0
          %3426 = vmatprep.subr.mxu0 0.0
          %3427 = vmatpush1.msra.mxu0 0.0
          %3428 = vmatprep.subr.mxu0 0.0
          %3429 = vmatpush1.msra.mxu0 0.0
          %3430 = vmatprep.subr.mxu0 0.0
          %3431 = vmatpush1.msra.mxu0 0.0
          %3432 = vmatprep.subr.mxu0 0.0
          %3433 = vmatpush1.msra.mxu0 0.0
          %3434 = vmatprep.subr.mxu0 0.0
          %3435 = vmatpush1.msra.mxu0 0.0
          %3436 = vmatprep.subr.mxu0 0.0
          %3437 = vmatpush1.msra.mxu0 0.0
          %3438 = vmatprep.subr.mxu0 0.0
          %3439 = vmatpush1.msra.mxu0 0.0
          %3440 = vmatprep.subr.mxu0 0.0
          %3441 = vmatpush1.msra.mxu0 0.0
          %3442 = vmatprep.subr.mxu0 0.0
          %3443 = vmatpush1.msra.mxu0 0.0
          %3444 = vmatprep.subr.mxu0 0.0
          %3445 = vmatpush1.msra.mxu0 0.0
          %3446 = vmatprep.subr.mxu0 0.0
          %3447 = vmatpush1.msra.mxu0 0.0
          %3448 = vmatprep.subr.mxu0 0.0
          %3449 = vmatpush1.msra.mxu0 0.0
          %3450 = vmatprep.subr.mxu0 0.0
          %3451 = vmatpush1.msra.mxu0 0.0
          %3452 = vmatprep.subr.mxu0 0.0
          %3453 = vmatpush1.msra.mxu0 0.0
          %3454 = vmatprep.subr.mxu0 0.0
          %3455 = vmatpush1.msra.mxu0 0.0
          %3456 = vmatprep.subr.mxu0 0.0
          %3457 = vmatpush1.msra.mxu0 0.0
          %3458 = vmatprep.subr.mxu0 0.0
          %3459 = vmatpush1.msra.mxu0 0.0
          %3460 = vmatprep.subr.mxu0 0.0
          %3461 = vmatpush1.msra.mxu0 0.0
          %3462 = vmatprep.subr.mxu0 0.0
          %3463 = vmatpush1.msra.mxu0 0.0
          %3464 = vmatprep.subr.mxu0 0.0
          %3465 = vmatpush1.msra.mxu0 0.0
          %3466 = vmatprep.subr.mxu0 0.0
          %3467 = vmatpush1.msra.mxu0 0.0
          %3468 = vmatprep.subr.mxu0 0.0
          %3469 = vmatpush1.msra.mxu0 0.0
          %3470 = vmatprep.subr.mxu0 0.0
          %3471 = vmatpush1.msra.mxu0 0.0
          %3472 = vmatprep.subr.mxu0 0.0
          %3473 = vmatpush1.msra.mxu0 0.0
          %3474 = vmatprep.subr.mxu0 0.0
          %3475 = vmatpush1.msra.mxu0 0.0
          %3476 = vmatprep.subr.mxu0 0.0
          %3477 = vmatpush1.msra.mxu0 0.0
          %3478 = vmatprep.mubr.f32.mxu0 0.0
          %3479 = vmatmul.mubr.f32.gmra.mrb[0].mxu0 %v3409
          %v3480 = vpop.f32.mrb[0].mxu0
          %v3481 = vadd.f32 0.0, %v3480
          %v3482 = vpop.f32.mrb[0].mxu0
          %3483 = vmatprep.mubr.f32.mxu0 0.0
          %3484 = vmatmul.mubr.f32.gmra.mrb[0].mxu0 %v3412
          %v3485 = vpop.f32.mrb[0].mxu0
          %v3486 = vadd.f32 0.0, %v3485
          %v3487 = vpop.f32.mrb[0].mxu0
          %3488 = vdwg.mxu0
          %v3490 = vsel %vm316, %v3481, 0
          %v3493 = vsel %vm316, %v3486, 0
          %3495 = vmatprep.subr.mxu0 0.0
          %3496 = vmatpush1.msra.mxu0 %v3400
          %3497 = vmatprep.subr.mxu0 0.0
          %3498 = vmatpush1.msra.mxu0 %v3405
          %3499 = vmatprep.subr.mxu0 0.0
          %3500 = vmatpush1.msra.mxu0 0.0
          %3501 = vmatprep.subr.mxu0 0.0
          %3502 = vmatpush1.msra.mxu0 0.0
          %3503 = vmatprep.subr.mxu0 0.0
          %3504 = vmatpush1.msra.mxu0 0.0
          %3505 = vmatprep.subr.mxu0 0.0
          %3506 = vmatpush1.msra.mxu0 0.0
          %3507 = vmatprep.subr.mxu0 0.0
          %3508 = vmatpush1.msra.mxu0 0.0
          %3509 = vmatprep.subr.mxu0 0.0
          %3510 = vmatpush1.msra.mxu0 0.0
          %3511 = vmatprep.subr.mxu0 0.0
          %3512 = vmatpush1.msra.mxu0 0.0
          %3513 = vmatprep.subr.mxu0 0.0
          %3514 = vmatpush1.msra.mxu0 0.0
          %3515 = vmatprep.subr.mxu0 0.0
          %3516 = vmatpush1.msra.mxu0 0.0
          %3517 = vmatprep.subr.mxu0 0.0
          %3518 = vmatpush1.msra.mxu0 0.0
          %3519 = vmatprep.subr.mxu0 0.0
          %3520 = vmatpush1.msra.mxu0 0.0
          %3521 = vmatprep.subr.mxu0 0.0
          %3522 = vmatpush1.msra.mxu0 0.0
          %3523 = vmatprep.subr.mxu0 0.0
          %3524 = vmatpush1.msra.mxu0 0.0
          %3525 = vmatprep.subr.mxu0 0.0
          %3526 = vmatpush1.msra.mxu0 0.0
          %3527 = vmatprep.subr.mxu0 0.0
          %3528 = vmatpush1.msra.mxu0 0.0
          %3529 = vmatprep.subr.mxu0 0.0
          %3530 = vmatpush1.msra.mxu0 0.0
          %3531 = vmatprep.subr.mxu0 0.0
          %3532 = vmatpush1.msra.mxu0 0.0
          %3533 = vmatprep.subr.mxu0 0.0
          %3534 = vmatpush1.msra.mxu0 0.0
          %3535 = vmatprep.subr.mxu0 0.0
          %3536 = vmatpush1.msra.mxu0 0.0
          %3537 = vmatprep.subr.mxu0 0.0
          %3538 = vmatpush1.msra.mxu0 0.0
          %3539 = vmatprep.subr.mxu0 0.0
          %3540 = vmatpush1.msra.mxu0 0.0
          %3541 = vmatprep.subr.mxu0 0.0
          %3542 = vmatpush1.msra.mxu0 0.0
          %3543 = vmatprep.subr.mxu0 0.0
          %3544 = vmatpush1.msra.mxu0 0.0
          %3545 = vmatprep.subr.mxu0 0.0
          %3546 = vmatpush1.msra.mxu0 0.0
          %3547 = vmatprep.subr.mxu0 0.0
          %3548 = vmatpush1.msra.mxu0 0.0
          %3549 = vmatprep.subr.mxu0 0.0
          %3550 = vmatpush1.msra.mxu0 0.0
          %3551 = vmatprep.subr.mxu0 0.0
          %3552 = vmatpush1.msra.mxu0 0.0
          %3553 = vmatprep.subr.mxu0 0.0
          %3554 = vmatpush1.msra.mxu0 0.0
          %3555 = vmatprep.subr.mxu0 0.0
          %3556 = vmatpush1.msra.mxu0 0.0
          %3557 = vmatprep.subr.mxu0 0.0
          %3558 = vmatpush1.msra.mxu0 0.0
          %3559 = vmatprep.mubr.f32.mxu0 0.0
          %3560 = vmatmul.mubr.f32.gmra.mrb[0].mxu0 %v3490
          %v3561 = vpop.f32.mrb[0].mxu0
          %v3562 = vadd.f32 0.0, %v3561
          %v3563 = vpop.f32.mrb[0].mxu0
          %3564 = vmatprep.mubr.f32.mxu0 0.0
          %3565 = vmatmul.mubr.f32.gmra.mrb[0].mxu0 %v3493
          %v3566 = vpop.f32.mrb[0].mxu0
          %v3567 = vadd.f32 0.0, %v3566
          %v3568 = vpop.f32.mrb[0].mxu0
          %3569 = vdwg.mxu0
          %v3570 = vsub.f32 %v622, %v3562
          %v3571 = vsub.f32 %v623, %v3567
          %v3572 = vmul.f32 %v3570, 0.5
          %v3573 = vmul.f32 %v3571, 0.5
          %v3575 = vsel %vm316, %v3400, 0
          %v3578 = vsel %vm316, %v3405, 0
          %3580 = vmatprep.subr.mxu0 0.0
          %3581 = vmatpush1.msra.mxu0 %v3572
          %3582 = vmatprep.subr.mxu0 0.0
          %3583 = vmatpush1.msra.mxu0 %v3573
          %3584 = vmatprep.subr.mxu0 0.0
          %3585 = vmatpush1.msra.mxu0 0.0
          %3586 = vmatprep.subr.mxu0 0.0
          %3587 = vmatpush1.msra.mxu0 0.0
          %3588 = vmatprep.subr.mxu0 0.0
          %3589 = vmatpush1.msra.mxu0 0.0
          %3590 = vmatprep.subr.mxu0 0.0
          %3591 = vmatpush1.msra.mxu0 0.0
          %3592 = vmatprep.subr.mxu0 0.0
          %3593 = vmatpush1.msra.mxu0 0.0
          %3594 = vmatprep.subr.mxu0 0.0
          %3595 = vmatpush1.msra.mxu0 0.0
          %3596 = vmatprep.subr.mxu0 0.0
          %3597 = vmatpush1.msra.mxu0 0.0
          %3598 = vmatprep.subr.mxu0 0.0
          %3599 = vmatpush1.msra.mxu0 0.0
          %3600 = vmatprep.subr.mxu0 0.0
          %3601 = vmatpush1.msra.mxu0 0.0
          %3602 = vmatprep.subr.mxu0 0.0
          %3603 = vmatpush1.msra.mxu0 0.0
          %3604 = vmatprep.subr.mxu0 0.0
          %3605 = vmatpush1.msra.mxu0 0.0
          %3606 = vmatprep.subr.mxu0 0.0
          %3607 = vmatpush1.msra.mxu0 0.0
          %3608 = vmatprep.subr.mxu0 0.0
          %3609 = vmatpush1.msra.mxu0 0.0
          %3610 = vmatprep.subr.mxu0 0.0
          %3611 = vmatpush1.msra.mxu0 0.0
          %3612 = vmatprep.subr.mxu0 0.0
          %3613 = vmatpush1.msra.mxu0 0.0
          %3614 = vmatprep.subr.mxu0 0.0
          %3615 = vmatpush1.msra.mxu0 0.0
          %3616 = vmatprep.subr.mxu0 0.0
          %3617 = vmatpush1.msra.mxu0 0.0
          %3618 = vmatprep.subr.mxu0 0.0
          %3619 = vmatpush1.msra.mxu0 0.0
          %3620 = vmatprep.subr.mxu0 0.0
          %3621 = vmatpush1.msra.mxu0 0.0
          %3622 = vmatprep.subr.mxu0 0.0
          %3623 = vmatpush1.msra.mxu0 0.0
          %3624 = vmatprep.subr.mxu0 0.0
          %3625 = vmatpush1.msra.mxu0 0.0
          %3626 = vmatprep.subr.mxu0 0.0
          %3627 = vmatpush1.msra.mxu0 0.0
          %3628 = vmatprep.subr.mxu0 0.0
          %3629 = vmatpush1.msra.mxu0 0.0
          %3630 = vmatprep.subr.mxu0 0.0
          %3631 = vmatpush1.msra.mxu0 0.0
          %3632 = vmatprep.subr.mxu0 0.0
          %3633 = vmatpush1.msra.mxu0 0.0
          %3634 = vmatprep.subr.mxu0 0.0
          %3635 = vmatpush1.msra.mxu0 0.0
          %3636 = vmatprep.subr.mxu0 0.0
          %3637 = vmatpush1.msra.mxu0 0.0
          %3638 = vmatprep.subr.mxu0 0.0
          %3639 = vmatpush1.msra.mxu0 0.0
          %3640 = vmatprep.subr.mxu0 0.0
          %3641 = vmatpush1.msra.mxu0 0.0
          %3642 = vmatprep.subr.mxu0 0.0
          %3643 = vmatpush1.msra.mxu0 0.0
          %3644 = vmatprep.mubr.f32.mxu0 0.0
          %3645 = vmatmul.mubr.f32.gmra.mrb[0].mxu0 %v3575
          %v3646 = vpop.f32.mrb[0].mxu0
          %v3647 = vadd.f32 0.0, %v3646
          %v3648 = vpop.f32.mrb[0].mxu0
          %3649 = vmatprep.mubr.f32.mxu0 0.0
          %3650 = vmatmul.mubr.f32.gmra.mrb[0].mxu0 %v3578
          %v3651 = vpop.f32.mrb[0].mxu0
          %v3652 = vadd.f32 0.0, %v3651
          %v3653 = vpop.f32.mrb[0].mxu0
          %3654 = vdwg.mxu0
          %v3656 = vsel %vm316, %v3572, 0
          %v3659 = vsel %vm316, %v3573, 0
          %3661 = vmatprep.subr.mxu0 0.0
          %3662 = vmatpush1.msra.mxu0 %v3481
          %3663 = vmatprep.subr.mxu0 0.0
          %3664 = vmatpush1.msra.mxu0 %v3486
          %3665 = vmatprep.subr.mxu0 0.0
          %3666 = vmatpush1.msra.mxu0 0.0
          %3667 = vmatprep.subr.mxu0 0.0
          %3668 = vmatpush1.msra.mxu0 0.0
          %3669 = vmatprep.subr.mxu0 0.0
          %3670 = vmatpush1.msra.mxu0 0.0
          %3671 = vmatprep.subr.mxu0 0.0
          %3672 = vmatpush1.msra.mxu0 0.0
          %3673 = vmatprep.subr.mxu0 0.0
          %3674 = vmatpush1.msra.mxu0 0.0
          %3675 = vmatprep.subr.mxu0 0.0
          %3676 = vmatpush1.msra.mxu0 0.0
          %3677 = vmatprep.subr.mxu0 0.0
          %3678 = vmatpush1.msra.mxu0 0.0
          %3679 = vmatprep.subr.mxu0 0.0
          %3680 = vmatpush1.msra.mxu0 0.0
          %3681 = vmatprep.subr.mxu0 0.0
          %3682 = vmatpush1.msra.mxu0 0.0
          %3683 = vmatprep.subr.mxu0 0.0
          %3684 = vmatpush1.msra.mxu0 0.0
          %3685 = vmatprep.subr.mxu0 0.0
          %3686 = vmatpush1.msra.mxu0 0.0
          %3687 = vmatprep.subr.mxu0 0.0
          %3688 = vmatpush1.msra.mxu0 0.0
          %3689 = vmatprep.subr.mxu0 0.0
          %3690 = vmatpush1.msra.mxu0 0.0
          %3691 = vmatprep.subr.mxu0 0.0
          %3692 = vmatpush1.msra.mxu0 0.0
          %3693 = vmatprep.subr.mxu0 0.0
          %3694 = vmatpush1.msra.mxu0 0.0
          %3695 = vmatprep.subr.mxu0 0.0
          %3696 = vmatpush1.msra.mxu0 0.0
          %3697 = vmatprep.subr.mxu0 0.0
          %3698 = vmatpush1.msra.mxu0 0.0
          %3699 = vmatprep.subr.mxu0 0.0
          %3700 = vmatpush1.msra.mxu0 0.0
          %3701 = vmatprep.subr.mxu0 0.0
          %3702 = vmatpush1.msra.mxu0 0.0
          %3703 = vmatprep.subr.mxu0 0.0
          %3704 = vmatpush1.msra.mxu0 0.0
          %3705 = vmatprep.subr.mxu0 0.0
          %3706 = vmatpush1.msra.mxu0 0.0
          %3707 = vmatprep.subr.mxu0 0.0
          %3708 = vmatpush1.msra.mxu0 0.0
          %3709 = vmatprep.subr.mxu0 0.0
          %3710 = vmatpush1.msra.mxu0 0.0
          %3711 = vmatprep.subr.mxu0 0.0
          %3712 = vmatpush1.msra.mxu0 0.0
          %3713 = vmatprep.subr.mxu0 0.0
          %3714 = vmatpush1.msra.mxu0 0.0
          %3715 = vmatprep.subr.mxu0 0.0
          %3716 = vmatpush1.msra.mxu0 0.0
          %3717 = vmatprep.subr.mxu0 0.0
          %3718 = vmatpush1.msra.mxu0 0.0
          %3719 = vmatprep.subr.mxu0 0.0
          %3720 = vmatpush1.msra.mxu0 0.0
          %3721 = vmatprep.subr.mxu0 0.0
          %3722 = vmatpush1.msra.mxu0 0.0
          %3723 = vmatprep.subr.mxu0 0.0
          %3724 = vmatpush1.msra.mxu0 0.0
          %3725 = vmatprep.mubr.f32.mxu0 0.0
          %3726 = vmatmul.mubr.f32.gmra.mrb[0].mxu0 %v3656
          %v3727 = vpop.f32.mrb[0].mxu0
          %v3728 = vadd.f32 0.0, %v3727
          %v3729 = vpop.f32.mrb[0].mxu0
          %3730 = vmatprep.mubr.f32.mxu0 0.0
          %3731 = vmatmul.mubr.f32.gmra.mrb[0].mxu0 %v3659
          %v3732 = vpop.f32.mrb[0].mxu0
          %v3733 = vadd.f32 0.0, %v3732
          %v3734 = vpop.f32.mrb[0].mxu0
          %3735 = vdwg.mxu0
          %v3737 = vsel %vm316, %v3728, 0
          %v3740 = vsel %vm316, %v3733, 0
          %3742 = vmatprep.subr.mxu0 0.0
          %3743 = vmatpush1.msra.mxu0 %v3647
          %3744 = vmatprep.subr.mxu0 0.0
          %3745 = vmatpush1.msra.mxu0 %v3652
          %3746 = vmatprep.subr.mxu0 0.0
          %3747 = vmatpush1.msra.mxu0 0.0
          %3748 = vmatprep.subr.mxu0 0.0
          %3749 = vmatpush1.msra.mxu0 0.0
          %3750 = vmatprep.subr.mxu0 0.0
          %3751 = vmatpush1.msra.mxu0 0.0
          %3752 = vmatprep.subr.mxu0 0.0
          %3753 = vmatpush1.msra.mxu0 0.0
          %3754 = vmatprep.subr.mxu0 0.0
          %3755 = vmatpush1.msra.mxu0 0.0
          %3756 = vmatprep.subr.mxu0 0.0
          %3757 = vmatpush1.msra.mxu0 0.0
          %3758 = vmatprep.subr.mxu0 0.0
          %3759 = vmatpush1.msra.mxu0 0.0
          %3760 = vmatprep.subr.mxu0 0.0
          %3761 = vmatpush1.msra.mxu0 0.0
          %3762 = vmatprep.subr.mxu0 0.0
          %3763 = vmatpush1.msra.mxu0 0.0
          %3764 = vmatprep.subr.mxu0 0.0
          %3765 = vmatpush1.msra.mxu0 0.0
          %3766 = vmatprep.subr.mxu0 0.0
          %3767 = vmatpush1.msra.mxu0 0.0
          %3768 = vmatprep.subr.mxu0 0.0
          %3769 = vmatpush1.msra.mxu0 0.0
          %3770 = vmatprep.subr.mxu0 0.0
          %3771 = vmatpush1.msra.mxu0 0.0
          %3772 = vmatprep.subr.mxu0 0.0
          %3773 = vmatpush1.msra.mxu0 0.0
          %3774 = vmatprep.subr.mxu0 0.0
          %3775 = vmatpush1.msra.mxu0 0.0
          %3776 = vmatprep.subr.mxu0 0.0
          %3777 = vmatpush1.msra.mxu0 0.0
          %3778 = vmatprep.subr.mxu0 0.0
          %3779 = vmatpush1.msra.mxu0 0.0
          %3780 = vmatprep.subr.mxu0 0.0
          %3781 = vmatpush1.msra.mxu0 0.0
          %3782 = vmatprep.subr.mxu0 0.0
          %3783 = vmatpush1.msra.mxu0 0.0
          %3784 = vmatprep.subr.mxu0 0.0
          %3785 = vmatpush1.msra.mxu0 0.0
          %3786 = vmatprep.subr.mxu0 0.0
          %3787 = vmatpush1.msra.mxu0 0.0
          %3788 = vmatprep.subr.mxu0 0.0
          %3789 = vmatpush1.msra.mxu0 0.0
          %3790 = vmatprep.subr.mxu0 0.0
          %3791 = vmatpush1.msra.mxu0 0.0
          %3792 = vmatprep.subr.mxu0 0.0
          %3793 = vmatpush1.msra.mxu0 0.0
          %3794 = vmatprep.subr.mxu0 0.0
          %3795 = vmatpush1.msra.mxu0 0.0
          %3796 = vmatprep.subr.mxu0 0.0
          %3797 = vmatpush1.msra.mxu0 0.0
          %3798 = vmatprep.subr.mxu0 0.0
          %3799 = vmatpush1.msra.mxu0 0.0
          %3800 = vmatprep.subr.mxu0 0.0
          %3801 = vmatpush1.msra.mxu0 0.0
          %3802 = vmatprep.subr.mxu0 0.0
          %3803 = vmatpush1.msra.mxu0 0.0
          %3804 = vmatprep.subr.mxu0 0.0
          %3805 = vmatpush1.msra.mxu0 0.0
          %3806 = vmatprep.mubr.f32.mxu0 0.0
          %3807 = vmatmul.mubr.f32.gmra.mrb[0].mxu0 %v3737
          %v3808 = vpop.f32.mrb[0].mxu0
          %v3809 = vadd.f32 0.0, %v3808
          %v3810 = vpop.f32.mrb[0].mxu0
          %3811 = vmatprep.mubr.f32.mxu0 0.0
          %3812 = vmatmul.mubr.f32.gmra.mrb[0].mxu0 %v3740
          %v3813 = vpop.f32.mrb[0].mxu0
          %v3814 = vadd.f32 0.0, %v3813
          %v3815 = vpop.f32.mrb[0].mxu0
          %3816 = vdwg.mxu0
          %v3817 = vsub.f32 %v622, %v3809
          %v3818 = vsub.f32 %v623, %v3814
          %v3819 = vmul.f32 %v3817, 0.5
          %v3820 = vmul.f32 %v3818, 0.5
          %v3822 = vsel %vm316, %v3647, 0
          %v3825 = vsel %vm316, %v3652, 0
          %3827 = vmatprep.subr.mxu0 0.0
          %3828 = vmatpush1.msra.mxu0 %v3819
          %3829 = vmatprep.subr.mxu0 0.0
          %3830 = vmatpush1.msra.mxu0 %v3820
          %3831 = vmatprep.subr.mxu0 0.0
          %3832 = vmatpush1.msra.mxu0 0.0
          %3833 = vmatprep.subr.mxu0 0.0
          %3834 = vmatpush1.msra.mxu0 0.0
          %3835 = vmatprep.subr.mxu0 0.0
          %3836 = vmatpush1.msra.mxu0 0.0
          %3837 = vmatprep.subr.mxu0 0.0
          %3838 = vmatpush1.msra.mxu0 0.0
          %3839 = vmatprep.subr.mxu0 0.0
          %3840 = vmatpush1.msra.mxu0 0.0
          %3841 = vmatprep.subr.mxu0 0.0
          %3842 = vmatpush1.msra.mxu0 0.0
          %3843 = vmatprep.subr.mxu0 0.0
          %3844 = vmatpush1.msra.mxu0 0.0
          %3845 = vmatprep.subr.mxu0 0.0
          %3846 = vmatpush1.msra.mxu0 0.0
          %3847 = vmatprep.subr.mxu0 0.0
          %3848 = vmatpush1.msra.mxu0 0.0
          %3849 = vmatprep.subr.mxu0 0.0
          %3850 = vmatpush1.msra.mxu0 0.0
          %3851 = vmatprep.subr.mxu0 0.0
          %3852 = vmatpush1.msra.mxu0 0.0
          %3853 = vmatprep.subr.mxu0 0.0
          %3854 = vmatpush1.msra.mxu0 0.0
          %3855 = vmatprep.subr.mxu0 0.0
          %3856 = vmatpush1.msra.mxu0 0.0
          %3857 = vmatprep.subr.mxu0 0.0
          %3858 = vmatpush1.msra.mxu0 0.0
          %3859 = vmatprep.subr.mxu0 0.0
          %3860 = vmatpush1.msra.mxu0 0.0
          %3861 = vmatprep.subr.mxu0 0.0
          %3862 = vmatpush1.msra.mxu0 0.0
          %3863 = vmatprep.subr.mxu0 0.0
          %3864 = vmatpush1.msra.mxu0 0.0
          %3865 = vmatprep.subr.mxu0 0.0
          %3866 = vmatpush1.msra.mxu0 0.0
          %3867 = vmatprep.subr.mxu0 0.0
          %3868 = vmatpush1.msra.mxu0 0.0
          %3869 = vmatprep.subr.mxu0 0.0
          %3870 = vmatpush1.msra.mxu0 0.0
          %3871 = vmatprep.subr.mxu0 0.0
          %3872 = vmatpush1.msra.mxu0 0.0
          %3873 = vmatprep.subr.mxu0 0.0
          %3874 = vmatpush1.msra.mxu0 0.0
          %3875 = vmatprep.subr.mxu0 0.0
          %3876 = vmatpush1.msra.mxu0 0.0
          %3877 = vmatprep.subr.mxu0 0.0
          %3878 = vmatpush1.msra.mxu0 0.0
          %3879 = vmatprep.subr.mxu0 0.0
          %3880 = vmatpush1.msra.mxu0 0.0
          %3881 = vmatprep.subr.mxu0 0.0
          %3882 = vmatpush1.msra.mxu0 0.0
          %3883 = vmatprep.subr.mxu0 0.0
          %3884 = vmatpush1.msra.mxu0 0.0
          %3885 = vmatprep.subr.mxu0 0.0
          %3886 = vmatpush1.msra.mxu0 0.0
          %3887 = vmatprep.subr.mxu0 0.0
          %3888 = vmatpush1.msra.mxu0 0.0
          %3889 = vmatprep.subr.mxu0 0.0
          %3890 = vmatpush1.msra.mxu0 0.0
          %3891 = vmatprep.mubr.f32.mxu0 0.0
          %3892 = vmatmul.mubr.f32.gmra.mrb[0].mxu0 %v3822
          %v3893 = vpop.f32.mrb[0].mxu0
          %v3894 = vadd.f32 0.0, %v3893
          %v3895 = vpop.f32.mrb[0].mxu0
          %3896 = vmatprep.mubr.f32.mxu0 0.0
          %3897 = vmatmul.mubr.f32.gmra.mrb[0].mxu0 %v3825
          %v3898 = vpop.f32.mrb[0].mxu0
          %v3899 = vadd.f32 0.0, %v3898
          %v3900 = vpop.f32.mrb[0].mxu0
          %3901 = vdwg.mxu0
          %v3903 = vsel %vm316, %v3819, 0
          %v3906 = vsel %vm316, %v3820, 0
          %3908 = vmatprep.subr.mxu0 0.0
          %3909 = vmatpush1.msra.mxu0 %v3728
          %3910 = vmatprep.subr.mxu0 0.0
          %3911 = vmatpush1.msra.mxu0 %v3733
          %3912 = vmatprep.subr.mxu0 0.0
          %3913 = vmatpush1.msra.mxu0 0.0
          %3914 = vmatprep.subr.mxu0 0.0
          %3915 = vmatpush1.msra.mxu0 0.0
          %3916 = vmatprep.subr.mxu0 0.0
          %3917 = vmatpush1.msra.mxu0 0.0
          %3918 = vmatprep.subr.mxu0 0.0
          %3919 = vmatpush1.msra.mxu0 0.0
          %3920 = vmatprep.subr.mxu0 0.0
          %3921 = vmatpush1.msra.mxu0 0.0
          %3922 = vmatprep.subr.mxu0 0.0
          %3923 = vmatpush1.msra.mxu0 0.0
          %3924 = vmatprep.subr.mxu0 0.0
          %3925 = vmatpush1.msra.mxu0 0.0
          %3926 = vmatprep.subr.mxu0 0.0
          %3927 = vmatpush1.msra.mxu0 0.0
          %3928 = vmatprep.subr.mxu0 0.0
          %3929 = vmatpush1.msra.mxu0 0.0
          %3930 = vmatprep.subr.mxu0 0.0
          %3931 = vmatpush1.msra.mxu0 0.0
          %3932 = vmatprep.subr.mxu0 0.0
          %3933 = vmatpush1.msra.mxu0 0.0
          %3934 = vmatprep.subr.mxu0 0.0
          %3935 = vmatpush1.msra.mxu0 0.0
          %3936 = vmatprep.subr.mxu0 0.0
          %3937 = vmatpush1.msra.mxu0 0.0
          %3938 = vmatprep.subr.mxu0 0.0
          %3939 = vmatpush1.msra.mxu0 0.0
          %3940 = vmatprep.subr.mxu0 0.0
          %3941 = vmatpush1.msra.mxu0 0.0
          %3942 = vmatprep.subr.mxu0 0.0
          %3943 = vmatpush1.msra.mxu0 0.0
          %3944 = vmatprep.subr.mxu0 0.0
          %3945 = vmatpush1.msra.mxu0 0.0
          %3946 = vmatprep.subr.mxu0 0.0
          %3947 = vmatpush1.msra.mxu0 0.0
          %3948 = vmatprep.subr.mxu0 0.0
          %3949 = vmatpush1.msra.mxu0 0.0
          %3950 = vmatprep.subr.mxu0 0.0
          %3951 = vmatpush1.msra.mxu0 0.0
          %3952 = vmatprep.subr.mxu0 0.0
          %3953 = vmatpush1.msra.mxu0 0.0
          %3954 = vmatprep.subr.mxu0 0.0
          %3955 = vmatpush1.msra.mxu0 0.0
          %3956 = vmatprep.subr.mxu0 0.0
          %3957 = vmatpush1.msra.mxu0 0.0
          %3958 = vmatprep.subr.mxu0 0.0
          %3959 = vmatpush1.msra.mxu0 0.0
          %3960 = vmatprep.subr.mxu0 0.0
          %3961 = vmatpush1.msra.mxu0 0.0
          %3962 = vmatprep.subr.mxu0 0.0
          %3963 = vmatpush1.msra.mxu0 0.0
          %3964 = vmatprep.subr.mxu0 0.0
          %3965 = vmatpush1.msra.mxu0 0.0
          %3966 = vmatprep.subr.mxu0 0.0
          %3967 = vmatpush1.msra.mxu0 0.0
          %3968 = vmatprep.subr.mxu0 0.0
          %3969 = vmatpush1.msra.mxu0 0.0
          %3970 = vmatprep.subr.mxu0 0.0
          %3971 = vmatpush1.msra.mxu0 0.0
          %3972 = vmatprep.mubr.f32.mxu0 0.0
          %3973 = vmatmul.mubr.f32.gmra.mrb[0].mxu0 %v3903
          %v3974 = vpop.f32.mrb[0].mxu0
          %v3975 = vadd.f32 0.0, %v3974
          %v3976 = vpop.f32.mrb[0].mxu0
          %3977 = vmatprep.mubr.f32.mxu0 0.0
          %3978 = vmatmul.mubr.f32.gmra.mrb[0].mxu0 %v3906
          %v3979 = vpop.f32.mrb[0].mxu0
          %v3980 = vadd.f32 0.0, %v3979
          %v3981 = vpop.f32.mrb[0].mxu0
          %3982 = vdwg.mxu0
          %v3984 = vsel %vm316, %v3975, 0
          %v3987 = vsel %vm316, %v3980, 0
          %3989 = vmatprep.subr.mxu0 0.0
          %3990 = vmatpush1.msra.mxu0 %v3894
          %3991 = vmatprep.subr.mxu0 0.0
          %3992 = vmatpush1.msra.mxu0 %v3899
          %3993 = vmatprep.subr.mxu0 0.0
          %3994 = vmatpush1.msra.mxu0 0.0
          %3995 = vmatprep.subr.mxu0 0.0
          %3996 = vmatpush1.msra.mxu0 0.0
          %3997 = vmatprep.subr.mxu0 0.0
          %3998 = vmatpush1.msra.mxu0 0.0
          %3999 = vmatprep.subr.mxu0 0.0
          %4000 = vmatpush1.msra.mxu0 0.0
          %4001 = vmatprep.subr.mxu0 0.0
          %4002 = vmatpush1.msra.mxu0 0.0
          %4003 = vmatprep.subr.mxu0 0.0
          %4004 = vmatpush1.msra.mxu0 0.0
          %4005 = vmatprep.subr.mxu0 0.0
          %4006 = vmatpush1.msra.mxu0 0.0
          %4007 = vmatprep.subr.mxu0 0.0
          %4008 = vmatpush1.msra.mxu0 0.0
          %4009 = vmatprep.subr.mxu0 0.0
          %4010 = vmatpush1.msra.mxu0 0.0
          %4011 = vmatprep.subr.mxu0 0.0
          %4012 = vmatpush1.msra.mxu0 0.0
          %4013 = vmatprep.subr.mxu0 0.0
          %4014 = vmatpush1.msra.mxu0 0.0
          %4015 = vmatprep.subr.mxu0 0.0
          %4016 = vmatpush1.msra.mxu0 0.0
          %4017 = vmatprep.subr.mxu0 0.0
          %4018 = vmatpush1.msra.mxu0 0.0
          %4019 = vmatprep.subr.mxu0 0.0
          %4020 = vmatpush1.msra.mxu0 0.0
          %4021 = vmatprep.subr.mxu0 0.0
          %4022 = vmatpush1.msra.mxu0 0.0
          %4023 = vmatprep.subr.mxu0 0.0
          %4024 = vmatpush1.msra.mxu0 0.0
          %4025 = vmatprep.subr.mxu0 0.0
          %4026 = vmatpush1.msra.mxu0 0.0
          %4027 = vmatprep.subr.mxu0 0.0
          %4028 = vmatpush1.msra.mxu0 0.0
          %4029 = vmatprep.subr.mxu0 0.0
          %4030 = vmatpush1.msra.mxu0 0.0
          %4031 = vmatprep.subr.mxu0 0.0
          %4032 = vmatpush1.msra.mxu0 0.0
          %4033 = vmatprep.subr.mxu0 0.0
          %4034 = vmatpush1.msra.mxu0 0.0
          %4035 = vmatprep.subr.mxu0 0.0
          %4036 = vmatpush1.msra.mxu0 0.0
          %4037 = vmatprep.subr.mxu0 0.0
          %4038 = vmatpush1.msra.mxu0 0.0
          %4039 = vmatprep.subr.mxu0 0.0
          %4040 = vmatpush1.msra.mxu0 0.0
          %4041 = vmatprep.subr.mxu0 0.0
          %4042 = vmatpush1.msra.mxu0 0.0
          %4043 = vmatprep.subr.mxu0 0.0
          %4044 = vmatpush1.msra.mxu0 0.0
          %4045 = vmatprep.subr.mxu0 0.0
          %4046 = vmatpush1.msra.mxu0 0.0
          %4047 = vmatprep.subr.mxu0 0.0
          %4048 = vmatpush1.msra.mxu0 0.0
          %4049 = vmatprep.subr.mxu0 0.0
          %4050 = vmatpush1.msra.mxu0 0.0
          %4051 = vmatprep.subr.mxu0 0.0
          %4052 = vmatpush1.msra.mxu0 0.0
          %4053 = vmatprep.mubr.f32.mxu0 0.0
          %4054 = vmatmul.mubr.f32.gmra.mrb[0].mxu0 %v3984
          %v4055 = vpop.f32.mrb[0].mxu0
          %v4056 = vadd.f32 0.0, %v4055
          %v4057 = vpop.f32.mrb[0].mxu0
          %4058 = vmatprep.mubr.f32.mxu0 0.0
          %4059 = vmatmul.mubr.f32.gmra.mrb[0].mxu0 %v3987
          %v4060 = vpop.f32.mrb[0].mxu0
          %v4061 = vadd.f32 0.0, %v4060
          %v4062 = vpop.f32.mrb[0].mxu0
          %4063 = vdwg.mxu0
          %v4064 = vsub.f32 %v622, %v4056
          %v4065 = vsub.f32 %v623, %v4061
          %v4066 = vmul.f32 %v4064, 0.5
          %v4067 = vmul.f32 %v4065, 0.5
          %v4069 = vsel %vm316, %v3894, 0
          %v4072 = vsel %vm316, %v3899, 0
          %4074 = vmatprep.subr.mxu0 0.0
          %4075 = vmatpush1.msra.mxu0 %v4066
          %4076 = vmatprep.subr.mxu0 0.0
          %4077 = vmatpush1.msra.mxu0 %v4067
          %4078 = vmatprep.subr.mxu0 0.0
          %4079 = vmatpush1.msra.mxu0 0.0
          %4080 = vmatprep.subr.mxu0 0.0
          %4081 = vmatpush1.msra.mxu0 0.0
          %4082 = vmatprep.subr.mxu0 0.0
          %4083 = vmatpush1.msra.mxu0 0.0
          %4084 = vmatprep.subr.mxu0 0.0
          %4085 = vmatpush1.msra.mxu0 0.0
          %4086 = vmatprep.subr.mxu0 0.0
          %4087 = vmatpush1.msra.mxu0 0.0
          %4088 = vmatprep.subr.mxu0 0.0
          %4089 = vmatpush1.msra.mxu0 0.0
          %4090 = vmatprep.subr.mxu0 0.0
          %4091 = vmatpush1.msra.mxu0 0.0
          %4092 = vmatprep.subr.mxu0 0.0
          %4093 = vmatpush1.msra.mxu0 0.0
          %4094 = vmatprep.subr.mxu0 0.0
          %4095 = vmatpush1.msra.mxu0 0.0
          %4096 = vmatprep.subr.mxu0 0.0
          %4097 = vmatpush1.msra.mxu0 0.0
          %4098 = vmatprep.subr.mxu0 0.0
          %4099 = vmatpush1.msra.mxu0 0.0
          %4100 = vmatprep.subr.mxu0 0.0
          %4101 = vmatpush1.msra.mxu0 0.0
          %4102 = vmatprep.subr.mxu0 0.0
          %4103 = vmatpush1.msra.mxu0 0.0
          %4104 = vmatprep.subr.mxu0 0.0
          %4105 = vmatpush1.msra.mxu0 0.0
          %4106 = vmatprep.subr.mxu0 0.0
          %4107 = vmatpush1.msra.mxu0 0.0
          %4108 = vmatprep.subr.mxu0 0.0
          %4109 = vmatpush1.msra.mxu0 0.0
          %4110 = vmatprep.subr.mxu0 0.0
          %4111 = vmatpush1.msra.mxu0 0.0
          %4112 = vmatprep.subr.mxu0 0.0
          %4113 = vmatpush1.msra.mxu0 0.0
          %4114 = vmatprep.subr.mxu0 0.0
          %4115 = vmatpush1.msra.mxu0 0.0
          %4116 = vmatprep.subr.mxu0 0.0
          %4117 = vmatpush1.msra.mxu0 0.0
          %4118 = vmatprep.subr.mxu0 0.0
          %4119 = vmatpush1.msra.mxu0 0.0
          %4120 = vmatprep.subr.mxu0 0.0
          %4121 = vmatpush1.msra.mxu0 0.0
          %4122 = vmatprep.subr.mxu0 0.0
          %4123 = vmatpush1.msra.mxu0 0.0
          %4124 = vmatprep.subr.mxu0 0.0
          %4125 = vmatpush1.msra.mxu0 0.0
          %4126 = vmatprep.subr.mxu0 0.0
          %4127 = vmatpush1.msra.mxu0 0.0
          %4128 = vmatprep.subr.mxu0 0.0
          %4129 = vmatpush1.msra.mxu0 0.0
          %4130 = vmatprep.subr.mxu0 0.0
          %4131 = vmatpush1.msra.mxu0 0.0
          %4132 = vmatprep.subr.mxu0 0.0
          %4133 = vmatpush1.msra.mxu0 0.0
          %4134 = vmatprep.subr.mxu0 0.0
          %4135 = vmatpush1.msra.mxu0 0.0
          %4136 = vmatprep.subr.mxu0 0.0
          %4137 = vmatpush1.msra.mxu0 0.0
          %4138 = vmatprep.mubr.f32.mxu0 0.0
          %4139 = vmatmul.mubr.f32.gmra.mrb[0].mxu0 %v4069
          %v4140 = vpop.f32.mrb[0].mxu0
          %v4141 = vadd.f32 0.0, %v4140
          %v4142 = vpop.f32.mrb[0].mxu0
          %4143 = vmatprep.mubr.f32.mxu0 0.0
          %4144 = vmatmul.mubr.f32.gmra.mrb[0].mxu0 %v4072
          %v4145 = vpop.f32.mrb[0].mxu0
          %v4146 = vadd.f32 0.0, %v4145
          %v4147 = vpop.f32.mrb[0].mxu0
          %4148 = vdwg.mxu0
          %v4150 = vsel %vm316, %v4066, 0
          %v4153 = vsel %vm316, %v4067, 0
          %4155 = vmatprep.subr.mxu0 0.0
          %4156 = vmatpush1.msra.mxu0 %v3975
          %4157 = vmatprep.subr.mxu0 0.0
          %4158 = vmatpush1.msra.mxu0 %v3980
          %4159 = vmatprep.subr.mxu0 0.0
          %4160 = vmatpush1.msra.mxu0 0.0
          %4161 = vmatprep.subr.mxu0 0.0
          %4162 = vmatpush1.msra.mxu0 0.0
          %4163 = vmatprep.subr.mxu0 0.0
          %4164 = vmatpush1.msra.mxu0 0.0
          %4165 = vmatprep.subr.mxu0 0.0
          %4166 = vmatpush1.msra.mxu0 0.0
          %4167 = vmatprep.subr.mxu0 0.0
          %4168 = vmatpush1.msra.mxu0 0.0
          %4169 = vmatprep.subr.mxu0 0.0
          %4170 = vmatpush1.msra.mxu0 0.0
          %4171 = vmatprep.subr.mxu0 0.0
          %4172 = vmatpush1.msra.mxu0 0.0
          %4173 = vmatprep.subr.mxu0 0.0
          %4174 = vmatpush1.msra.mxu0 0.0
          %4175 = vmatprep.subr.mxu0 0.0
          %4176 = vmatpush1.msra.mxu0 0.0
          %4177 = vmatprep.subr.mxu0 0.0
          %4178 = vmatpush1.msra.mxu0 0.0
          %4179 = vmatprep.subr.mxu0 0.0
          %4180 = vmatpush1.msra.mxu0 0.0
          %4181 = vmatprep.subr.mxu0 0.0
          %4182 = vmatpush1.msra.mxu0 0.0
          %4183 = vmatprep.subr.mxu0 0.0
          %4184 = vmatpush1.msra.mxu0 0.0
          %4185 = vmatprep.subr.mxu0 0.0
          %4186 = vmatpush1.msra.mxu0 0.0
          %4187 = vmatprep.subr.mxu0 0.0
          %4188 = vmatpush1.msra.mxu0 0.0
          %4189 = vmatprep.subr.mxu0 0.0
          %4190 = vmatpush1.msra.mxu0 0.0
          %4191 = vmatprep.subr.mxu0 0.0
          %4192 = vmatpush1.msra.mxu0 0.0
          %4193 = vmatprep.subr.mxu0 0.0
          %4194 = vmatpush1.msra.mxu0 0.0
          %4195 = vmatprep.subr.mxu0 0.0
          %4196 = vmatpush1.msra.mxu0 0.0
          %4197 = vmatprep.subr.mxu0 0.0
          %4198 = vmatpush1.msra.mxu0 0.0
          %4199 = vmatprep.subr.mxu0 0.0
          %4200 = vmatpush1.msra.mxu0 0.0
          %4201 = vmatprep.subr.mxu0 0.0
          %4202 = vmatpush1.msra.mxu0 0.0
          %4203 = vmatprep.subr.mxu0 0.0
          %4204 = vmatpush1.msra.mxu0 0.0
          %4205 = vmatprep.subr.mxu0 0.0
          %4206 = vmatpush1.msra.mxu0 0.0
          %4207 = vmatprep.subr.mxu0 0.0
          %4208 = vmatpush1.msra.mxu0 0.0
          %4209 = vmatprep.subr.mxu0 0.0
          %4210 = vmatpush1.msra.mxu0 0.0
          %4211 = vmatprep.subr.mxu0 0.0
          %4212 = vmatpush1.msra.mxu0 0.0
          %4213 = vmatprep.subr.mxu0 0.0
          %4214 = vmatpush1.msra.mxu0 0.0
          %4215 = vmatprep.subr.mxu0 0.0
          %4216 = vmatpush1.msra.mxu0 0.0
          %4217 = vmatprep.subr.mxu0 0.0
          %4218 = vmatpush1.msra.mxu0 0.0
          %4219 = vmatprep.mubr.f32.mxu0 0.0
          %4220 = vmatmul.mubr.f32.gmra.mrb[0].mxu0 %v4150
          %v4221 = vpop.f32.mrb[0].mxu0
          %v4222 = vadd.f32 0.0, %v4221
          %v4223 = vpop.f32.mrb[0].mxu0
          %4224 = vmatprep.mubr.f32.mxu0 0.0
          %4225 = vmatmul.mubr.f32.gmra.mrb[0].mxu0 %v4153
          %v4226 = vpop.f32.mrb[0].mxu0
          %v4227 = vadd.f32 0.0, %v4226
          %v4228 = vpop.f32.mrb[0].mxu0
          %4229 = vdwg.mxu0
          %v4231 = vsel %vm316, %v4222, 0
          %v4234 = vsel %vm316, %v4227, 0
          %4236 = vmatprep.subr.mxu0 0.0
          %4237 = vmatpush1.msra.mxu0 %v4141
          %4238 = vmatprep.subr.mxu0 0.0
          %4239 = vmatpush1.msra.mxu0 %v4146
          %4240 = vmatprep.subr.mxu0 0.0
          %4241 = vmatpush1.msra.mxu0 0.0
          %4242 = vmatprep.subr.mxu0 0.0
          %4243 = vmatpush1.msra.mxu0 0.0
          %4244 = vmatprep.subr.mxu0 0.0
          %4245 = vmatpush1.msra.mxu0 0.0
          %4246 = vmatprep.subr.mxu0 0.0
          %4247 = vmatpush1.msra.mxu0 0.0
          %4248 = vmatprep.subr.mxu0 0.0
          %4249 = vmatpush1.msra.mxu0 0.0
          %4250 = vmatprep.subr.mxu0 0.0
          %4251 = vmatpush1.msra.mxu0 0.0
          %4252 = vmatprep.subr.mxu0 0.0
          %4253 = vmatpush1.msra.mxu0 0.0
          %4254 = vmatprep.subr.mxu0 0.0
          %4255 = vmatpush1.msra.mxu0 0.0
          %4256 = vmatprep.subr.mxu0 0.0
          %4257 = vmatpush1.msra.mxu0 0.0
          %4258 = vmatprep.subr.mxu0 0.0
          %4259 = vmatpush1.msra.mxu0 0.0
          %4260 = vmatprep.subr.mxu0 0.0
          %4261 = vmatpush1.msra.mxu0 0.0
          %4262 = vmatprep.subr.mxu0 0.0
          %4263 = vmatpush1.msra.mxu0 0.0
          %4264 = vmatprep.subr.mxu0 0.0
          %4265 = vmatpush1.msra.mxu0 0.0
          %4266 = vmatprep.subr.mxu0 0.0
          %4267 = vmatpush1.msra.mxu0 0.0
          %4268 = vmatprep.subr.mxu0 0.0
          %4269 = vmatpush1.msra.mxu0 0.0
          %4270 = vmatprep.subr.mxu0 0.0
          %4271 = vmatpush1.msra.mxu0 0.0
          %4272 = vmatprep.subr.mxu0 0.0
          %4273 = vmatpush1.msra.mxu0 0.0
          %4274 = vmatprep.subr.mxu0 0.0
          %4275 = vmatpush1.msra.mxu0 0.0
          %4276 = vmatprep.subr.mxu0 0.0
          %4277 = vmatpush1.msra.mxu0 0.0
          %4278 = vmatprep.subr.mxu0 0.0
          %4279 = vmatpush1.msra.mxu0 0.0
          %4280 = vmatprep.subr.mxu0 0.0
          %4281 = vmatpush1.msra.mxu0 0.0
          %4282 = vmatprep.subr.mxu0 0.0
          %4283 = vmatpush1.msra.mxu0 0.0
          %4284 = vmatprep.subr.mxu0 0.0
          %4285 = vmatpush1.msra.mxu0 0.0
          %4286 = vmatprep.subr.mxu0 0.0
          %4287 = vmatpush1.msra.mxu0 0.0
          %4288 = vmatprep.subr.mxu0 0.0
          %4289 = vmatpush1.msra.mxu0 0.0
          %4290 = vmatprep.subr.mxu0 0.0
          %4291 = vmatpush1.msra.mxu0 0.0
          %4292 = vmatprep.subr.mxu0 0.0
          %4293 = vmatpush1.msra.mxu0 0.0
          %4294 = vmatprep.subr.mxu0 0.0
          %4295 = vmatpush1.msra.mxu0 0.0
          %4296 = vmatprep.subr.mxu0 0.0
          %4297 = vmatpush1.msra.mxu0 0.0
          %4298 = vmatprep.subr.mxu0 0.0
          %4299 = vmatpush1.msra.mxu0 0.0
          %4300 = vmatprep.mubr.f32.mxu0 0.0
          %4301 = vmatmul.mubr.f32.gmra.mrb[0].mxu0 %v4231
          %v4302 = vpop.f32.mrb[0].mxu0
          %v4303 = vadd.f32 0.0, %v4302
          %v4304 = vpop.f32.mrb[0].mxu0
          %4305 = vmatprep.mubr.f32.mxu0 0.0
          %4306 = vmatmul.mubr.f32.gmra.mrb[0].mxu0 %v4234
          %v4307 = vpop.f32.mrb[0].mxu0
          %v4308 = vadd.f32 0.0, %v4307
          %v4309 = vpop.f32.mrb[0].mxu0
          %4310 = vdwg.mxu0
          %v4311 = vsub.f32 %v622, %v4303
          %v4312 = vsub.f32 %v623, %v4308
          %v4313 = vmul.f32 %v4311, 0.5
          %v4314 = vmul.f32 %v4312, 0.5
          %v4316 = vsel %vm316, %v4141, 0
          %v4319 = vsel %vm316, %v4146, 0
          %4321 = vmatprep.subr.mxu0 0.0
          %4322 = vmatpush1.msra.mxu0 %v4313
          %4323 = vmatprep.subr.mxu0 0.0
          %4324 = vmatpush1.msra.mxu0 %v4314
          %4325 = vmatprep.subr.mxu0 0.0
          %4326 = vmatpush1.msra.mxu0 0.0
          %4327 = vmatprep.subr.mxu0 0.0
          %4328 = vmatpush1.msra.mxu0 0.0
          %4329 = vmatprep.subr.mxu0 0.0
          %4330 = vmatpush1.msra.mxu0 0.0
          %4331 = vmatprep.subr.mxu0 0.0
          %4332 = vmatpush1.msra.mxu0 0.0
          %4333 = vmatprep.subr.mxu0 0.0
          %4334 = vmatpush1.msra.mxu0 0.0
          %4335 = vmatprep.subr.mxu0 0.0
          %4336 = vmatpush1.msra.mxu0 0.0
          %4337 = vmatprep.subr.mxu0 0.0
          %4338 = vmatpush1.msra.mxu0 0.0
          %4339 = vmatprep.subr.mxu0 0.0
          %4340 = vmatpush1.msra.mxu0 0.0
          %4341 = vmatprep.subr.mxu0 0.0
          %4342 = vmatpush1.msra.mxu0 0.0
          %4343 = vmatprep.subr.mxu0 0.0
          %4344 = vmatpush1.msra.mxu0 0.0
          %4345 = vmatprep.subr.mxu0 0.0
          %4346 = vmatpush1.msra.mxu0 0.0
          %4347 = vmatprep.subr.mxu0 0.0
          %4348 = vmatpush1.msra.mxu0 0.0
          %4349 = vmatprep.subr.mxu0 0.0
          %4350 = vmatpush1.msra.mxu0 0.0
          %4351 = vmatprep.subr.mxu0 0.0
          %4352 = vmatpush1.msra.mxu0 0.0
          %4353 = vmatprep.subr.mxu0 0.0
          %4354 = vmatpush1.msra.mxu0 0.0
          %4355 = vmatprep.subr.mxu0 0.0
          %4356 = vmatpush1.msra.mxu0 0.0
          %4357 = vmatprep.subr.mxu0 0.0
          %4358 = vmatpush1.msra.mxu0 0.0
          %4359 = vmatprep.subr.mxu0 0.0
          %4360 = vmatpush1.msra.mxu0 0.0
          %4361 = vmatprep.subr.mxu0 0.0
          %4362 = vmatpush1.msra.mxu0 0.0
          %4363 = vmatprep.subr.mxu0 0.0
          %4364 = vmatpush1.msra.mxu0 0.0
          %4365 = vmatprep.subr.mxu0 0.0
          %4366 = vmatpush1.msra.mxu0 0.0
          %4367 = vmatprep.subr.mxu0 0.0
          %4368 = vmatpush1.msra.mxu0 0.0
          %4369 = vmatprep.subr.mxu0 0.0
          %4370 = vmatpush1.msra.mxu0 0.0
          %4371 = vmatprep.subr.mxu0 0.0
          %4372 = vmatpush1.msra.mxu0 0.0
          %4373 = vmatprep.subr.mxu0 0.0
          %4374 = vmatpush1.msra.mxu0 0.0
          %4375 = vmatprep.subr.mxu0 0.0
          %4376 = vmatpush1.msra.mxu0 0.0
          %4377 = vmatprep.subr.mxu0 0.0
          %4378 = vmatpush1.msra.mxu0 0.0
          %4379 = vmatprep.subr.mxu0 0.0
          %4380 = vmatpush1.msra.mxu0 0.0
          %4381 = vmatprep.subr.mxu0 0.0
          %4382 = vmatpush1.msra.mxu0 0.0
          %4383 = vmatprep.subr.mxu0 0.0
          %4384 = vmatpush1.msra.mxu0 0.0
          %4385 = vmatprep.mubr.f32.mxu0 0.0
          %4386 = vmatmul.mubr.f32.gmra.mrb[0].mxu0 %v4316
          %v4387 = vpop.f32.mrb[0].mxu0
          %v4388 = vadd.f32 0.0, %v4387
          %v4389 = vpop.f32.mrb[0].mxu0
          %4390 = vmatprep.mubr.f32.mxu0 0.0
          %4391 = vmatmul.mubr.f32.gmra.mrb[0].mxu0 %v4319
          %v4392 = vpop.f32.mrb[0].mxu0
          %v4393 = vadd.f32 0.0, %v4392
          %v4394 = vpop.f32.mrb[0].mxu0
          %4395 = vdwg.mxu0
          %v4397 = vsel %vm316, %v4313, 0
          %v4400 = vsel %vm316, %v4314, 0
          %4402 = vmatprep.subr.mxu0 0.0
          %4403 = vmatpush1.msra.mxu0 %v4222
          %4404 = vmatprep.subr.mxu0 0.0
          %4405 = vmatpush1.msra.mxu0 %v4227
          %4406 = vmatprep.subr.mxu0 0.0
          %4407 = vmatpush1.msra.mxu0 0.0
          %4408 = vmatprep.subr.mxu0 0.0
          %4409 = vmatpush1.msra.mxu0 0.0
          %4410 = vmatprep.subr.mxu0 0.0
          %4411 = vmatpush1.msra.mxu0 0.0
          %4412 = vmatprep.subr.mxu0 0.0
          %4413 = vmatpush1.msra.mxu0 0.0
          %4414 = vmatprep.subr.mxu0 0.0
          %4415 = vmatpush1.msra.mxu0 0.0
          %4416 = vmatprep.subr.mxu0 0.0
          %4417 = vmatpush1.msra.mxu0 0.0
          %4418 = vmatprep.subr.mxu0 0.0
          %4419 = vmatpush1.msra.mxu0 0.0
          %4420 = vmatprep.subr.mxu0 0.0
          %4421 = vmatpush1.msra.mxu0 0.0
          %4422 = vmatprep.subr.mxu0 0.0
          %4423 = vmatpush1.msra.mxu0 0.0
          %4424 = vmatprep.subr.mxu0 0.0
          %4425 = vmatpush1.msra.mxu0 0.0
          %4426 = vmatprep.subr.mxu0 0.0
          %4427 = vmatpush1.msra.mxu0 0.0
          %4428 = vmatprep.subr.mxu0 0.0
          %4429 = vmatpush1.msra.mxu0 0.0
          %4430 = vmatprep.subr.mxu0 0.0
          %4431 = vmatpush1.msra.mxu0 0.0
          %4432 = vmatprep.subr.mxu0 0.0
          %4433 = vmatpush1.msra.mxu0 0.0
          %4434 = vmatprep.subr.mxu0 0.0
          %4435 = vmatpush1.msra.mxu0 0.0
          %4436 = vmatprep.subr.mxu0 0.0
          %4437 = vmatpush1.msra.mxu0 0.0
          %4438 = vmatprep.subr.mxu0 0.0
          %4439 = vmatpush1.msra.mxu0 0.0
          %4440 = vmatprep.subr.mxu0 0.0
          %4441 = vmatpush1.msra.mxu0 0.0
          %4442 = vmatprep.subr.mxu0 0.0
          %4443 = vmatpush1.msra.mxu0 0.0
          %4444 = vmatprep.subr.mxu0 0.0
          %4445 = vmatpush1.msra.mxu0 0.0
          %4446 = vmatprep.subr.mxu0 0.0
          %4447 = vmatpush1.msra.mxu0 0.0
          %4448 = vmatprep.subr.mxu0 0.0
          %4449 = vmatpush1.msra.mxu0 0.0
          %4450 = vmatprep.subr.mxu0 0.0
          %4451 = vmatpush1.msra.mxu0 0.0
          %4452 = vmatprep.subr.mxu0 0.0
          %4453 = vmatpush1.msra.mxu0 0.0
          %4454 = vmatprep.subr.mxu0 0.0
          %4455 = vmatpush1.msra.mxu0 0.0
          %4456 = vmatprep.subr.mxu0 0.0
          %4457 = vmatpush1.msra.mxu0 0.0
          %4458 = vmatprep.subr.mxu0 0.0
          %4459 = vmatpush1.msra.mxu0 0.0
          %4460 = vmatprep.subr.mxu0 0.0
          %4461 = vmatpush1.msra.mxu0 0.0
          %4462 = vmatprep.subr.mxu0 0.0
          %4463 = vmatpush1.msra.mxu0 0.0
          %4464 = vmatprep.subr.mxu0 0.0
          %4465 = vmatpush1.msra.mxu0 0.0
          %4466 = vmatprep.mubr.f32.mxu0 0.0
          %4467 = vmatmul.mubr.f32.gmra.mrb[0].mxu0 %v4397
          %v4468 = vpop.f32.mrb[0].mxu0
          %v4469 = vadd.f32 0.0, %v4468
          %v4470 = vpop.f32.mrb[0].mxu0
          %4471 = vmatprep.mubr.f32.mxu0 0.0
          %4472 = vmatmul.mubr.f32.gmra.mrb[0].mxu0 %v4400
          %v4473 = vpop.f32.mrb[0].mxu0
          %v4474 = vadd.f32 0.0, %v4473
          %v4475 = vpop.f32.mrb[0].mxu0
          %4476 = vdwg.mxu0
          %v4478 = vsel %vm316, %v4469, 0
          %v4481 = vsel %vm316, %v4474, 0
          %4483 = vmatprep.subr.mxu0 0.0
          %4484 = vmatpush1.msra.mxu0 %v4388
          %4485 = vmatprep.subr.mxu0 0.0
          %4486 = vmatpush1.msra.mxu0 %v4393
          %4487 = vmatprep.subr.mxu0 0.0
          %4488 = vmatpush1.msra.mxu0 0.0
          %4489 = vmatprep.subr.mxu0 0.0
          %4490 = vmatpush1.msra.mxu0 0.0
          %4491 = vmatprep.subr.mxu0 0.0
          %4492 = vmatpush1.msra.mxu0 0.0
          %4493 = vmatprep.subr.mxu0 0.0
          %4494 = vmatpush1.msra.mxu0 0.0
          %4495 = vmatprep.subr.mxu0 0.0
          %4496 = vmatpush1.msra.mxu0 0.0
          %4497 = vmatprep.subr.mxu0 0.0
          %4498 = vmatpush1.msra.mxu0 0.0
          %4499 = vmatprep.subr.mxu0 0.0
          %4500 = vmatpush1.msra.mxu0 0.0
          %4501 = vmatprep.subr.mxu0 0.0
          %4502 = vmatpush1.msra.mxu0 0.0
          %4503 = vmatprep.subr.mxu0 0.0
          %4504 = vmatpush1.msra.mxu0 0.0
          %4505 = vmatprep.subr.mxu0 0.0
          %4506 = vmatpush1.msra.mxu0 0.0
          %4507 = vmatprep.subr.mxu0 0.0
          %4508 = vmatpush1.msra.mxu0 0.0
          %4509 = vmatprep.subr.mxu0 0.0
          %4510 = vmatpush1.msra.mxu0 0.0
          %4511 = vmatprep.subr.mxu0 0.0
          %4512 = vmatpush1.msra.mxu0 0.0
          %4513 = vmatprep.subr.mxu0 0.0
          %4514 = vmatpush1.msra.mxu0 0.0
          %4515 = vmatprep.subr.mxu0 0.0
          %4516 = vmatpush1.msra.mxu0 0.0
          %4517 = vmatprep.subr.mxu0 0.0
          %4518 = vmatpush1.msra.mxu0 0.0
          %4519 = vmatprep.subr.mxu0 0.0
          %4520 = vmatpush1.msra.mxu0 0.0
          %4521 = vmatprep.subr.mxu0 0.0
          %4522 = vmatpush1.msra.mxu0 0.0
          %4523 = vmatprep.subr.mxu0 0.0
          %4524 = vmatpush1.msra.mxu0 0.0
          %4525 = vmatprep.subr.mxu0 0.0
          %4526 = vmatpush1.msra.mxu0 0.0
          %4527 = vmatprep.subr.mxu0 0.0
          %4528 = vmatpush1.msra.mxu0 0.0
          %4529 = vmatprep.subr.mxu0 0.0
          %4530 = vmatpush1.msra.mxu0 0.0
          %4531 = vmatprep.subr.mxu0 0.0
          %4532 = vmatpush1.msra.mxu0 0.0
          %4533 = vmatprep.subr.mxu0 0.0
          %4534 = vmatpush1.msra.mxu0 0.0
          %4535 = vmatprep.subr.mxu0 0.0
          %4536 = vmatpush1.msra.mxu0 0.0
          %4537 = vmatprep.subr.mxu0 0.0
          %4538 = vmatpush1.msra.mxu0 0.0
          %4539 = vmatprep.subr.mxu0 0.0
          %4540 = vmatpush1.msra.mxu0 0.0
          %4541 = vmatprep.subr.mxu0 0.0
          %4542 = vmatpush1.msra.mxu0 0.0
          %4543 = vmatprep.subr.mxu0 0.0
          %4544 = vmatpush1.msra.mxu0 0.0
          %4545 = vmatprep.subr.mxu0 0.0
          %4546 = vmatpush1.msra.mxu0 0.0
          %4547 = vmatprep.mubr.f32.mxu0 0.0
          %4548 = vmatmul.mubr.f32.gmra.mrb[0].mxu0 %v4478
          %v4549 = vpop.f32.mrb[0].mxu0
          %v4550 = vadd.f32 0.0, %v4549
          %v4551 = vpop.f32.mrb[0].mxu0
          %4552 = vmatprep.mubr.f32.mxu0 0.0
          %4553 = vmatmul.mubr.f32.gmra.mrb[0].mxu0 %v4481
          %v4554 = vpop.f32.mrb[0].mxu0
          %v4555 = vadd.f32 0.0, %v4554
          %v4556 = vpop.f32.mrb[0].mxu0
          %4557 = vdwg.mxu0
          %v4558 = vsub.f32 %v622, %v4550
          %v4559 = vsub.f32 %v623, %v4555
          %v4560 = vmul.f32 %v4558, 0.5
          %v4561 = vmul.f32 %v4559, 0.5
          %v4563 = vsel %vm316, %v4388, 0
          %v4566 = vsel %vm316, %v4393, 0
          %4568 = vmatprep.subr.mxu0 0.0
          %4569 = vmatpush1.msra.mxu0 %v4560
          %4570 = vmatprep.subr.mxu0 0.0
          %4571 = vmatpush1.msra.mxu0 %v4561
          %4572 = vmatprep.subr.mxu0 0.0
          %4573 = vmatpush1.msra.mxu0 0.0
          %4574 = vmatprep.subr.mxu0 0.0
          %4575 = vmatpush1.msra.mxu0 0.0
          %4576 = vmatprep.subr.mxu0 0.0
          %4577 = vmatpush1.msra.mxu0 0.0
          %4578 = vmatprep.subr.mxu0 0.0
          %4579 = vmatpush1.msra.mxu0 0.0
          %4580 = vmatprep.subr.mxu0 0.0
          %4581 = vmatpush1.msra.mxu0 0.0
          %4582 = vmatprep.subr.mxu0 0.0
          %4583 = vmatpush1.msra.mxu0 0.0
          %4584 = vmatprep.subr.mxu0 0.0
          %4585 = vmatpush1.msra.mxu0 0.0
          %4586 = vmatprep.subr.mxu0 0.0
          %4587 = vmatpush1.msra.mxu0 0.0
          %4588 = vmatprep.subr.mxu0 0.0
          %4589 = vmatpush1.msra.mxu0 0.0
          %4590 = vmatprep.subr.mxu0 0.0
          %4591 = vmatpush1.msra.mxu0 0.0
          %4592 = vmatprep.subr.mxu0 0.0
          %4593 = vmatpush1.msra.mxu0 0.0
          %4594 = vmatprep.subr.mxu0 0.0
          %4595 = vmatpush1.msra.mxu0 0.0
          %4596 = vmatprep.subr.mxu0 0.0
          %4597 = vmatpush1.msra.mxu0 0.0
          %4598 = vmatprep.subr.mxu0 0.0
          %4599 = vmatpush1.msra.mxu0 0.0
          %4600 = vmatprep.subr.mxu0 0.0
          %4601 = vmatpush1.msra.mxu0 0.0
          %4602 = vmatprep.subr.mxu0 0.0
          %4603 = vmatpush1.msra.mxu0 0.0
          %4604 = vmatprep.subr.mxu0 0.0
          %4605 = vmatpush1.msra.mxu0 0.0
          %4606 = vmatprep.subr.mxu0 0.0
          %4607 = vmatpush1.msra.mxu0 0.0
          %4608 = vmatprep.subr.mxu0 0.0
          %4609 = vmatpush1.msra.mxu0 0.0
          %4610 = vmatprep.subr.mxu0 0.0
          %4611 = vmatpush1.msra.mxu0 0.0
          %4612 = vmatprep.subr.mxu0 0.0
          %4613 = vmatpush1.msra.mxu0 0.0
          %4614 = vmatprep.subr.mxu0 0.0
          %4615 = vmatpush1.msra.mxu0 0.0
          %4616 = vmatprep.subr.mxu0 0.0
          %4617 = vmatpush1.msra.mxu0 0.0
          %4618 = vmatprep.subr.mxu0 0.0
          %4619 = vmatpush1.msra.mxu0 0.0
          %4620 = vmatprep.subr.mxu0 0.0
          %4621 = vmatpush1.msra.mxu0 0.0
          %4622 = vmatprep.subr.mxu0 0.0
          %4623 = vmatpush1.msra.mxu0 0.0
          %4624 = vmatprep.subr.mxu0 0.0
          %4625 = vmatpush1.msra.mxu0 0.0
          %4626 = vmatprep.subr.mxu0 0.0
          %4627 = vmatpush1.msra.mxu0 0.0
          %4628 = vmatprep.subr.mxu0 0.0
          %4629 = vmatpush1.msra.mxu0 0.0
          %4630 = vmatprep.subr.mxu0 0.0
          %4631 = vmatpush1.msra.mxu0 0.0
          %4632 = vmatprep.mubr.f32.mxu0 0.0
          %4633 = vmatmul.mubr.f32.gmra.mrb[0].mxu0 %v4563
          %v4634 = vpop.f32.mrb[0].mxu0
          %v4635 = vadd.f32 0.0, %v4634
          %v4636 = vpop.f32.mrb[0].mxu0
          %4637 = vmatprep.mubr.f32.mxu0 0.0
          %4638 = vmatmul.mubr.f32.gmra.mrb[0].mxu0 %v4566
          %v4639 = vpop.f32.mrb[0].mxu0
          %v4640 = vadd.f32 0.0, %v4639
          %v4641 = vpop.f32.mrb[0].mxu0
          %4642 = vdwg.mxu0
          %v4644 = vsel %vm316, %v4560, 0
          %v4647 = vsel %vm316, %v4561, 0
          %4649 = vmatprep.subr.mxu0 0.0
          %4650 = vmatpush1.msra.mxu0 %v4469
          %4651 = vmatprep.subr.mxu0 0.0
          %4652 = vmatpush1.msra.mxu0 %v4474
          %4653 = vmatprep.subr.mxu0 0.0
          %4654 = vmatpush1.msra.mxu0 0.0
          %4655 = vmatprep.subr.mxu0 0.0
          %4656 = vmatpush1.msra.mxu0 0.0
          %4657 = vmatprep.subr.mxu0 0.0
          %4658 = vmatpush1.msra.mxu0 0.0
          %4659 = vmatprep.subr.mxu0 0.0
          %4660 = vmatpush1.msra.mxu0 0.0
          %4661 = vmatprep.subr.mxu0 0.0
          %4662 = vmatpush1.msra.mxu0 0.0
          %4663 = vmatprep.subr.mxu0 0.0
          %4664 = vmatpush1.msra.mxu0 0.0
          %4665 = vmatprep.subr.mxu0 0.0
          %4666 = vmatpush1.msra.mxu0 0.0
          %4667 = vmatprep.subr.mxu0 0.0
          %4668 = vmatpush1.msra.mxu0 0.0
          %4669 = vmatprep.subr.mxu0 0.0
          %4670 = vmatpush1.msra.mxu0 0.0
          %4671 = vmatprep.subr.mxu0 0.0
          %4672 = vmatpush1.msra.mxu0 0.0
          %4673 = vmatprep.subr.mxu0 0.0
          %4674 = vmatpush1.msra.mxu0 0.0
          %4675 = vmatprep.subr.mxu0 0.0
          %4676 = vmatpush1.msra.mxu0 0.0
          %4677 = vmatprep.subr.mxu0 0.0
          %4678 = vmatpush1.msra.mxu0 0.0
          %4679 = vmatprep.subr.mxu0 0.0
          %4680 = vmatpush1.msra.mxu0 0.0
          %4681 = vmatprep.subr.mxu0 0.0
          %4682 = vmatpush1.msra.mxu0 0.0
          %4683 = vmatprep.subr.mxu0 0.0
          %4684 = vmatpush1.msra.mxu0 0.0
          %4685 = vmatprep.subr.mxu0 0.0
          %4686 = vmatpush1.msra.mxu0 0.0
          %4687 = vmatprep.subr.mxu0 0.0
          %4688 = vmatpush1.msra.mxu0 0.0
          %4689 = vmatprep.subr.mxu0 0.0
          %4690 = vmatpush1.msra.mxu0 0.0
          %4691 = vmatprep.subr.mxu0 0.0
          %4692 = vmatpush1.msra.mxu0 0.0
          %4693 = vmatprep.subr.mxu0 0.0
          %4694 = vmatpush1.msra.mxu0 0.0
          %4695 = vmatprep.subr.mxu0 0.0
          %4696 = vmatpush1.msra.mxu0 0.0
          %4697 = vmatprep.subr.mxu0 0.0
          %4698 = vmatpush1.msra.mxu0 0.0
          %4699 = vmatprep.subr.mxu0 0.0
          %4700 = vmatpush1.msra.mxu0 0.0
          %4701 = vmatprep.subr.mxu0 0.0
          %4702 = vmatpush1.msra.mxu0 0.0
          %4703 = vmatprep.subr.mxu0 0.0
          %4704 = vmatpush1.msra.mxu0 0.0
          %4705 = vmatprep.subr.mxu0 0.0
          %4706 = vmatpush1.msra.mxu0 0.0
          %4707 = vmatprep.subr.mxu0 0.0
          %4708 = vmatpush1.msra.mxu0 0.0
          %4709 = vmatprep.subr.mxu0 0.0
          %4710 = vmatpush1.msra.mxu0 0.0
          %4711 = vmatprep.subr.mxu0 0.0
          %4712 = vmatpush1.msra.mxu0 0.0
          %4713 = vmatprep.mubr.f32.mxu0 0.0
          %4714 = vmatmul.mubr.f32.gmra.mrb[0].mxu0 %v4644
          %v4715 = vpop.f32.mrb[0].mxu0
          %v4716 = vadd.f32 0.0, %v4715
          %v4717 = vpop.f32.mrb[0].mxu0
          %4718 = vmatprep.mubr.f32.mxu0 0.0
          %4719 = vmatmul.mubr.f32.gmra.mrb[0].mxu0 %v4647
          %v4720 = vpop.f32.mrb[0].mxu0
          %v4721 = vadd.f32 0.0, %v4720
          %v4722 = vpop.f32.mrb[0].mxu0
          %4723 = vdwg.mxu0
          %v4725 = vsel %vm316, %v4716, 0
          %v4728 = vsel %vm316, %v4721, 0
          %4730 = vmatprep.subr.mxu0 0.0
          %4731 = vmatpush1.msra.mxu0 %v4635
          %4732 = vmatprep.subr.mxu0 0.0
          %4733 = vmatpush1.msra.mxu0 %v4640
          %4734 = vmatprep.subr.mxu0 0.0
          %4735 = vmatpush1.msra.mxu0 0.0
          %4736 = vmatprep.subr.mxu0 0.0
          %4737 = vmatpush1.msra.mxu0 0.0
          %4738 = vmatprep.subr.mxu0 0.0
          %4739 = vmatpush1.msra.mxu0 0.0
          %4740 = vmatprep.subr.mxu0 0.0
          %4741 = vmatpush1.msra.mxu0 0.0
          %4742 = vmatprep.subr.mxu0 0.0
          %4743 = vmatpush1.msra.mxu0 0.0
          %4744 = vmatprep.subr.mxu0 0.0
          %4745 = vmatpush1.msra.mxu0 0.0
          %4746 = vmatprep.subr.mxu0 0.0
          %4747 = vmatpush1.msra.mxu0 0.0
          %4748 = vmatprep.subr.mxu0 0.0
          %4749 = vmatpush1.msra.mxu0 0.0
          %4750 = vmatprep.subr.mxu0 0.0
          %4751 = vmatpush1.msra.mxu0 0.0
          %4752 = vmatprep.subr.mxu0 0.0
          %4753 = vmatpush1.msra.mxu0 0.0
          %4754 = vmatprep.subr.mxu0 0.0
          %4755 = vmatpush1.msra.mxu0 0.0
          %4756 = vmatprep.subr.mxu0 0.0
          %4757 = vmatpush1.msra.mxu0 0.0
          %4758 = vmatprep.subr.mxu0 0.0
          %4759 = vmatpush1.msra.mxu0 0.0
          %4760 = vmatprep.subr.mxu0 0.0
          %4761 = vmatpush1.msra.mxu0 0.0
          %4762 = vmatprep.subr.mxu0 0.0
          %4763 = vmatpush1.msra.mxu0 0.0
          %4764 = vmatprep.subr.mxu0 0.0
          %4765 = vmatpush1.msra.mxu0 0.0
          %4766 = vmatprep.subr.mxu0 0.0
          %4767 = vmatpush1.msra.mxu0 0.0
          %4768 = vmatprep.subr.mxu0 0.0
          %4769 = vmatpush1.msra.mxu0 0.0
          %4770 = vmatprep.subr.mxu0 0.0
          %4771 = vmatpush1.msra.mxu0 0.0
          %4772 = vmatprep.subr.mxu0 0.0
          %4773 = vmatpush1.msra.mxu0 0.0
          %4774 = vmatprep.subr.mxu0 0.0
          %4775 = vmatpush1.msra.mxu0 0.0
          %4776 = vmatprep.subr.mxu0 0.0
          %4777 = vmatpush1.msra.mxu0 0.0
          %4778 = vmatprep.subr.mxu0 0.0
          %4779 = vmatpush1.msra.mxu0 0.0
          %4780 = vmatprep.subr.mxu0 0.0
          %4781 = vmatpush1.msra.mxu0 0.0
          %4782 = vmatprep.subr.mxu0 0.0
          %4783 = vmatpush1.msra.mxu0 0.0
          %4784 = vmatprep.subr.mxu0 0.0
          %4785 = vmatpush1.msra.mxu0 0.0
          %4786 = vmatprep.subr.mxu0 0.0
          %4787 = vmatpush1.msra.mxu0 0.0
          %4788 = vmatprep.subr.mxu0 0.0
          %4789 = vmatpush1.msra.mxu0 0.0
          %4790 = vmatprep.subr.mxu0 0.0
          %4791 = vmatpush1.msra.mxu0 0.0
          %4792 = vmatprep.subr.mxu0 0.0
          %4793 = vmatpush1.msra.mxu0 0.0
          %4794 = vmatprep.mubr.f32.mxu0 0.0
          %4795 = vmatmul.mubr.f32.gmra.mrb[0].mxu0 %v4725
          %v4796 = vpop.f32.mrb[0].mxu0
          %v4797 = vadd.f32 0.0, %v4796
          %v4798 = vpop.f32.mrb[0].mxu0
          %4799 = vmatprep.mubr.f32.mxu0 0.0
          %4800 = vmatmul.mubr.f32.gmra.mrb[0].mxu0 %v4728
          %v4801 = vpop.f32.mrb[0].mxu0
          %v4802 = vadd.f32 0.0, %v4801
          %v4803 = vpop.f32.mrb[0].mxu0
          %4804 = vdwg.mxu0
          %v4805 = vsub.f32 %v622, %v4797
          %v4806 = vsub.f32 %v623, %v4802
          %v4807 = vmul.f32 %v4805, 0.5
          %v4808 = vmul.f32 %v4806, 0.5
          %v4810 = vsel %vm316, %v4635, 0
          %v4813 = vsel %vm316, %v4640, 0
          %4815 = vmatprep.subr.mxu0 0.0
          %4816 = vmatpush1.msra.mxu0 %v4807
          %4817 = vmatprep.subr.mxu0 0.0
          %4818 = vmatpush1.msra.mxu0 %v4808
          %4819 = vmatprep.subr.mxu0 0.0
          %4820 = vmatpush1.msra.mxu0 0.0
          %4821 = vmatprep.subr.mxu0 0.0
          %4822 = vmatpush1.msra.mxu0 0.0
          %4823 = vmatprep.subr.mxu0 0.0
          %4824 = vmatpush1.msra.mxu0 0.0
          %4825 = vmatprep.subr.mxu0 0.0
          %4826 = vmatpush1.msra.mxu0 0.0
          %4827 = vmatprep.subr.mxu0 0.0
          %4828 = vmatpush1.msra.mxu0 0.0
          %4829 = vmatprep.subr.mxu0 0.0
          %4830 = vmatpush1.msra.mxu0 0.0
          %4831 = vmatprep.subr.mxu0 0.0
          %4832 = vmatpush1.msra.mxu0 0.0
          %4833 = vmatprep.subr.mxu0 0.0
          %4834 = vmatpush1.msra.mxu0 0.0
          %4835 = vmatprep.subr.mxu0 0.0
          %4836 = vmatpush1.msra.mxu0 0.0
          %4837 = vmatprep.subr.mxu0 0.0
          %4838 = vmatpush1.msra.mxu0 0.0
          %4839 = vmatprep.subr.mxu0 0.0
          %4840 = vmatpush1.msra.mxu0 0.0
          %4841 = vmatprep.subr.mxu0 0.0
          %4842 = vmatpush1.msra.mxu0 0.0
          %4843 = vmatprep.subr.mxu0 0.0
          %4844 = vmatpush1.msra.mxu0 0.0
          %4845 = vmatprep.subr.mxu0 0.0
          %4846 = vmatpush1.msra.mxu0 0.0
          %4847 = vmatprep.subr.mxu0 0.0
          %4848 = vmatpush1.msra.mxu0 0.0
          %4849 = vmatprep.subr.mxu0 0.0
          %4850 = vmatpush1.msra.mxu0 0.0
          %4851 = vmatprep.subr.mxu0 0.0
          %4852 = vmatpush1.msra.mxu0 0.0
          %4853 = vmatprep.subr.mxu0 0.0
          %4854 = vmatpush1.msra.mxu0 0.0
          %4855 = vmatprep.subr.mxu0 0.0
          %4856 = vmatpush1.msra.mxu0 0.0
          %4857 = vmatprep.subr.mxu0 0.0
          %4858 = vmatpush1.msra.mxu0 0.0
          %4859 = vmatprep.subr.mxu0 0.0
          %4860 = vmatpush1.msra.mxu0 0.0
          %4861 = vmatprep.subr.mxu0 0.0
          %4862 = vmatpush1.msra.mxu0 0.0
          %4863 = vmatprep.subr.mxu0 0.0
          %4864 = vmatpush1.msra.mxu0 0.0
          %4865 = vmatprep.subr.mxu0 0.0
          %4866 = vmatpush1.msra.mxu0 0.0
          %4867 = vmatprep.subr.mxu0 0.0
          %4868 = vmatpush1.msra.mxu0 0.0
          %4869 = vmatprep.subr.mxu0 0.0
          %4870 = vmatpush1.msra.mxu0 0.0
          %4871 = vmatprep.subr.mxu0 0.0
          %4872 = vmatpush1.msra.mxu0 0.0
          %4873 = vmatprep.subr.mxu0 0.0
          %4874 = vmatpush1.msra.mxu0 0.0
          %4875 = vmatprep.subr.mxu0 0.0
          %4876 = vmatpush1.msra.mxu0 0.0
          %4877 = vmatprep.subr.mxu0 0.0
          %4878 = vmatpush1.msra.mxu0 0.0
          %4879 = vmatprep.mubr.f32.mxu0 0.0
          %4880 = vmatmul.mubr.f32.gmra.mrb[0].mxu0 %v4810
          %v4881 = vpop.f32.mrb[0].mxu0
          %v4882 = vadd.f32 0.0, %v4881
          %v4883 = vpop.f32.mrb[0].mxu0
          %4884 = vmatprep.mubr.f32.mxu0 0.0
          %4885 = vmatmul.mubr.f32.gmra.mrb[0].mxu0 %v4813
          %v4886 = vpop.f32.mrb[0].mxu0
          %v4887 = vadd.f32 0.0, %v4886
          %v4888 = vpop.f32.mrb[0].mxu0
          %4889 = vdwg.mxu0
          %v4891 = vsel %vm316, %v4807, 0
          %v4894 = vsel %vm316, %v4808, 0
          %4896 = vmatprep.subr.mxu0 0.0
          %4897 = vmatpush1.msra.mxu0 %v4716
          %4898 = vmatprep.subr.mxu0 0.0
          %4899 = vmatpush1.msra.mxu0 %v4721
          %4900 = vmatprep.subr.mxu0 0.0
          %4901 = vmatpush1.msra.mxu0 0.0
          %4902 = vmatprep.subr.mxu0 0.0
          %4903 = vmatpush1.msra.mxu0 0.0
          %4904 = vmatprep.subr.mxu0 0.0
          %4905 = vmatpush1.msra.mxu0 0.0
          %4906 = vmatprep.subr.mxu0 0.0
          %4907 = vmatpush1.msra.mxu0 0.0
          %4908 = vmatprep.subr.mxu0 0.0
          %4909 = vmatpush1.msra.mxu0 0.0
          %4910 = vmatprep.subr.mxu0 0.0
          %4911 = vmatpush1.msra.mxu0 0.0
          %4912 = vmatprep.subr.mxu0 0.0
          %4913 = vmatpush1.msra.mxu0 0.0
          %4914 = vmatprep.subr.mxu0 0.0
          %4915 = vmatpush1.msra.mxu0 0.0
          %4916 = vmatprep.subr.mxu0 0.0
          %4917 = vmatpush1.msra.mxu0 0.0
          %4918 = vmatprep.subr.mxu0 0.0
          %4919 = vmatpush1.msra.mxu0 0.0
          %4920 = vmatprep.subr.mxu0 0.0
          %4921 = vmatpush1.msra.mxu0 0.0
          %4922 = vmatprep.subr.mxu0 0.0
          %4923 = vmatpush1.msra.mxu0 0.0
          %4924 = vmatprep.subr.mxu0 0.0
          %4925 = vmatpush1.msra.mxu0 0.0
          %4926 = vmatprep.subr.mxu0 0.0
          %4927 = vmatpush1.msra.mxu0 0.0
          %4928 = vmatprep.subr.mxu0 0.0
          %4929 = vmatpush1.msra.mxu0 0.0
          %4930 = vmatprep.subr.mxu0 0.0
          %4931 = vmatpush1.msra.mxu0 0.0
          %4932 = vmatprep.subr.mxu0 0.0
          %4933 = vmatpush1.msra.mxu0 0.0
          %4934 = vmatprep.subr.mxu0 0.0
          %4935 = vmatpush1.msra.mxu0 0.0
          %4936 = vmatprep.subr.mxu0 0.0
          %4937 = vmatpush1.msra.mxu0 0.0
          %4938 = vmatprep.subr.mxu0 0.0
          %4939 = vmatpush1.msra.mxu0 0.0
          %4940 = vmatprep.subr.mxu0 0.0
          %4941 = vmatpush1.msra.mxu0 0.0
          %4942 = vmatprep.subr.mxu0 0.0
          %4943 = vmatpush1.msra.mxu0 0.0
          %4944 = vmatprep.subr.mxu0 0.0
          %4945 = vmatpush1.msra.mxu0 0.0
          %4946 = vmatprep.subr.mxu0 0.0
          %4947 = vmatpush1.msra.mxu0 0.0
          %4948 = vmatprep.subr.mxu0 0.0
          %4949 = vmatpush1.msra.mxu0 0.0
          %4950 = vmatprep.subr.mxu0 0.0
          %4951 = vmatpush1.msra.mxu0 0.0
          %4952 = vmatprep.subr.mxu0 0.0
          %4953 = vmatpush1.msra.mxu0 0.0
          %4954 = vmatprep.subr.mxu0 0.0
          %4955 = vmatpush1.msra.mxu0 0.0
          %4956 = vmatprep.subr.mxu0 0.0
          %4957 = vmatpush1.msra.mxu0 0.0
          %4958 = vmatprep.subr.mxu0 0.0
          %4959 = vmatpush1.msra.mxu0 0.0
          %4960 = vmatprep.mubr.f32.mxu0 0.0
          %4961 = vmatmul.mubr.f32.gmra.mrb[0].mxu0 %v4891
          %v4962 = vpop.f32.mrb[0].mxu0
          %v4963 = vadd.f32 0.0, %v4962
          %v4964 = vpop.f32.mrb[0].mxu0
          %4965 = vmatprep.mubr.f32.mxu0 0.0
          %4966 = vmatmul.mubr.f32.gmra.mrb[0].mxu0 %v4894
          %v4967 = vpop.f32.mrb[0].mxu0
          %v4968 = vadd.f32 0.0, %v4967
          %v4969 = vpop.f32.mrb[0].mxu0
          %4970 = vdwg.mxu0
          %v4972 = vsel %vm316, %v4963, 0
          %v4975 = vsel %vm316, %v4968, 0
          %4977 = vmatprep.subr.mxu0 0.0
          %4978 = vmatpush1.msra.mxu0 %v4882
          %4979 = vmatprep.subr.mxu0 0.0
          %4980 = vmatpush1.msra.mxu0 %v4887
          %4981 = vmatprep.subr.mxu0 0.0
          %4982 = vmatpush1.msra.mxu0 0.0
          %4983 = vmatprep.subr.mxu0 0.0
          %4984 = vmatpush1.msra.mxu0 0.0
          %4985 = vmatprep.subr.mxu0 0.0
          %4986 = vmatpush1.msra.mxu0 0.0
          %4987 = vmatprep.subr.mxu0 0.0
          %4988 = vmatpush1.msra.mxu0 0.0
          %4989 = vmatprep.subr.mxu0 0.0
          %4990 = vmatpush1.msra.mxu0 0.0
          %4991 = vmatprep.subr.mxu0 0.0
          %4992 = vmatpush1.msra.mxu0 0.0
          %4993 = vmatprep.subr.mxu0 0.0
          %4994 = vmatpush1.msra.mxu0 0.0
          %4995 = vmatprep.subr.mxu0 0.0
          %4996 = vmatpush1.msra.mxu0 0.0
          %4997 = vmatprep.subr.mxu0 0.0
          %4998 = vmatpush1.msra.mxu0 0.0
          %4999 = vmatprep.subr.mxu0 0.0
          %5000 = vmatpush1.msra.mxu0 0.0
          %5001 = vmatprep.subr.mxu0 0.0
          %5002 = vmatpush1.msra.mxu0 0.0
          %5003 = vmatprep.subr.mxu0 0.0
          %5004 = vmatpush1.msra.mxu0 0.0
          %5005 = vmatprep.subr.mxu0 0.0
          %5006 = vmatpush1.msra.mxu0 0.0
          %5007 = vmatprep.subr.mxu0 0.0
          %5008 = vmatpush1.msra.mxu0 0.0
          %5009 = vmatprep.subr.mxu0 0.0
          %5010 = vmatpush1.msra.mxu0 0.0
          %5011 = vmatprep.subr.mxu0 0.0
          %5012 = vmatpush1.msra.mxu0 0.0
          %5013 = vmatprep.subr.mxu0 0.0
          %5014 = vmatpush1.msra.mxu0 0.0
          %5015 = vmatprep.subr.mxu0 0.0
          %5016 = vmatpush1.msra.mxu0 0.0
          %5017 = vmatprep.subr.mxu0 0.0
          %5018 = vmatpush1.msra.mxu0 0.0
          %5019 = vmatprep.subr.mxu0 0.0
          %5020 = vmatpush1.msra.mxu0 0.0
          %5021 = vmatprep.subr.mxu0 0.0
          %5022 = vmatpush1.msra.mxu0 0.0
          %5023 = vmatprep.subr.mxu0 0.0
          %5024 = vmatpush1.msra.mxu0 0.0
          %5025 = vmatprep.subr.mxu0 0.0
          %5026 = vmatpush1.msra.mxu0 0.0
          %5027 = vmatprep.subr.mxu0 0.0
          %5028 = vmatpush1.msra.mxu0 0.0
          %5029 = vmatprep.subr.mxu0 0.0
          %5030 = vmatpush1.msra.mxu0 0.0
          %5031 = vmatprep.subr.mxu0 0.0
          %5032 = vmatpush1.msra.mxu0 0.0
          %5033 = vmatprep.subr.mxu0 0.0
          %5034 = vmatpush1.msra.mxu0 0.0
          %5035 = vmatprep.subr.mxu0 0.0
          %5036 = vmatpush1.msra.mxu0 0.0
          %5037 = vmatprep.subr.mxu0 0.0
          %5038 = vmatpush1.msra.mxu0 0.0
          %5039 = vmatprep.subr.mxu0 0.0
          %5040 = vmatpush1.msra.mxu0 0.0
          %5041 = vmatprep.mubr.f32.mxu0 0.0
          %5042 = vmatmul.mubr.f32.gmra.mrb[0].mxu0 %v4972
          %v5043 = vpop.f32.mrb[0].mxu0
          %v5044 = vadd.f32 0.0, %v5043
          %v5045 = vpop.f32.mrb[0].mxu0
          %5046 = vmatprep.mubr.f32.mxu0 0.0
          %5047 = vmatmul.mubr.f32.gmra.mrb[0].mxu0 %v4975
          %v5048 = vpop.f32.mrb[0].mxu0
          %v5049 = vadd.f32 0.0, %v5048
          %v5050 = vpop.f32.mrb[0].mxu0
          %5051 = vdwg.mxu0
          %v5052 = vsub.f32 %v622, %v5044
          %v5053 = vsub.f32 %v623, %v5049
          %v5054 = vmul.f32 %v5052, 0.5
          %v5055 = vmul.f32 %v5053, 0.5
          %v5057 = vsel %vm316, %v5054, 0
          %v5060 = vsel %vm316, %v5055, 0
          %5062 = vmatprep.subr.mxu0 0.0
          %5063 = vmatpush1.msra.mxu0 %v4963
          %5064 = vmatprep.subr.mxu0 0.0
          %5065 = vmatpush1.msra.mxu0 %v4968
          %5066 = vmatprep.subr.mxu0 0.0
          %5067 = vmatpush1.msra.mxu0 0.0
          %5068 = vmatprep.subr.mxu0 0.0
          %5069 = vmatpush1.msra.mxu0 0.0
          %5070 = vmatprep.subr.mxu0 0.0
          %5071 = vmatpush1.msra.mxu0 0.0
          %5072 = vmatprep.subr.mxu0 0.0
          %5073 = vmatpush1.msra.mxu0 0.0
          %5074 = vmatprep.subr.mxu0 0.0
          %5075 = vmatpush1.msra.mxu0 0.0
          %5076 = vmatprep.subr.mxu0 0.0
          %5077 = vmatpush1.msra.mxu0 0.0
          %5078 = vmatprep.subr.mxu0 0.0
          %5079 = vmatpush1.msra.mxu0 0.0
          %5080 = vmatprep.subr.mxu0 0.0
          %5081 = vmatpush1.msra.mxu0 0.0
          %5082 = vmatprep.subr.mxu0 0.0
          %5083 = vmatpush1.msra.mxu0 0.0
          %5084 = vmatprep.subr.mxu0 0.0
          %5085 = vmatpush1.msra.mxu0 0.0
          %5086 = vmatprep.subr.mxu0 0.0
          %5087 = vmatpush1.msra.mxu0 0.0
          %5088 = vmatprep.subr.mxu0 0.0
          %5089 = vmatpush1.msra.mxu0 0.0
          %5090 = vmatprep.subr.mxu0 0.0
          %5091 = vmatpush1.msra.mxu0 0.0
          %5092 = vmatprep.subr.mxu0 0.0
          %5093 = vmatpush1.msra.mxu0 0.0
          %5094 = vmatprep.subr.mxu0 0.0
          %5095 = vmatpush1.msra.mxu0 0.0
          %5096 = vmatprep.subr.mxu0 0.0
          %5097 = vmatpush1.msra.mxu0 0.0
          %5098 = vmatprep.subr.mxu0 0.0
          %5099 = vmatpush1.msra.mxu0 0.0
          %5100 = vmatprep.subr.mxu0 0.0
          %5101 = vmatpush1.msra.mxu0 0.0
          %5102 = vmatprep.subr.mxu0 0.0
          %5103 = vmatpush1.msra.mxu0 0.0
          %5104 = vmatprep.subr.mxu0 0.0
          %5105 = vmatpush1.msra.mxu0 0.0
          %5106 = vmatprep.subr.mxu0 0.0
          %5107 = vmatpush1.msra.mxu0 0.0
          %5108 = vmatprep.subr.mxu0 0.0
          %5109 = vmatpush1.msra.mxu0 0.0
          %5110 = vmatprep.subr.mxu0 0.0
          %5111 = vmatpush1.msra.mxu0 0.0
          %5112 = vmatprep.subr.mxu0 0.0
          %5113 = vmatpush1.msra.mxu0 0.0
          %5114 = vmatprep.subr.mxu0 0.0
          %5115 = vmatpush1.msra.mxu0 0.0
          %5116 = vmatprep.subr.mxu0 0.0
          %5117 = vmatpush1.msra.mxu0 0.0
          %5118 = vmatprep.subr.mxu0 0.0
          %5119 = vmatpush1.msra.mxu0 0.0
          %5120 = vmatprep.subr.mxu0 0.0
          %5121 = vmatpush1.msra.mxu0 0.0
          %5122 = vmatprep.subr.mxu0 0.0
          %5123 = vmatpush1.msra.mxu0 0.0
          %5124 = vmatprep.subr.mxu0 0.0
          %5125 = vmatpush1.msra.mxu0 0.0
          %5126 = vmatprep.mubr.f32.mxu0 0.0
          %5127 = vmatmul.mubr.f32.gmra.mrb[0].mxu0 %v5057
          %v5128 = vpop.f32.mrb[0].mxu0
          %v5129 = vadd.f32 0.0, %v5128
          %v5130 = vpop.f32.mrb[0].mxu0
          %5131 = vmatprep.mubr.f32.mxu0 0.0
          %5132 = vmatmul.mubr.f32.gmra.mrb[0].mxu0 %v5060
          %v5133 = vpop.f32.mrb[0].mxu0
          %v5134 = vadd.f32 0.0, %v5133
          %v5135 = vpop.f32.mrb[0].mxu0
          %5136 = vdwg.mxu0
          %v5137 = vstv %s2994
          %v5138 = vrsqrt.pop %v5137
          %s5139 = vtos %v5138
          %v5140 = vstv %s5139
          %v5141 = vmul.f32 %v5129, %v5140
          %v5142 = vmul.f32 %v5134, %v5140
          %v5143 = vsel %vm316, %v2854, 0
          %5145 = vmatprep.subr.mxu0 0.0
          %5146 = vmatpush1.msra.mxu0 %v5141
          %5147 = vmatprep.subr.mxu0 0.0
          %5148 = vmatpush1.msra.mxu0 %v5142
          %5149 = vmatprep.subr.mxu0 0.0
          %5150 = vmatpush1.msra.mxu0 0.0
          %5151 = vmatprep.subr.mxu0 0.0
          %5152 = vmatpush1.msra.mxu0 0.0
          %5153 = vmatprep.subr.mxu0 0.0
          %5154 = vmatpush1.msra.mxu0 0.0
          %5155 = vmatprep.subr.mxu0 0.0
          %5156 = vmatpush1.msra.mxu0 0.0
          %5157 = vmatprep.subr.mxu0 0.0
          %5158 = vmatpush1.msra.mxu0 0.0
          %5159 = vmatprep.subr.mxu0 0.0
          %5160 = vmatpush1.msra.mxu0 0.0
          %5161 = vmatprep.subr.mxu0 0.0
          %5162 = vmatpush1.msra.mxu0 0.0
          %5163 = vmatprep.subr.mxu0 0.0
          %5164 = vmatpush1.msra.mxu0 0.0
          %5165 = vmatprep.subr.mxu0 0.0
          %5166 = vmatpush1.msra.mxu0 0.0
          %5167 = vmatprep.subr.mxu0 0.0
          %5168 = vmatpush1.msra.mxu0 0.0
          %5169 = vmatprep.subr.mxu0 0.0
          %5170 = vmatpush1.msra.mxu0 0.0
          %5171 = vmatprep.subr.mxu0 0.0
          %5172 = vmatpush1.msra.mxu0 0.0
          %5173 = vmatprep.subr.mxu0 0.0
          %5174 = vmatpush1.msra.mxu0 0.0
          %5175 = vmatprep.subr.mxu0 0.0
          %5176 = vmatpush1.msra.mxu0 0.0
          %5177 = vmatprep.subr.mxu0 0.0
          %5178 = vmatpush1.msra.mxu0 0.0
          %5179 = vmatprep.subr.mxu0 0.0
          %5180 = vmatpush1.msra.mxu0 0.0
          %5181 = vmatprep.subr.mxu0 0.0
          %5182 = vmatpush1.msra.mxu0 0.0
          %5183 = vmatprep.subr.mxu0 0.0
          %5184 = vmatpush1.msra.mxu0 0.0
          %5185 = vmatprep.subr.mxu0 0.0
          %5186 = vmatpush1.msra.mxu0 0.0
          %5187 = vmatprep.subr.mxu0 0.0
          %5188 = vmatpush1.msra.mxu0 0.0
          %5189 = vmatprep.subr.mxu0 0.0
          %5190 = vmatpush1.msra.mxu0 0.0
          %5191 = vmatprep.subr.mxu0 0.0
          %5192 = vmatpush1.msra.mxu0 0.0
          %5193 = vmatprep.subr.mxu0 0.0
          %5194 = vmatpush1.msra.mxu0 0.0
          %5195 = vmatprep.subr.mxu0 0.0
          %5196 = vmatpush1.msra.mxu0 0.0
          %5197 = vmatprep.subr.mxu0 0.0
          %5198 = vmatpush1.msra.mxu0 0.0
          %5199 = vmatprep.subr.mxu0 0.0
          %5200 = vmatpush1.msra.mxu0 0.0
          %5201 = vmatprep.subr.mxu0 0.0
          %5202 = vmatpush1.msra.mxu0 0.0
          %5203 = vmatprep.subr.mxu0 0.0
          %5204 = vmatpush1.msra.mxu0 0.0
          %5205 = vmatprep.subr.mxu0 0.0
          %5206 = vmatpush1.msra.mxu0 0.0
          %5207 = vmatprep.subr.mxu0 0.0
          %5208 = vmatpush1.msra.mxu0 0.0
          %5209 = vmatprep.mubr.f32.mxu0 0.0
          %5210 = vmatmul.mubr.f32.gmra.mrb[0].mxu0 %v5143
          %v5211 = vpop.f32.mrb[0].mxu0
          %v5212 = vadd.f32 0.0, %v5211
          %v5213 = vpop.f32.mrb[0].mxu0
          %5214 = vdwg.mxu0
          %v5215 = vsub.f32 0.0, %v5212
          %s5216 = scalar_lea.vmem [#allocation4], 16
          %5217 = vst.msk [vmem:[%s5216] sm:$0xff] %vm316, %v5141
          %5218 = vst.msk [vmem:[%s5216 + $0x8] sm:$0xff] %vm316, %v5142
          %s5219 = scalar_lea.vmem [#allocation6], 1
          %5220 = vst.msk [vmem:[%s5219] sm:$0x1] %vm2847, %v5215
        $region32: #{tpu_custom_call.1} parent=23 // pred_fallthru
          _
        // Predicated region
        $region33: #{tpu_custom_call.1} parent=23 // pred_check
          %p5221 = pneg %p74
        $region34: #{tpu_custom_call.1} parent=23 // pred_check_branch
          %5223 = sbr.rel (%p5221) target = $region36
        $region35: #{tpu_custom_call.1} parent=23 // pred_region
          %s5224 = smul.u32 2, %s20
          %s5226 = ssub.s32 512, 512
          %5227 = vsyncadd [#allocation5], %s5226
          %s5228 = smul.addr %s5224, 2
          %s5229 = smul.addr %s5228, 128
          %s5230 = scalar_lea.hbm %s1, %s5229
          %s5231 = sshll.u32 [#allocation4], 4
          %s5232 = int_to_ptr.vmem [resolvable:$true] %s5231
          %5237 = dma.vmem_to_hbm [thread:$0]  %s5232, 512, %s5230, [#allocation5], 128, 128, 8
        $region36: #{tpu_custom_call.1} parent=23 // pred_fallthru
          _
        // Predicated region
        $region37: #{tpu_custom_call.1} parent=23 // pred_check
          %p5238 = pneg %p100
        $region38: #{tpu_custom_call.1} parent=23 // pred_check_branch
          %5240 = sbr.rel (%p5238) target = $region40
        $region39: #{tpu_custom_call.1} parent=23 // pred_region
          %s5241 = smul.u32 2, %s20
          %s5243 = ssub.s32 32, 32
          %5244 = vsyncadd [#allocation7], %s5243
          %s5245 = smul.addr %s5241, 16
          %s5246 = scalar_lea.hbm %s2, %s5245
          %s5247 = sshll.u32 [#allocation6], 4
          %s5248 = int_to_ptr.vmem [resolvable:$true] %s5247
          %5253 = dma.vmem_to_hbm [thread:$0]  %s5248, 32, %s5246, [#allocation7], 16, 16, 1
        $region40: #{tpu_custom_call.1} parent=23 // pred_fallthru
          _
        // Predicated region
        $region41: #{tpu_custom_call.1} parent=23 // pred_check
          %p5254 = pneg %p74
        $region42: #{tpu_custom_call.1} parent=23 // pred_check_branch
          %5256 = sbr.rel (%p5254) target = $region44
        $region43: #{tpu_custom_call.1} parent=23 // pred_region
          %5257 = dma.done [#allocation5], 512
        $region44: #{tpu_custom_call.1} parent=23 // pred_fallthru
          _
        // Predicated region
        $region45: #{tpu_custom_call.1} parent=23 // pred_check
          %p5258 = pneg %p100
        $region46: #{tpu_custom_call.1} parent=23 // pred_check_branch
          %5260 = sbr.rel (%p5258) target = $region48
        $region47: #{tpu_custom_call.1} parent=23 // pred_region
          %5261 = dma.done [#allocation7], 32
        $region48: #{tpu_custom_call.1} parent=23 // pred_fallthru
          _
      $region24: #{tpu_custom_call.1} parent=5 // pred_fallthru
        _
      %p5262 = scmp.le.s32.totalorder 2, %s11
      // Predicated region
      $region49: #{tpu_custom_call.1} parent=5 // pred_check
        %p5263 = pneg %p5262
      $region50: #{tpu_custom_call.1} parent=5 // pred_check_branch
        %5265 = sbr.rel (%p5263) target = $region52
      $region51: #{tpu_custom_call.1} parent=5 // pred_region
        %s5266 = ssub.s32 %s11, 2
      $region52: #{tpu_custom_call.1} parent=5 // pred_fallthru
        _
    $region6: #{tpu_custom_call.1} parent=1 // loop_footer
      %s15 = sadd.s32 1, %s11
    $region7: #{tpu_custom_call.1} parent=1 // loop_footer_branch
      %10 = sbr.rel target = $region3
    $region8: #{tpu_custom_call.1} parent=1 // loop_exit
      _
    %5267 = vsyncpa [#allocation5], 1
    %s5268 = scalar_lea.sflag [#allocation5], 1
    %5269 = vsyncpa %s5268, 1
    %5270 = vsyncpa [#allocation7], 1

</llo_original>
